<compile_context>
chip_gen: v7x
topology: tpu7x:2x2x1
jax: 0.10.0
libtpu: 0.0.40
codegen_flags: <defaults>
</compile_context>

<pallas_src>
import functools

import numpy as np
import jax
import jax.numpy as jnp
from jax import lax
from jax.experimental import pallas as pl
from jax.experimental.pallas import tpu as pltpu


_MATMUL_DTYPE = jnp.bfloat16   # MXU-native operand dtype; accumulation is f32.
_STORE_DTYPE = jnp.bfloat16    # storage dtype for x / band scratch.
_LANE = 128                    # TPU lane width.


def _round_up(x, m):
    return (x + m - 1) // m * m


def _vmem_limit_bytes(frac=0.75):
    """Per-chip VMEM limit with headroom (don't hard-code 64 MiB)."""
    try:
        info = pltpu.get_tpu_info()
        cap = getattr(info, "vmem_capacity_bytes", None)
        if cap:
            return int(cap * frac)
    except Exception:
        pass
    return None  # fall back to the Mosaic default


def _pick_band_h(H, W, target_m_rows=1024):
    """Largest divisor of H giving roughly `target_m_rows` matmul rows/band.

    TODO(synk): derive from the per-generation VMEM budget (v7x = 64 MiB per
    TC vs 128 MiB on v5e/v6e) and from rmax (halo re-read amortization).
    """
    bh = max(1, min(H, target_m_rows // max(W, 1)))
    while H % bh:
        bh -= 1
    return bh


# ----------------------------------------------------------------------------
# Fused Pallas kernel: one (image, row-band) per grid step
# ----------------------------------------------------------------------------
def _aspp_band_kernel(x_hbm, dww_ref, pww_ref, pwb_ref, w1_ref, b1_ref,
                      wl_ref, gap_ref, bl_ref, o_ref,
                      xband, copy_sem, *, rates, band_h, W, rmax, left):
    """Refs:
      x_hbm   : (N, H+2*rmax, Wp, Cin_p)  bf16  padded input, raw HBM (pl.ANY)
      dww_ref : (R, 9, Cin_p)             f32   depthwise taps (ky*3+kx)
      pww_ref : (R, Cin_p, oup_p)         bf16  per-rate 1x1 w (BN scale folded)
      pwb_ref : (R, 1, oup_p)             f32   per-rate BN bias
      w1_ref  : (Cin_p, oup_p)            bf16  conv1 1x1 w (BN scale folded)
      b1_ref  : (1, oup_p)                f32   conv1 BN bias
      wl_ref  : (R+1, oup_p, oup_p)       bf16  conv_last blocks (scale folded)
      gap_ref : (1, oup_p)                f32   per-image GAP contribution
      bl_ref  : (1, oup_p)                f32   conv_last BN bias
      o_ref   : (band_h, W, oup_p)              output band
      xband   : (2, band_h+2*rmax, Wp, Cin_p) bf16  double-buffered band scratch
      copy_sem: DMA semaphores (2,)
    """
    n = pl.program_id(0)
    b = pl.program_id(1)
    nb = pl.num_programs(1)
    band_rows = band_h + 2 * rmax
    Cin_p = xband.shape[-1]
    oup_p = o_ref.shape[-1]
    M = band_h * W

    def band_dma(band_idx, slot):
        return pltpu.make_async_copy(
            x_hbm.at[n, pl.ds(band_idx * band_h, band_rows)],
            xband.at[slot],
            copy_sem.at[slot])

    # Prime the pipeline at the first band of each image (scratch & semaphores
    # persist across grid steps; every other band was prefetched one step ago).
    @pl.when(b == 0)
    def _():
        band_dma(0, 0).start()

    slot = b % 2
    band_dma(b, slot).wait()

    # Prefetch the next band of this image while computing the current one.
    @pl.when(b + 1 < nb)
    def _():
        band_dma(b + 1, 1 - slot).start()

    # bf16 storage -> f32 math (VPU path is f32-safe on all generations).
    xp = xband[slot].astype(jnp.float32)            # (band_rows, Wp, Cin_p)

    # ---- conv1 branch: 1x1 (scale folded) + bias + ReLU, then its conv_last
    # block.  The interior slice starts at `left`, a multiple of 8 (aligned).
    x_in = xp[rmax:rmax + band_h, left:left + W, :].reshape(M, Cin_p)
    y = jnp.dot(x_in.astype(_MATMUL_DTYPE), w1_ref[...],
                preferred_element_type=jnp.float32)
    y = jnp.maximum(y + b1_ref[...], 0.0)
    acc = jnp.dot(y.astype(_MATMUL_DTYPE), wl_ref[len(rates)],
                  preferred_element_type=jnp.float32)

    # ---- atrous branches: 9-tap dilated depthwise (f32 VPU) -> 1x1 (bf16 MXU,
    # scale folded) -> bias + ReLU -> accumulate through conv_last block.
    # TODO(synk): use pltpu.roll for the kx shifts (XLU) instead of
    # sublane-misaligned slices; bf16 tap math on v6e/v7x.
    for r_idx, rate in enumerate(rates):
        taps = dww_ref[r_idx]                       # (9, Cin_p) f32
        dw = None
        for ky in range(3):
            oy = rmax + (ky - 1) * rate             # row offset (untiled dim)
            rows = xp[oy:oy + band_h]
            for kx in range(3):
                ox = left + (kx - 1) * rate
                t = rows[:, ox:ox + W, :] * taps[ky * 3 + kx, :]
                dw = t if dw is None else dw + t
        y = jnp.dot(dw.reshape(M, Cin_p).astype(_MATMUL_DTYPE), pww_ref[r_idx],
                    preferred_element_type=jnp.float32)
        y = jnp.maximum(y + pwb_ref[r_idx], 0.0)
        acc = acc + jnp.dot(y.astype(_MATMUL_DTYPE), wl_ref[r_idx],
                            preferred_element_type=jnp.float32)

    # ---- GAP branch: constant over (H, W); already folded through its
    # conv_last block + conv_last BN scale -> broadcast row add.
    acc = acc + gap_ref[...]

    # conv_last bias + ReLU (scale already folded into wl/gap), one band write.
    out = jnp.maximum(acc + bl_ref[...], 0.0)
    o_ref[...] = out.reshape(band_h, W, oup_p).astype(o_ref.dtype)


# ----------------------------------------------------------------------------
# ASPP forward (all heavy work in ONE pallas_call)
# ----------------------------------------------------------------------------
def aspp_forward(x_nchw, params, rates, use_gap=True, band_h=None,
                 out_dtype=None):
    """NCHW in / NCHW out, matching the PyTorch module (BN folded, eval).

    `out_dtype=jnp.bfloat16` halves the kernel writeback if downstream
    tolerates bf16.
    """
    N, Cin, H, W = x_nchw.shape
    R = len(rates)
    rmax = max(rates)
    oup = params["conv1"]["w"].shape[1]
    out_dtype = x_nchw.dtype if out_dtype is None else out_dtype
    f32 = jnp.float32

    # Lane / sublane alignment: channels padded to 128-lane multiples,
    # interior column start 8-aligned, padded width a multiple of 8.
    Cin_p = _round_up(Cin, _LANE)
    oup_p = _round_up(oup, _LANE)
    left = _round_up(max(rmax, 1), 8)
    Wp = _round_up(left + W + rmax, 8)

    band_h = _pick_band_h(H, W) if band_h is None else band_h
    if H % band_h:
        band_h = H  # TODO(synk): ragged last band
    nb = H // band_h
    band_rows = band_h + 2 * rmax

    # bf16 NHWC copy of x, zero-padded rows/cols/channels (one fused XLA
    # layout pass; all halo zeros come from here -> no in-kernel zero stores).
    x_pad = jnp.pad(
        jnp.transpose(x_nchw, (0, 2, 3, 1)).astype(_STORE_DTYPE),
        ((0, 0), (rmax, rmax), (left, Wp - left - W), (0, Cin_p - Cin)))

    def _pad2(w, r, c):
        return jnp.pad(w, ((0, r - w.shape[0]), (0, c - w.shape[1])))

    def _pad1(v, c):
        return jnp.pad(v, (0, c - v.shape[0]))

    # Depthwise taps (f32, tiny).
    dww = jnp.stack([_pad2(p["dw_w"].reshape(9, Cin), 9, Cin_p)
                     for p in params["atrous"]]).astype(f32)          # (R,9,Cin_p)

    # 1x1 weights with folded-BN *scale* baked into the columns (f32 scale,
    # then bf16 cast); only bias + ReLU remain in the kernel epilogues.
    pww = jnp.stack([_pad2(p["pw_w"] * p["bn_scale"][None, :], Cin_p, oup_p)
                     for p in params["atrous"]]).astype(_MATMUL_DTYPE)
    pwb = jnp.stack([_pad1(p["bn_bias"], oup_p)[None, :]
                     for p in params["atrous"]]).astype(f32)

    w1 = _pad2(params["conv1"]["w"] * params["conv1"]["bn_scale"][None, :],
               Cin_p, oup_p).astype(_MATMUL_DTYPE)
    b1 = _pad1(params["conv1"]["bn_bias"], oup_p)[None, :].astype(f32)

    # conv_last: fold its BN scale into the weight columns, then split into
    # per-branch (oup, oup) blocks so branch outputs / the concat tensor are
    # never materialized.
    wl = params["conv_last"]["w"] * params["conv_last"]["bn_scale"][None, :]
    wl_blk = jnp.stack([_pad2(wl[i * oup:(i + 1) * oup], oup_p, oup_p)
                        for i in range(R + 1)]).astype(_MATMUL_DTYPE)
    bl = _pad1(params["conv_last"]["bn_bias"], oup_p)[None, :].astype(f32)

    # GAP branch: (N, Cin) of work.  Kept in the wrapper because with row-band
    # tiling the full-image mean must be known before the first band is
    # written; folded through its conv_last block (+ conv_last scale) so the
    # kernel only adds a per-image (1, oup_p) row.
    if use_gap:
        pg = params["gap"]
        pooled = jnp.mean(x_nchw.astype(f32), axis=(2, 3))            # (N, Cin)
        g = jnp.dot(pooled, pg["w"], precision=lax.Precision.HIGHEST)
        g = jnp.maximum(g * pg["bn_scale"] + pg["bn_bias"], 0.0)
        gap_row = jnp.dot(g, wl[(R + 1) * oup:],
                          precision=lax.Precision.HIGHEST)            # (N, oup)
    else:
        gap_row = jnp.zeros((N, oup), f32)
    gap_row = jnp.pad(gap_row, ((0, 0), (0, oup_p - oup)))
    gap_row = gap_row.reshape(N, 1, oup_p).astype(f32)

    kernel = functools.partial(_aspp_band_kernel, rates=tuple(rates),
                               band_h=band_h, W=W, rmax=rmax, left=left)

    out_padded = pl.pallas_call(
        kernel,
        out_shape=jax.ShapeDtypeStruct((N, H, W, oup_p), out_dtype),
        grid=(N, nb),
        in_specs=[
            pl.BlockSpec(memory_space=pl.ANY),                          # x (HBM, manual DMA)
            pl.BlockSpec((R, 9, Cin_p), lambda n, b: (0, 0, 0)),        # dw taps
            pl.BlockSpec((R, Cin_p, oup_p), lambda n, b: (0, 0, 0)),    # pw weights
            pl.BlockSpec((R, 1, oup_p), lambda n, b: (0, 0, 0)),        # pw biases
            pl.BlockSpec((Cin_p, oup_p), lambda n, b: (0, 0)),          # conv1 w
            pl.BlockSpec((1, oup_p), lambda n, b: (0, 0)),              # conv1 bias
            pl.BlockSpec((R + 1, oup_p, oup_p), lambda n, b: (0, 0, 0)),  # conv_last blocks
            pl.BlockSpec((None, 1, oup_p), lambda n, b: (n, 0, 0)),     # gap row
            pl.BlockSpec((1, oup_p), lambda n, b: (0, 0)),              # conv_last bias
        ],
        out_specs=pl.BlockSpec((None, band_h, W, oup_p),
                               lambda n, b: (n, b, 0, 0)),
        scratch_shapes=[
            pltpu.VMEM((2, band_rows, Wp, Cin_p), _STORE_DTYPE),        # band dbl-buffer
            pltpu.SemaphoreType.DMA((2,)),
        ],
        compiler_params=pltpu.CompilerParams(
            # N is megacore-parallel; band axis carries the manual DMA
            # prefetch across steps, hence "arbitrary".
            dimension_semantics=("parallel", "arbitrary"),
            vmem_limit_bytes=_vmem_limit_bytes()),
    )(x_pad, dww, pww, pwb, w1, b1, wl_blk, gap_row, bl)

    return jnp.transpose(out_padded[..., :oup], (0, 3, 1, 2))          # NCHW


# ----------------------------------------------------------------------------
# Deterministic parameter construction (synthetic, no checkpoint)
# ----------------------------------------------------------------------------
def make_params(key, inp, oup, rates):
    keys = iter(jax.random.split(key, 64))

    def bn(c):
        gamma = jax.random.uniform(next(keys), (c,), minval=0.5, maxval=1.5)
        beta = jax.random.normal(next(keys), (c,)) * 0.1
        mean = jax.random.normal(next(keys), (c,)) * 0.1
        var = jax.random.uniform(next(keys), (c,), minval=0.5, maxval=1.5)
        scale = gamma / jnp.sqrt(var + 1e-5)
        bias = beta - mean * scale
        return scale.astype(jnp.float32), bias.astype(jnp.float32)

    def conv_w(ci, co):
        return (jax.random.normal(next(keys), (ci, co)) / np.sqrt(ci)).astype(jnp.float32)

    params = {"atrous": []}
    for _ in rates:
        s, b = bn(oup)
        params["atrous"].append({
            "dw_w": (jax.random.normal(next(keys), (3, 3, inp)) * 0.3).astype(jnp.float32),
            "pw_w": conv_w(inp, oup),
            "bn_scale": s, "bn_bias": b,
        })
    s, b = bn(oup)
    params["conv1"] = {"w": conv_w(inp, oup), "bn_scale": s, "bn_bias": b}
    s, b = bn(oup)
    params["gap"] = {"w": conv_w(inp, oup), "bn_scale": s, "bn_bias": b}
    s, b = bn(oup)
    num_branches = 1 + len(rates) + 1
    params["conv_last"] = {"w": conv_w(oup * num_branches, oup),
                           "bn_scale": s, "bn_bias": b}
    return params


# ----------------------------------------------------------------------------
# Pure-JAX reference (NCHW, highest precision) for verification
# ----------------------------------------------------------------------------
def ref_forward(x_nchw, params, rates, use_gap=True):
    N, Cin, H, W = x_nchw.shape

    def pw(x, w, s, b):  # x: NCHW, w: (Cin, Cout)
        y = jnp.einsum("nchw,co->nohw", x, w, precision=lax.Precision.HIGHEST)
        y = y * s[None, :, None, None] + b[None, :, None, None]
        return jnp.maximum(y, 0.0)

    def dw(x, w33c, rate):  # w33c: (3, 3, C)
        xp = jnp.pad(x, ((0, 0), (0, 0), (rate, rate), (rate, rate)))
        out = jnp.zeros_like(x)
        for ky in range(3):
            for kx in range(3):
                out = out + w33c[ky, kx, :][None, :, None, None] * \
                      xp[:, :, ky * rate:ky * rate + H, kx * rate:kx * rate + W]
        return out

    outs = []
    for i, rate in enumerate(rates):
        p = params["atrous"][i]
        outs.append(pw(dw(x_nchw, p["dw_w"], rate), p["pw_w"], p["bn_scale"], p["bn_bias"]))
    p = params["conv1"]
    outs.append(pw(x_nchw, p["w"], p["bn_scale"], p["bn_bias"]))
    if use_gap:
        p = params["gap"]
        pooled = jnp.mean(x_nchw, axis=(2, 3), keepdims=True)
        g = pw(pooled, p["w"], p["bn_scale"], p["bn_bias"])
        outs.append(jnp.broadcast_to(g, (N, g.shape[1], H, W)))
    cat = jnp.concatenate(outs, axis=1)
    p = params["conv_last"]
    return pw(cat, p["w"], p["bn_scale"], p["bn_bias"])


if __name__ == "__main__":
    key = jax.random.PRNGKey(0)
    kx, kp = jax.random.split(key)

    N, Cin, H, W = 2, 4, 16, 16
    oup = 8
    rates = (1, 2, 3)

    x = jax.random.normal(kx, (N, Cin, H, W), dtype=jnp.float32)
    params = make_params(kp, Cin, oup, rates)

    # band_h=8 -> 2 row-bands per image, exercising the double-buffered
    # band prefetch path even at this toy size.
    out = aspp_forward(x, params, rates, use_gap=True, band_h=8)
    out = jax.block_until_ready(out)

    assert out.shape == (N, oup, H, W)
    ref = ref_forward(x, params, rates, use_gap=True)
    # bf16 input/scratch storage + bf16 MXU operands (f32 accumulation) vs an
    # f32 HIGHEST-precision reference -> tolerance loosened accordingly.
    np.testing.assert_allclose(np.asarray(out), np.asarray(ref),
                               rtol=4e-2, atol=4e-2)

    print("KERNEL_OK")
</pallas_src>

<mosaic_0001>
module attributes {stable_mosaic.version = 11 : i64} {
  func.func @_aspp_band_kernel(%arg0: i32, %arg1: i32, %arg2: memref<2x22x32x128xbf16, #tpu.memory_space<any>>, %arg3: memref<3x9x128xf32, #tpu.memory_space<vmem>>, %arg4: memref<3x128x128xbf16, #tpu.memory_space<vmem>>, %arg5: memref<3x1x128xf32, #tpu.memory_space<vmem>>, %arg6: memref<128x128xbf16, #tpu.memory_space<vmem>>, %arg7: memref<1x128xf32, #tpu.memory_space<vmem>>, %arg8: memref<4x128x128xbf16, #tpu.memory_space<vmem>>, %arg9: memref<1x1x128xf32, #tpu.memory_space<vmem>>, %arg10: memref<1x128xf32, #tpu.memory_space<vmem>>, %arg11: memref<1x8x16x128xf32, #tpu.memory_space<vmem>>, %arg12: memref<2x14x32x128xbf16, #tpu.memory_space<vmem>>, %arg13: memref<2x!tpu.dma_semaphore, #tpu.memory_space<semaphore_mem>>) attributes {dimension_semantics = [#tpu.dimension_semantics<parallel>, #tpu.dimension_semantics<arbitrary>], iteration_bounds = array<i64: 2, 2>, scalar_prefetch = 0 : i64, scratch_operands = 2 : i64, tpu.core_type = #tpu.core_type<tc>, window_params = [{}, {pipeline_mode = #tpu.pipeline_mode<synchronous>, transform_indices = @transform_1, window_bounds = array<i64: 3, 9, 128>}, {pipeline_mode = #tpu.pipeline_mode<synchronous>, transform_indices = @transform_2, window_bounds = array<i64: 3, 128, 128>}, {pipeline_mode = #tpu.pipeline_mode<synchronous>, transform_indices = @transform_3, window_bounds = array<i64: 3, 1, 128>}, {pipeline_mode = #tpu.pipeline_mode<synchronous>, transform_indices = @transform_4, window_bounds = array<i64: 128, 128>}, {pipeline_mode = #tpu.pipeline_mode<synchronous>, transform_indices = @transform_5, window_bounds = array<i64: 1, 128>}, {pipeline_mode = #tpu.pipeline_mode<synchronous>, transform_indices = @transform_6, window_bounds = array<i64: 4, 128, 128>}, {transform_indices = @transform_7, window_bounds = array<i64: 1, 1, 128>}, {pipeline_mode = #tpu.pipeline_mode<synchronous>, transform_indices = @transform_8, window_bounds = array<i64: 1, 128>}, {transform_indices = @transform_9, window_bounds = array<i64: 1, 8, 16, 128>}]} {
    %c0_i32 = arith.constant 0 : i32
    %0 = arith.cmpi eq, %arg1, %c0_i32 : i32
    %1 = arith.extui %0 : i1 to i32
    %c0_i32_0 = arith.constant 0 : i32
    %2 = arith.cmpi ne, %1, %c0_i32_0 : i32
    scf.if %2 {
      %c0_i32_76 = arith.constant 0 : i32
      %c0_i32_77 = arith.constant 0 : i32
      %c0_i32_78 = arith.constant 0 : i32
      %c0_i32_79 = arith.constant 0 : i32
      %c0_i32_80 = arith.constant 0 : i32
      %304 = tpu.memref_slice %arg2[%arg0, %c0_i32_78, %c0_i32_79, %c0_i32_80] : memref<2x22x32x128xbf16, #tpu.memory_space<any>> -> memref<1x14x32x128xbf16, #tpu.memory_space<any>>
      %305 = tpu.memref_squeeze %304 : memref<1x14x32x128xbf16, #tpu.memory_space<any>> -> memref<14x32x128xbf16, #tpu.memory_space<any>>
      %c0_i32_81 = arith.constant 0 : i32
      %c0_i32_82 = arith.constant 0 : i32
      %c0_i32_83 = arith.constant 0 : i32
      %306 = tpu.memref_slice %arg12[%c0_i32_76, %c0_i32_81, %c0_i32_82, %c0_i32_83] : memref<2x14x32x128xbf16, #tpu.memory_space<vmem>> -> memref<1x14x32x128xbf16, #tpu.memory_space<vmem>>
      %307 = tpu.memref_squeeze %306 : memref<1x14x32x128xbf16, #tpu.memory_space<vmem>> -> memref<14x32x128xbf16, #tpu.memory_space<vmem>>
      %308 = tpu.memref_slice %arg13[%c0_i32_77] : memref<2x!tpu.dma_semaphore, #tpu.memory_space<semaphore_mem>> -> memref<1x!tpu.dma_semaphore, #tpu.memory_space<semaphore_mem>>
      %309 = tpu.memref_squeeze %308 : memref<1x!tpu.dma_semaphore, #tpu.memory_space<semaphore_mem>> -> memref<!tpu.dma_semaphore, #tpu.memory_space<semaphore_mem>>
      tpu.enqueue_dma source(%305 : memref<14x32x128xbf16, #tpu.memory_space<any>>) target(%307 : memref<14x32x128xbf16, #tpu.memory_space<vmem>>) target_semaphore(%309 : memref<!tpu.dma_semaphore, #tpu.memory_space<semaphore_mem>>)
    } else {
    }
    %c2_i32 = arith.constant 2 : i32
    %c0_i32_1 = arith.constant 0 : i32
    %3 = arith.cmpi eq, %c2_i32, %c0_i32_1 : i32
    %c1_i32 = arith.constant 1 : i32
    %4 = arith.select %3, %c1_i32, %c2_i32 : i32
    %5 = arith.remsi %arg1, %4 : i32
    %c0_i32_2 = arith.constant 0 : i32
    %6 = arith.cmpi ne, %5, %c0_i32_2 : i32
    %c0_i32_3 = arith.constant 0 : i32
    %7 = arith.cmpi slt, %5, %c0_i32_3 : i32
    %c0_i32_4 = arith.constant 0 : i32
    %8 = arith.cmpi slt, %4, %c0_i32_4 : i32
    %9 = arith.xori %7, %8 : i1
    %10 = arith.andi %9, %6 : i1
    %11 = arith.addi %5, %4 : i32
    %12 = arith.select %10, %11, %5 : i32
    %c8_i32 = arith.constant 8 : i32
    %13 = arith.muli %arg1, %c8_i32 : i32
    %c0_i32_5 = arith.constant 0 : i32
    %c0_i32_6 = arith.constant 0 : i32
    %14 = tpu.memref_slice %arg2[%arg0, %13, %c0_i32_5, %c0_i32_6] : memref<2x22x32x128xbf16, #tpu.memory_space<any>> -> memref<1x14x32x128xbf16, #tpu.memory_space<any>>
    %15 = tpu.memref_squeeze %14 : memref<1x14x32x128xbf16, #tpu.memory_space<any>> -> memref<14x32x128xbf16, #tpu.memory_space<any>>
    %c0_i32_7 = arith.constant 0 : i32
    %c0_i32_8 = arith.constant 0 : i32
    %c0_i32_9 = arith.constant 0 : i32
    %16 = tpu.memref_slice %arg12[%12, %c0_i32_7, %c0_i32_8, %c0_i32_9] : memref<2x14x32x128xbf16, #tpu.memory_space<vmem>> -> memref<1x14x32x128xbf16, #tpu.memory_space<vmem>>
    %17 = tpu.memref_squeeze %16 : memref<1x14x32x128xbf16, #tpu.memory_space<vmem>> -> memref<14x32x128xbf16, #tpu.memory_space<vmem>>
    %18 = tpu.memref_slice %arg13[%12] : memref<2x!tpu.dma_semaphore, #tpu.memory_space<semaphore_mem>> -> memref<1x!tpu.dma_semaphore, #tpu.memory_space<semaphore_mem>>
    %19 = tpu.memref_squeeze %18 : memref<1x!tpu.dma_semaphore, #tpu.memory_space<semaphore_mem>> -> memref<!tpu.dma_semaphore, #tpu.memory_space<semaphore_mem>>
    tpu.wait_dma2 semaphore(%19 : memref<!tpu.dma_semaphore, #tpu.memory_space<semaphore_mem>>) src(%15 : memref<14x32x128xbf16, #tpu.memory_space<any>>) dst(%17 : memref<14x32x128xbf16, #tpu.memory_space<vmem>>)
    %c1_i32_10 = arith.constant 1 : i32
    %20 = arith.addi %arg1, %c1_i32_10 : i32
    %c2_i32_11 = arith.constant 2 : i32
    %21 = arith.cmpi slt, %20, %c2_i32_11 : i32
    %22 = arith.extui %21 : i1 to i32
    %c0_i32_12 = arith.constant 0 : i32
    %23 = arith.cmpi ne, %22, %c0_i32_12 : i32
    scf.if %23 {
      %c1_i32_76 = arith.constant 1 : i32
      %304 = arith.addi %arg1, %c1_i32_76 : i32
      %c1_i32_77 = arith.constant 1 : i32
      %305 = arith.subi %c1_i32_77, %12 : i32
      %c8_i32_78 = arith.constant 8 : i32
      %306 = arith.muli %304, %c8_i32_78 : i32
      %c0_i32_79 = arith.constant 0 : i32
      %c0_i32_80 = arith.constant 0 : i32
      %307 = tpu.memref_slice %arg2[%arg0, %306, %c0_i32_79, %c0_i32_80] : memref<2x22x32x128xbf16, #tpu.memory_space<any>> -> memref<1x14x32x128xbf16, #tpu.memory_space<any>>
      %308 = tpu.memref_squeeze %307 : memref<1x14x32x128xbf16, #tpu.memory_space<any>> -> memref<14x32x128xbf16, #tpu.memory_space<any>>
      %c0_i32_81 = arith.constant 0 : i32
      %c0_i32_82 = arith.constant 0 : i32
      %c0_i32_83 = arith.constant 0 : i32
      %309 = tpu.memref_slice %arg12[%305, %c0_i32_81, %c0_i32_82, %c0_i32_83] : memref<2x14x32x128xbf16, #tpu.memory_space<vmem>> -> memref<1x14x32x128xbf16, #tpu.memory_space<vmem>>
      %310 = tpu.memref_squeeze %309 : memref<1x14x32x128xbf16, #tpu.memory_space<vmem>> -> memref<14x32x128xbf16, #tpu.memory_space<vmem>>
      %311 = tpu.memref_slice %arg13[%305] : memref<2x!tpu.dma_semaphore, #tpu.memory_space<semaphore_mem>> -> memref<1x!tpu.dma_semaphore, #tpu.memory_space<semaphore_mem>>
      %312 = tpu.memref_squeeze %311 : memref<1x!tpu.dma_semaphore, #tpu.memory_space<semaphore_mem>> -> memref<!tpu.dma_semaphore, #tpu.memory_space<semaphore_mem>>
      tpu.enqueue_dma source(%308 : memref<14x32x128xbf16, #tpu.memory_space<any>>) target(%310 : memref<14x32x128xbf16, #tpu.memory_space<vmem>>) target_semaphore(%312 : memref<!tpu.dma_semaphore, #tpu.memory_space<semaphore_mem>>)
    } else {
    }
    %24 = arith.index_cast %12 : i32 to index
    %c0 = arith.constant 0 : index
    %c0_13 = arith.constant 0 : index
    %c0_14 = arith.constant 0 : index
    %25 = vector.load %arg12[%24, %c0, %c0_13, %c0_14] : memref<2x14x32x128xbf16, #tpu.memory_space<vmem>>, vector<1x14x32x128xbf16>
    %26 = vector.shape_cast %25 : vector<1x14x32x128xbf16> to vector<14x32x128xbf16>
    %27 = arith.extf %26 : vector<14x32x128xbf16> to vector<14x32x128xf32>
    %28 = vector.extract_strided_slice %27 {offsets = [3, 8, 0], sizes = [8, 16, 128], strides = [1, 1, 1]} : vector<14x32x128xf32> to vector<8x16x128xf32>
    %29 = vector.shape_cast %28 : vector<8x16x128xf32> to vector<128x128xf32>
    %30 = arith.truncf %29 : vector<128x128xf32> to vector<128x128xbf16>
    %c0_15 = arith.constant 0 : index
    %c0_16 = arith.constant 0 : index
    %31 = vector.load %arg6[%c0_15, %c0_16] : memref<128x128xbf16, #tpu.memory_space<vmem>>, vector<128x128xbf16>
    %cst = arith.constant dense<0.000000e+00> : vector<128x128xf32>
    %32 = tpu.matmul %30, %31, %cst {dimension_numbers = #tpu.dot_dimension_numbers<[1], [0], [0], [1], [0, 0, 1, 1], [], []>} : vector<128x128xbf16>, vector<128x128xbf16>, vector<128x128xf32> -> vector<128x128xf32>
    %c0_17 = arith.constant 0 : index
    %c0_18 = arith.constant 0 : index
    %33 = vector.load %arg7[%c0_17, %c0_18] : memref<1x128xf32, #tpu.memory_space<vmem>>, vector<1x128xf32>
    %34 = vector.broadcast %33 : vector<1x128xf32> to vector<128x128xf32>
    %35 = arith.addf %32, %34 : vector<128x128xf32>
    %cst_19 = arith.constant 0.000000e+00 : f32
    %36 = vector.broadcast %cst_19 : f32 to vector<128x128xf32>
    %37 = arith.maximumf %35, %36 : vector<128x128xf32>
    %38 = arith.truncf %37 : vector<128x128xf32> to vector<128x128xbf16>
    %c3 = arith.constant 3 : index
    %c0_20 = arith.constant 0 : index
    %c0_21 = arith.constant 0 : index
    %39 = vector.load %arg8[%c3, %c0_20, %c0_21] : memref<4x128x128xbf16, #tpu.memory_space<vmem>>, vector<1x128x128xbf16>
    %40 = vector.shape_cast %39 : vector<1x128x128xbf16> to vector<128x128xbf16>
    %cst_22 = arith.constant dense<0.000000e+00> : vector<128x128xf32>
    %41 = tpu.matmul %38, %40, %cst_22 {dimension_numbers = #tpu.dot_dimension_numbers<[1], [0], [0], [1], [0, 0, 1, 1], [], []>} : vector<128x128xbf16>, vector<128x128xbf16>, vector<128x128xf32> -> vector<128x128xf32>
    %c0_23 = arith.constant 0 : index
    %c0_24 = arith.constant 0 : index
    %c0_25 = arith.constant 0 : index
    %42 = vector.load %arg3[%c0_23, %c0_24, %c0_25] : memref<3x9x128xf32, #tpu.memory_space<vmem>>, vector<1x9x128xf32>
    %43 = vector.shape_cast %42 : vector<1x9x128xf32> to vector<9x128xf32>
    %44 = vector.extract_strided_slice %27 {offsets = [2, 0, 0], sizes = [8, 32, 128], strides = [1, 1, 1]} : vector<14x32x128xf32> to vector<8x32x128xf32>
    %45 = vector.extract_strided_slice %44 {offsets = [0, 7, 0], sizes = [8, 16, 128], strides = [1, 1, 1]} : vector<8x32x128xf32> to vector<8x16x128xf32>
    %46 = vector.extract_strided_slice %43 {offsets = [0, 0], sizes = [1, 128], strides = [1, 1]} : vector<9x128xf32> to vector<1x128xf32>
    %47 = vector.shape_cast %46 : vector<1x128xf32> to vector<128xf32>
    %48 = vector.shape_cast %47 : vector<128xf32> to vector<1x1x128xf32>
    %49 = vector.broadcast %48 : vector<1x1x128xf32> to vector<8x16x128xf32>
    %50 = arith.mulf %45, %49 : vector<8x16x128xf32>
    %51 = vector.extract_strided_slice %44 {offsets = [0, 8, 0], sizes = [8, 16, 128], strides = [1, 1, 1]} : vector<8x32x128xf32> to vector<8x16x128xf32>
    %52 = vector.extract_strided_slice %43 {offsets = [1, 0], sizes = [1, 128], strides = [1, 1]} : vector<9x128xf32> to vector<1x128xf32>
    %53 = vector.shape_cast %52 : vector<1x128xf32> to vector<128xf32>
    %54 = vector.shape_cast %53 : vector<128xf32> to vector<1x1x128xf32>
    %55 = vector.broadcast %54 : vector<1x1x128xf32> to vector<8x16x128xf32>
    %56 = arith.mulf %51, %55 : vector<8x16x128xf32>
    %57 = arith.addf %50, %56 : vector<8x16x128xf32>
    %58 = vector.extract_strided_slice %44 {offsets = [0, 9, 0], sizes = [8, 16, 128], strides = [1, 1, 1]} : vector<8x32x128xf32> to vector<8x16x128xf32>
    %59 = vector.extract_strided_slice %43 {offsets = [2, 0], sizes = [1, 128], strides = [1, 1]} : vector<9x128xf32> to vector<1x128xf32>
    %60 = vector.shape_cast %59 : vector<1x128xf32> to vector<128xf32>
    %61 = vector.shape_cast %60 : vector<128xf32> to vector<1x1x128xf32>
    %62 = vector.broadcast %61 : vector<1x1x128xf32> to vector<8x16x128xf32>
    %63 = arith.mulf %58, %62 : vector<8x16x128xf32>
    %64 = arith.addf %57, %63 : vector<8x16x128xf32>
    %65 = vector.extract_strided_slice %27 {offsets = [3, 0, 0], sizes = [8, 32, 128], strides = [1, 1, 1]} : vector<14x32x128xf32> to vector<8x32x128xf32>
    %66 = vector.extract_strided_slice %65 {offsets = [0, 7, 0], sizes = [8, 16, 128], strides = [1, 1, 1]} : vector<8x32x128xf32> to vector<8x16x128xf32>
    %67 = vector.extract_strided_slice %43 {offsets = [3, 0], sizes = [1, 128], strides = [1, 1]} : vector<9x128xf32> to vector<1x128xf32>
    %68 = vector.shape_cast %67 : vector<1x128xf32> to vector<128xf32>
    %69 = vector.shape_cast %68 : vector<128xf32> to vector<1x1x128xf32>
    %70 = vector.broadcast %69 : vector<1x1x128xf32> to vector<8x16x128xf32>
    %71 = arith.mulf %66, %70 : vector<8x16x128xf32>
    %72 = arith.addf %64, %71 : vector<8x16x128xf32>
    %73 = vector.extract_strided_slice %65 {offsets = [0, 8, 0], sizes = [8, 16, 128], strides = [1, 1, 1]} : vector<8x32x128xf32> to vector<8x16x128xf32>
    %74 = vector.extract_strided_slice %43 {offsets = [4, 0], sizes = [1, 128], strides = [1, 1]} : vector<9x128xf32> to vector<1x128xf32>
    %75 = vector.shape_cast %74 : vector<1x128xf32> to vector<128xf32>
    %76 = vector.shape_cast %75 : vector<128xf32> to vector<1x1x128xf32>
    %77 = vector.broadcast %76 : vector<1x1x128xf32> to vector<8x16x128xf32>
    %78 = arith.mulf %73, %77 : vector<8x16x128xf32>
    %79 = arith.addf %72, %78 : vector<8x16x128xf32>
    %80 = vector.extract_strided_slice %65 {offsets = [0, 9, 0], sizes = [8, 16, 128], strides = [1, 1, 1]} : vector<8x32x128xf32> to vector<8x16x128xf32>
    %81 = vector.extract_strided_slice %43 {offsets = [5, 0], sizes = [1, 128], strides = [1, 1]} : vector<9x128xf32> to vector<1x128xf32>
    %82 = vector.shape_cast %81 : vector<1x128xf32> to vector<128xf32>
    %83 = vector.shape_cast %82 : vector<128xf32> to vector<1x1x128xf32>
    %84 = vector.broadcast %83 : vector<1x1x128xf32> to vector<8x16x128xf32>
    %85 = arith.mulf %80, %84 : vector<8x16x128xf32>
    %86 = arith.addf %79, %85 : vector<8x16x128xf32>
    %87 = vector.extract_strided_slice %27 {offsets = [4, 0, 0], sizes = [8, 32, 128], strides = [1, 1, 1]} : vector<14x32x128xf32> to vector<8x32x128xf32>
    %88 = vector.extract_strided_slice %87 {offsets = [0, 7, 0], sizes = [8, 16, 128], strides = [1, 1, 1]} : vector<8x32x128xf32> to vector<8x16x128xf32>
    %89 = vector.extract_strided_slice %43 {offsets = [6, 0], sizes = [1, 128], strides = [1, 1]} : vector<9x128xf32> to vector<1x128xf32>
    %90 = vector.shape_cast %89 : vector<1x128xf32> to vector<128xf32>
    %91 = vector.shape_cast %90 : vector<128xf32> to vector<1x1x128xf32>
    %92 = vector.broadcast %91 : vector<1x1x128xf32> to vector<8x16x128xf32>
    %93 = arith.mulf %88, %92 : vector<8x16x128xf32>
    %94 = arith.addf %86, %93 : vector<8x16x128xf32>
    %95 = vector.extract_strided_slice %87 {offsets = [0, 8, 0], sizes = [8, 16, 128], strides = [1, 1, 1]} : vector<8x32x128xf32> to vector<8x16x128xf32>
    %96 = vector.extract_strided_slice %43 {offsets = [7, 0], sizes = [1, 128], strides = [1, 1]} : vector<9x128xf32> to vector<1x128xf32>
    %97 = vector.shape_cast %96 : vector<1x128xf32> to vector<128xf32>
    %98 = vector.shape_cast %97 : vector<128xf32> to vector<1x1x128xf32>
    %99 = vector.broadcast %98 : vector<1x1x128xf32> to vector<8x16x128xf32>
    %100 = arith.mulf %95, %99 : vector<8x16x128xf32>
    %101 = arith.addf %94, %100 : vector<8x16x128xf32>
    %102 = vector.extract_strided_slice %87 {offsets = [0, 9, 0], sizes = [8, 16, 128], strides = [1, 1, 1]} : vector<8x32x128xf32> to vector<8x16x128xf32>
    %103 = vector.extract_strided_slice %43 {offsets = [8, 0], sizes = [1, 128], strides = [1, 1]} : vector<9x128xf32> to vector<1x128xf32>
    %104 = vector.shape_cast %103 : vector<1x128xf32> to vector<128xf32>
    %105 = vector.shape_cast %104 : vector<128xf32> to vector<1x1x128xf32>
    %106 = vector.broadcast %105 : vector<1x1x128xf32> to vector<8x16x128xf32>
    %107 = arith.mulf %102, %106 : vector<8x16x128xf32>
    %108 = arith.addf %101, %107 : vector<8x16x128xf32>
    %109 = vector.shape_cast %108 : vector<8x16x128xf32> to vector<128x128xf32>
    %110 = arith.truncf %109 : vector<128x128xf32> to vector<128x128xbf16>
    %c0_26 = arith.constant 0 : index
    %c0_27 = arith.constant 0 : index
    %c0_28 = arith.constant 0 : index
    %111 = vector.load %arg4[%c0_26, %c0_27, %c0_28] : memref<3x128x128xbf16, #tpu.memory_space<vmem>>, vector<1x128x128xbf16>
    %112 = vector.shape_cast %111 : vector<1x128x128xbf16> to vector<128x128xbf16>
    %cst_29 = arith.constant dense<0.000000e+00> : vector<128x128xf32>
    %113 = tpu.matmul %110, %112, %cst_29 {dimension_numbers = #tpu.dot_dimension_numbers<[1], [0], [0], [1], [0, 0, 1, 1], [], []>} : vector<128x128xbf16>, vector<128x128xbf16>, vector<128x128xf32> -> vector<128x128xf32>
    %c0_30 = arith.constant 0 : index
    %c0_31 = arith.constant 0 : index
    %c0_32 = arith.constant 0 : index
    %114 = vector.load %arg5[%c0_30, %c0_31, %c0_32] : memref<3x1x128xf32, #tpu.memory_space<vmem>>, vector<1x1x128xf32>
    %115 = vector.shape_cast %114 : vector<1x1x128xf32> to vector<1x128xf32>
    %116 = vector.broadcast %115 : vector<1x128xf32> to vector<128x128xf32>
    %117 = arith.addf %113, %116 : vector<128x128xf32>
    %cst_33 = arith.constant 0.000000e+00 : f32
    %118 = vector.broadcast %cst_33 : f32 to vector<128x128xf32>
    %119 = arith.maximumf %117, %118 : vector<128x128xf32>
    %120 = arith.truncf %119 : vector<128x128xf32> to vector<128x128xbf16>
    %c0_34 = arith.constant 0 : index
    %c0_35 = arith.constant 0 : index
    %c0_36 = arith.constant 0 : index
    %121 = vector.load %arg8[%c0_34, %c0_35, %c0_36] : memref<4x128x128xbf16, #tpu.memory_space<vmem>>, vector<1x128x128xbf16>
    %122 = vector.shape_cast %121 : vector<1x128x128xbf16> to vector<128x128xbf16>
    %cst_37 = arith.constant dense<0.000000e+00> : vector<128x128xf32>
    %123 = tpu.matmul %120, %122, %cst_37 {dimension_numbers = #tpu.dot_dimension_numbers<[1], [0], [0], [1], [0, 0, 1, 1], [], []>} : vector<128x128xbf16>, vector<128x128xbf16>, vector<128x128xf32> -> vector<128x128xf32>
    %124 = arith.addf %41, %123 : vector<128x128xf32>
    %c1 = arith.constant 1 : index
    %c0_38 = arith.constant 0 : index
    %c0_39 = arith.constant 0 : index
    %125 = vector.load %arg3[%c1, %c0_38, %c0_39] : memref<3x9x128xf32, #tpu.memory_space<vmem>>, vector<1x9x128xf32>
    %126 = vector.shape_cast %125 : vector<1x9x128xf32> to vector<9x128xf32>
    %127 = vector.extract_strided_slice %27 {offsets = [1, 0, 0], sizes = [8, 32, 128], strides = [1, 1, 1]} : vector<14x32x128xf32> to vector<8x32x128xf32>
    %128 = vector.extract_strided_slice %127 {offsets = [0, 6, 0], sizes = [8, 16, 128], strides = [1, 1, 1]} : vector<8x32x128xf32> to vector<8x16x128xf32>
    %129 = vector.extract_strided_slice %126 {offsets = [0, 0], sizes = [1, 128], strides = [1, 1]} : vector<9x128xf32> to vector<1x128xf32>
    %130 = vector.shape_cast %129 : vector<1x128xf32> to vector<128xf32>
    %131 = vector.shape_cast %130 : vector<128xf32> to vector<1x1x128xf32>
    %132 = vector.broadcast %131 : vector<1x1x128xf32> to vector<8x16x128xf32>
    %133 = arith.mulf %128, %132 : vector<8x16x128xf32>
    %134 = vector.extract_strided_slice %127 {offsets = [0, 8, 0], sizes = [8, 16, 128], strides = [1, 1, 1]} : vector<8x32x128xf32> to vector<8x16x128xf32>
    %135 = vector.extract_strided_slice %126 {offsets = [1, 0], sizes = [1, 128], strides = [1, 1]} : vector<9x128xf32> to vector<1x128xf32>
    %136 = vector.shape_cast %135 : vector<1x128xf32> to vector<128xf32>
    %137 = vector.shape_cast %136 : vector<128xf32> to vector<1x1x128xf32>
    %138 = vector.broadcast %137 : vector<1x1x128xf32> to vector<8x16x128xf32>
    %139 = arith.mulf %134, %138 : vector<8x16x128xf32>
    %140 = arith.addf %133, %139 : vector<8x16x128xf32>
    %141 = vector.extract_strided_slice %127 {offsets = [0, 10, 0], sizes = [8, 16, 128], strides = [1, 1, 1]} : vector<8x32x128xf32> to vector<8x16x128xf32>
    %142 = vector.extract_strided_slice %126 {offsets = [2, 0], sizes = [1, 128], strides = [1, 1]} : vector<9x128xf32> to vector<1x128xf32>
    %143 = vector.shape_cast %142 : vector<1x128xf32> to vector<128xf32>
    %144 = vector.shape_cast %143 : vector<128xf32> to vector<1x1x128xf32>
    %145 = vector.broadcast %144 : vector<1x1x128xf32> to vector<8x16x128xf32>
    %146 = arith.mulf %141, %145 : vector<8x16x128xf32>
    %147 = arith.addf %140, %146 : vector<8x16x128xf32>
    %148 = vector.extract_strided_slice %27 {offsets = [3, 0, 0], sizes = [8, 32, 128], strides = [1, 1, 1]} : vector<14x32x128xf32> to vector<8x32x128xf32>
    %149 = vector.extract_strided_slice %148 {offsets = [0, 6, 0], sizes = [8, 16, 128], strides = [1, 1, 1]} : vector<8x32x128xf32> to vector<8x16x128xf32>
    %150 = vector.extract_strided_slice %126 {offsets = [3, 0], sizes = [1, 128], strides = [1, 1]} : vector<9x128xf32> to vector<1x128xf32>
    %151 = vector.shape_cast %150 : vector<1x128xf32> to vector<128xf32>
    %152 = vector.shape_cast %151 : vector<128xf32> to vector<1x1x128xf32>
    %153 = vector.broadcast %152 : vector<1x1x128xf32> to vector<8x16x128xf32>
    %154 = arith.mulf %149, %153 : vector<8x16x128xf32>
    %155 = arith.addf %147, %154 : vector<8x16x128xf32>
    %156 = vector.extract_strided_slice %148 {offsets = [0, 8, 0], sizes = [8, 16, 128], strides = [1, 1, 1]} : vector<8x32x128xf32> to vector<8x16x128xf32>
    %157 = vector.extract_strided_slice %126 {offsets = [4, 0], sizes = [1, 128], strides = [1, 1]} : vector<9x128xf32> to vector<1x128xf32>
    %158 = vector.shape_cast %157 : vector<1x128xf32> to vector<128xf32>
    %159 = vector.shape_cast %158 : vector<128xf32> to vector<1x1x128xf32>
    %160 = vector.broadcast %159 : vector<1x1x128xf32> to vector<8x16x128xf32>
    %161 = arith.mulf %156, %160 : vector<8x16x128xf32>
    %162 = arith.addf %155, %161 : vector<8x16x128xf32>
    %163 = vector.extract_strided_slice %148 {offsets = [0, 10, 0], sizes = [8, 16, 128], strides = [1, 1, 1]} : vector<8x32x128xf32> to vector<8x16x128xf32>
    %164 = vector.extract_strided_slice %126 {offsets = [5, 0], sizes = [1, 128], strides = [1, 1]} : vector<9x128xf32> to vector<1x128xf32>
    %165 = vector.shape_cast %164 : vector<1x128xf32> to vector<128xf32>
    %166 = vector.shape_cast %165 : vector<128xf32> to vector<1x1x128xf32>
    %167 = vector.broadcast %166 : vector<1x1x128xf32> to vector<8x16x128xf32>
    %168 = arith.mulf %163, %167 : vector<8x16x128xf32>
    %169 = arith.addf %162, %168 : vector<8x16x128xf32>
    %170 = vector.extract_strided_slice %27 {offsets = [5, 0, 0], sizes = [8, 32, 128], strides = [1, 1, 1]} : vector<14x32x128xf32> to vector<8x32x128xf32>
    %171 = vector.extract_strided_slice %170 {offsets = [0, 6, 0], sizes = [8, 16, 128], strides = [1, 1, 1]} : vector<8x32x128xf32> to vector<8x16x128xf32>
    %172 = vector.extract_strided_slice %126 {offsets = [6, 0], sizes = [1, 128], strides = [1, 1]} : vector<9x128xf32> to vector<1x128xf32>
    %173 = vector.shape_cast %172 : vector<1x128xf32> to vector<128xf32>
    %174 = vector.shape_cast %173 : vector<128xf32> to vector<1x1x128xf32>
    %175 = vector.broadcast %174 : vector<1x1x128xf32> to vector<8x16x128xf32>
    %176 = arith.mulf %171, %175 : vector<8x16x128xf32>
    %177 = arith.addf %169, %176 : vector<8x16x128xf32>
    %178 = vector.extract_strided_slice %170 {offsets = [0, 8, 0], sizes = [8, 16, 128], strides = [1, 1, 1]} : vector<8x32x128xf32> to vector<8x16x128xf32>
    %179 = vector.extract_strided_slice %126 {offsets = [7, 0], sizes = [1, 128], strides = [1, 1]} : vector<9x128xf32> to vector<1x128xf32>
    %180 = vector.shape_cast %179 : vector<1x128xf32> to vector<128xf32>
    %181 = vector.shape_cast %180 : vector<128xf32> to vector<1x1x128xf32>
    %182 = vector.broadcast %181 : vector<1x1x128xf32> to vector<8x16x128xf32>
    %183 = arith.mulf %178, %182 : vector<8x16x128xf32>
    %184 = arith.addf %177, %183 : vector<8x16x128xf32>
    %185 = vector.extract_strided_slice %170 {offsets = [0, 10, 0], sizes = [8, 16, 128], strides = [1, 1, 1]} : vector<8x32x128xf32> to vector<8x16x128xf32>
    %186 = vector.extract_strided_slice %126 {offsets = [8, 0], sizes = [1, 128], strides = [1, 1]} : vector<9x128xf32> to vector<1x128xf32>
    %187 = vector.shape_cast %186 : vector<1x128xf32> to vector<128xf32>
    %188 = vector.shape_cast %187 : vector<128xf32> to vector<1x1x128xf32>
    %189 = vector.broadcast %188 : vector<1x1x128xf32> to vector<8x16x128xf32>
    %190 = arith.mulf %185, %189 : vector<8x16x128xf32>
    %191 = arith.addf %184, %190 : vector<8x16x128xf32>
    %192 = vector.shape_cast %191 : vector<8x16x128xf32> to vector<128x128xf32>
    %193 = arith.truncf %192 : vector<128x128xf32> to vector<128x128xbf16>
    %c1_40 = arith.constant 1 : index
    %c0_41 = arith.constant 0 : index
    %c0_42 = arith.constant 0 : index
    %194 = vector.load %arg4[%c1_40, %c0_41, %c0_42] : memref<3x128x128xbf16, #tpu.memory_space<vmem>>, vector<1x128x128xbf16>
    %195 = vector.shape_cast %194 : vector<1x128x128xbf16> to vector<128x128xbf16>
    %cst_43 = arith.constant dense<0.000000e+00> : vector<128x128xf32>
    %196 = tpu.matmul %193, %195, %cst_43 {dimension_numbers = #tpu.dot_dimension_numbers<[1], [0], [0], [1], [0, 0, 1, 1], [], []>} : vector<128x128xbf16>, vector<128x128xbf16>, vector<128x128xf32> -> vector<128x128xf32>
    %c1_44 = arith.constant 1 : index
    %c0_45 = arith.constant 0 : index
    %c0_46 = arith.constant 0 : index
    %197 = vector.load %arg5[%c1_44, %c0_45, %c0_46] : memref<3x1x128xf32, #tpu.memory_space<vmem>>, vector<1x1x128xf32>
    %198 = vector.shape_cast %197 : vector<1x1x128xf32> to vector<1x128xf32>
    %199 = vector.broadcast %198 : vector<1x128xf32> to vector<128x128xf32>
    %200 = arith.addf %196, %199 : vector<128x128xf32>
    %cst_47 = arith.constant 0.000000e+00 : f32
    %201 = vector.broadcast %cst_47 : f32 to vector<128x128xf32>
    %202 = arith.maximumf %200, %201 : vector<128x128xf32>
    %203 = arith.truncf %202 : vector<128x128xf32> to vector<128x128xbf16>
    %c1_48 = arith.constant 1 : index
    %c0_49 = arith.constant 0 : index
    %c0_50 = arith.constant 0 : index
    %204 = vector.load %arg8[%c1_48, %c0_49, %c0_50] : memref<4x128x128xbf16, #tpu.memory_space<vmem>>, vector<1x128x128xbf16>
    %205 = vector.shape_cast %204 : vector<1x128x128xbf16> to vector<128x128xbf16>
    %cst_51 = arith.constant dense<0.000000e+00> : vector<128x128xf32>
    %206 = tpu.matmul %203, %205, %cst_51 {dimension_numbers = #tpu.dot_dimension_numbers<[1], [0], [0], [1], [0, 0, 1, 1], [], []>} : vector<128x128xbf16>, vector<128x128xbf16>, vector<128x128xf32> -> vector<128x128xf32>
    %207 = arith.addf %124, %206 : vector<128x128xf32>
    %c2 = arith.constant 2 : index
    %c0_52 = arith.constant 0 : index
    %c0_53 = arith.constant 0 : index
    %208 = vector.load %arg3[%c2, %c0_52, %c0_53] : memref<3x9x128xf32, #tpu.memory_space<vmem>>, vector<1x9x128xf32>
    %209 = vector.shape_cast %208 : vector<1x9x128xf32> to vector<9x128xf32>
    %210 = vector.extract_strided_slice %27 {offsets = [0, 0, 0], sizes = [8, 32, 128], strides = [1, 1, 1]} : vector<14x32x128xf32> to vector<8x32x128xf32>
    %211 = vector.extract_strided_slice %210 {offsets = [0, 5, 0], sizes = [8, 16, 128], strides = [1, 1, 1]} : vector<8x32x128xf32> to vector<8x16x128xf32>
    %212 = vector.extract_strided_slice %209 {offsets = [0, 0], sizes = [1, 128], strides = [1, 1]} : vector<9x128xf32> to vector<1x128xf32>
    %213 = vector.shape_cast %212 : vector<1x128xf32> to vector<128xf32>
    %214 = vector.shape_cast %213 : vector<128xf32> to vector<1x1x128xf32>
    %215 = vector.broadcast %214 : vector<1x1x128xf32> to vector<8x16x128xf32>
    %216 = arith.mulf %211, %215 : vector<8x16x128xf32>
    %217 = vector.extract_strided_slice %210 {offsets = [0, 8, 0], sizes = [8, 16, 128], strides = [1, 1, 1]} : vector<8x32x128xf32> to vector<8x16x128xf32>
    %218 = vector.extract_strided_slice %209 {offsets = [1, 0], sizes = [1, 128], strides = [1, 1]} : vector<9x128xf32> to vector<1x128xf32>
    %219 = vector.shape_cast %218 : vector<1x128xf32> to vector<128xf32>
    %220 = vector.shape_cast %219 : vector<128xf32> to vector<1x1x128xf32>
    %221 = vector.broadcast %220 : vector<1x1x128xf32> to vector<8x16x128xf32>
    %222 = arith.mulf %217, %221 : vector<8x16x128xf32>
    %223 = arith.addf %216, %222 : vector<8x16x128xf32>
    %224 = vector.extract_strided_slice %210 {offsets = [0, 11, 0], sizes = [8, 16, 128], strides = [1, 1, 1]} : vector<8x32x128xf32> to vector<8x16x128xf32>
    %225 = vector.extract_strided_slice %209 {offsets = [2, 0], sizes = [1, 128], strides = [1, 1]} : vector<9x128xf32> to vector<1x128xf32>
    %226 = vector.shape_cast %225 : vector<1x128xf32> to vector<128xf32>
    %227 = vector.shape_cast %226 : vector<128xf32> to vector<1x1x128xf32>
    %228 = vector.broadcast %227 : vector<1x1x128xf32> to vector<8x16x128xf32>
    %229 = arith.mulf %224, %228 : vector<8x16x128xf32>
    %230 = arith.addf %223, %229 : vector<8x16x128xf32>
    %231 = vector.extract_strided_slice %27 {offsets = [3, 0, 0], sizes = [8, 32, 128], strides = [1, 1, 1]} : vector<14x32x128xf32> to vector<8x32x128xf32>
    %232 = vector.extract_strided_slice %231 {offsets = [0, 5, 0], sizes = [8, 16, 128], strides = [1, 1, 1]} : vector<8x32x128xf32> to vector<8x16x128xf32>
    %233 = vector.extract_strided_slice %209 {offsets = [3, 0], sizes = [1, 128], strides = [1, 1]} : vector<9x128xf32> to vector<1x128xf32>
    %234 = vector.shape_cast %233 : vector<1x128xf32> to vector<128xf32>
    %235 = vector.shape_cast %234 : vector<128xf32> to vector<1x1x128xf32>
    %236 = vector.broadcast %235 : vector<1x1x128xf32> to vector<8x16x128xf32>
    %237 = arith.mulf %232, %236 : vector<8x16x128xf32>
    %238 = arith.addf %230, %237 : vector<8x16x128xf32>
    %239 = vector.extract_strided_slice %231 {offsets = [0, 8, 0], sizes = [8, 16, 128], strides = [1, 1, 1]} : vector<8x32x128xf32> to vector<8x16x128xf32>
    %240 = vector.extract_strided_slice %209 {offsets = [4, 0], sizes = [1, 128], strides = [1, 1]} : vector<9x128xf32> to vector<1x128xf32>
    %241 = vector.shape_cast %240 : vector<1x128xf32> to vector<128xf32>
    %242 = vector.shape_cast %241 : vector<128xf32> to vector<1x1x128xf32>
    %243 = vector.broadcast %242 : vector<1x1x128xf32> to vector<8x16x128xf32>
    %244 = arith.mulf %239, %243 : vector<8x16x128xf32>
    %245 = arith.addf %238, %244 : vector<8x16x128xf32>
    %246 = vector.extract_strided_slice %231 {offsets = [0, 11, 0], sizes = [8, 16, 128], strides = [1, 1, 1]} : vector<8x32x128xf32> to vector<8x16x128xf32>
    %247 = vector.extract_strided_slice %209 {offsets = [5, 0], sizes = [1, 128], strides = [1, 1]} : vector<9x128xf32> to vector<1x128xf32>
    %248 = vector.shape_cast %247 : vector<1x128xf32> to vector<128xf32>
    %249 = vector.shape_cast %248 : vector<128xf32> to vector<1x1x128xf32>
    %250 = vector.broadcast %249 : vector<1x1x128xf32> to vector<8x16x128xf32>
    %251 = arith.mulf %246, %250 : vector<8x16x128xf32>
    %252 = arith.addf %245, %251 : vector<8x16x128xf32>
    %253 = vector.extract_strided_slice %27 {offsets = [6, 0, 0], sizes = [8, 32, 128], strides = [1, 1, 1]} : vector<14x32x128xf32> to vector<8x32x128xf32>
    %254 = vector.extract_strided_slice %253 {offsets = [0, 5, 0], sizes = [8, 16, 128], strides = [1, 1, 1]} : vector<8x32x128xf32> to vector<8x16x128xf32>
    %255 = vector.extract_strided_slice %209 {offsets = [6, 0], sizes = [1, 128], strides = [1, 1]} : vector<9x128xf32> to vector<1x128xf32>
    %256 = vector.shape_cast %255 : vector<1x128xf32> to vector<128xf32>
    %257 = vector.shape_cast %256 : vector<128xf32> to vector<1x1x128xf32>
    %258 = vector.broadcast %257 : vector<1x1x128xf32> to vector<8x16x128xf32>
    %259 = arith.mulf %254, %258 : vector<8x16x128xf32>
    %260 = arith.addf %252, %259 : vector<8x16x128xf32>
    %261 = vector.extract_strided_slice %253 {offsets = [0, 8, 0], sizes = [8, 16, 128], strides = [1, 1, 1]} : vector<8x32x128xf32> to vector<8x16x128xf32>
    %262 = vector.extract_strided_slice %209 {offsets = [7, 0], sizes = [1, 128], strides = [1, 1]} : vector<9x128xf32> to vector<1x128xf32>
    %263 = vector.shape_cast %262 : vector<1x128xf32> to vector<128xf32>
    %264 = vector.shape_cast %263 : vector<128xf32> to vector<1x1x128xf32>
    %265 = vector.broadcast %264 : vector<1x1x128xf32> to vector<8x16x128xf32>
    %266 = arith.mulf %261, %265 : vector<8x16x128xf32>
    %267 = arith.addf %260, %266 : vector<8x16x128xf32>
    %268 = vector.extract_strided_slice %253 {offsets = [0, 11, 0], sizes = [8, 16, 128], strides = [1, 1, 1]} : vector<8x32x128xf32> to vector<8x16x128xf32>
    %269 = vector.extract_strided_slice %209 {offsets = [8, 0], sizes = [1, 128], strides = [1, 1]} : vector<9x128xf32> to vector<1x128xf32>
    %270 = vector.shape_cast %269 : vector<1x128xf32> to vector<128xf32>
    %271 = vector.shape_cast %270 : vector<128xf32> to vector<1x1x128xf32>
    %272 = vector.broadcast %271 : vector<1x1x128xf32> to vector<8x16x128xf32>
    %273 = arith.mulf %268, %272 : vector<8x16x128xf32>
    %274 = arith.addf %267, %273 : vector<8x16x128xf32>
    %275 = vector.shape_cast %274 : vector<8x16x128xf32> to vector<128x128xf32>
    %276 = arith.truncf %275 : vector<128x128xf32> to vector<128x128xbf16>
    %c2_54 = arith.constant 2 : index
    %c0_55 = arith.constant 0 : index
    %c0_56 = arith.constant 0 : index
    %277 = vector.load %arg4[%c2_54, %c0_55, %c0_56] : memref<3x128x128xbf16, #tpu.memory_space<vmem>>, vector<1x128x128xbf16>
    %278 = vector.shape_cast %277 : vector<1x128x128xbf16> to vector<128x128xbf16>
    %cst_57 = arith.constant dense<0.000000e+00> : vector<128x128xf32>
    %279 = tpu.matmul %276, %278, %cst_57 {dimension_numbers = #tpu.dot_dimension_numbers<[1], [0], [0], [1], [0, 0, 1, 1], [], []>} : vector<128x128xbf16>, vector<128x128xbf16>, vector<128x128xf32> -> vector<128x128xf32>
    %c2_58 = arith.constant 2 : index
    %c0_59 = arith.constant 0 : index
    %c0_60 = arith.constant 0 : index
    %280 = vector.load %arg5[%c2_58, %c0_59, %c0_60] : memref<3x1x128xf32, #tpu.memory_space<vmem>>, vector<1x1x128xf32>
    %281 = vector.shape_cast %280 : vector<1x1x128xf32> to vector<1x128xf32>
    %282 = vector.broadcast %281 : vector<1x128xf32> to vector<128x128xf32>
    %283 = arith.addf %279, %282 : vector<128x128xf32>
    %cst_61 = arith.constant 0.000000e+00 : f32
    %284 = vector.broadcast %cst_61 : f32 to vector<128x128xf32>
    %285 = arith.maximumf %283, %284 : vector<128x128xf32>
    %286 = arith.truncf %285 : vector<128x128xf32> to vector<128x128xbf16>
    %c2_62 = arith.constant 2 : index
    %c0_63 = arith.constant 0 : index
    %c0_64 = arith.constant 0 : index
    %287 = vector.load %arg8[%c2_62, %c0_63, %c0_64] : memref<4x128x128xbf16, #tpu.memory_space<vmem>>, vector<1x128x128xbf16>
    %288 = vector.shape_cast %287 : vector<1x128x128xbf16> to vector<128x128xbf16>
    %cst_65 = arith.constant dense<0.000000e+00> : vector<128x128xf32>
    %289 = tpu.matmul %286, %288, %cst_65 {dimension_numbers = #tpu.dot_dimension_numbers<[1], [0], [0], [1], [0, 0, 1, 1], [], []>} : vector<128x128xbf16>, vector<128x128xbf16>, vector<128x128xf32> -> vector<128x128xf32>
    %290 = arith.addf %207, %289 : vector<128x128xf32>
    %c0_66 = arith.constant 0 : index
    %c0_67 = arith.constant 0 : index
    %c0_68 = arith.constant 0 : index
    %291 = vector.load %arg9[%c0_66, %c0_67, %c0_68] : memref<1x1x128xf32, #tpu.memory_space<vmem>>, vector<1x1x128xf32>
    %292 = vector.shape_cast %291 : vector<1x1x128xf32> to vector<1x128xf32>
    %293 = vector.broadcast %292 : vector<1x128xf32> to vector<128x128xf32>
    %294 = arith.addf %290, %293 : vector<128x128xf32>
    %c0_69 = arith.constant 0 : index
    %c0_70 = arith.constant 0 : index
    %295 = vector.load %arg10[%c0_69, %c0_70] : memref<1x128xf32, #tpu.memory_space<vmem>>, vector<1x128xf32>
    %296 = vector.broadcast %295 : vector<1x128xf32> to vector<128x128xf32>
    %297 = arith.addf %294, %296 : vector<128x128xf32>
    %cst_71 = arith.constant 0.000000e+00 : f32
    %298 = vector.broadcast %cst_71 : f32 to vector<128x128xf32>
    %299 = arith.maximumf %297, %298 : vector<128x128xf32>
    %300 = vector.shape_cast %299 : vector<128x128xf32> to vector<8x16x128xf32>
    %c0_72 = arith.constant 0 : index
    %c0_73 = arith.constant 0 : index
    %c0_74 = arith.constant 0 : index
    %c0_75 = arith.constant 0 : index
    %301 = vector.load %arg11[%c0_72, %c0_73, %c0_74, %c0_75] : memref<1x8x16x128xf32, #tpu.memory_space<vmem>>, vector<1x8x16x128xf32>
    %302 = vector.shape_cast %301 : vector<1x8x16x128xf32> to vector<8x16x128xf32>
    %303 = vector.shape_cast %300 : vector<8x16x128xf32> to vector<1x8x16x128xf32>
    tpu.vector_store %arg11[%c0_72, %c0_73, %c0_74, %c0_75], %303 {strides = array<i32>} : memref<1x8x16x128xf32, #tpu.memory_space<vmem>>, vector<1x8x16x128xf32>,
    return
  }
  func.func @transform_1(%arg0: i32, %arg1: i32) -> (i32, i32, i32) {
    %c0_i32 = arith.constant 0 : i32
    %c0_i32_0 = arith.constant 0 : i32
    %c0_i32_1 = arith.constant 0 : i32
    %c0_i32_2 = arith.constant 0 : i32
    return %c0_i32, %c0_i32_0, %c0_i32_1 : i32, i32, i32
  }
  func.func @transform_2(%arg0: i32, %arg1: i32) -> (i32, i32, i32) {
    %c0_i32 = arith.constant 0 : i32
    %c0_i32_0 = arith.constant 0 : i32
    %c0_i32_1 = arith.constant 0 : i32
    %c0_i32_2 = arith.constant 0 : i32
    return %c0_i32, %c0_i32_0, %c0_i32_1 : i32, i32, i32
  }
  func.func @transform_3(%arg0: i32, %arg1: i32) -> (i32, i32, i32) {
    %c0_i32 = arith.constant 0 : i32
    %c0_i32_0 = arith.constant 0 : i32
    %c0_i32_1 = arith.constant 0 : i32
    %c0_i32_2 = arith.constant 0 : i32
    return %c0_i32, %c0_i32_0, %c0_i32_1 : i32, i32, i32
  }
  func.func @transform_4(%arg0: i32, %arg1: i32) -> (i32, i32) {
    %c0_i32 = arith.constant 0 : i32
    %c0_i32_0 = arith.constant 0 : i32
    %c0_i32_1 = arith.constant 0 : i32
    return %c0_i32, %c0_i32_0 : i32, i32
  }
  func.func @transform_5(%arg0: i32, %arg1: i32) -> (i32, i32) {
    %c0_i32 = arith.constant 0 : i32
    %c0_i32_0 = arith.constant 0 : i32
    %c0_i32_1 = arith.constant 0 : i32
    return %c0_i32, %c0_i32_0 : i32, i32
  }
  func.func @transform_6(%arg0: i32, %arg1: i32) -> (i32, i32, i32) {
    %c0_i32 = arith.constant 0 : i32
    %c0_i32_0 = arith.constant 0 : i32
    %c0_i32_1 = arith.constant 0 : i32
    %c0_i32_2 = arith.constant 0 : i32
    return %c0_i32, %c0_i32_0, %c0_i32_1 : i32, i32, i32
  }
  func.func @transform_7(%arg0: i32, %arg1: i32) -> (i32, i32, i32) {
    %c0_i32 = arith.constant 0 : i32
    %c0_i32_0 = arith.constant 0 : i32
    %c0_i32_1 = arith.constant 0 : i32
    return %arg0, %c0_i32, %c0_i32_0 : i32, i32, i32
  }
  func.func @transform_8(%arg0: i32, %arg1: i32) -> (i32, i32) {
    %c0_i32 = arith.constant 0 : i32
    %c0_i32_0 = arith.constant 0 : i32
    %c0_i32_1 = arith.constant 0 : i32
    return %c0_i32, %c0_i32_0 : i32, i32
  }
  func.func @transform_9(%arg0: i32, %arg1: i32) -> (i32, i32, i32, i32) {
    %c0_i32 = arith.constant 0 : i32
    %c0_i32_0 = arith.constant 0 : i32
    %c0_i32_1 = arith.constant 0 : i32
    return %arg0, %arg1, %c0_i32, %c0_i32_0 : i32, i32, i32, i32
  }
}

</mosaic_0001>

<llo_original>
// kernel: tpu_custom_call.1
$region0: #{tpu_custom_call.1}
  #allocation0 [shape = 'u32[]', space=smem, size = 0x4, offset = 0x4, fixed_abs, tag = 'smem constant byte address 0x4 - core index']
  #allocation1 [shape = 'u32[144,128]{1,0:T(1,128)}', space=vmem, size = 0x12000, scoped, tag = 'internal scratch']
  #allocation2 [shape = 'bf16[2,14,32,128]{3,2,1,0:T(16,128)(2,1)}', space=vmem, size = 0x38000, scoped, tag = 'scratch operand']
  #allocation3 [shape = 's32[2]{0}', space=sflag, size = 0x8, scoped, tag = 'scratch operand']
  #allocation10 [shape = 's32[]', space=sflag, size = 0x4, offset = 0, fixed_abs, tag = 'sflag constant byte address 0x0 - dummy sync flag']
  #allocation11 [shape = 's32[]', space=sflag, size = 0x4, offset = 0, fixed_abs, tag = 'sflag constant byte address 0x0 - dummy sync flag']
  #allocation12 [shape = 'u32[]', space=smem, size = 0x4, offset = 0x44, fixed_abs, tag = 'smem constant byte address 0x44 - assertion arg 0']
  #allocation13 [shape = 'u32[]', space=smem, size = 0x4, offset = 0x48, fixed_abs, tag = 'smem constant byte address 0x48 - assertion arg 1']
  #allocation14 [shape = 's32[]', space=sflag, size = 0x4, offset = 0, fixed_abs, tag = 'sflag constant byte address 0x0 - dummy sync flag']
  #allocation15 [shape = 's32[]', space=sflag, size = 0x4, offset = 0, fixed_abs, tag = 'sflag constant byte address 0x0 - dummy sync flag']
  %s0 = inlined_call_operand.hbm [shape: bf16[2,22,32,128], index: 0, kind: input, shape index: {}]
  %s1 = inlined_call_operand.vmem [shape: f32[3,9,128], index: 1, kind: input, shape index: {}]
  %s2 = inlined_call_operand.hbm [shape: bf16[3,128,128], index: 2, kind: input, shape index: {}]
  %s3 = inlined_call_operand.vmem [shape: f32[3,1,128], index: 3, kind: input, shape index: {}]
  %s4 = inlined_call_operand.vmem [shape: bf16[128,128], index: 4, kind: input, shape index: {}]
  %s5 = inlined_call_operand.vmem [shape: f32[1,128], index: 5, kind: input, shape index: {}]
  %s6 = inlined_call_operand.hbm [shape: bf16[4,128,128], index: 6, kind: input, shape index: {}]
  %s7 = inlined_call_operand.vmem [shape: f32[2,1,128], index: 7, kind: input, shape index: {}]
  %s8 = inlined_call_operand.vmem [shape: f32[1,128], index: 8, kind: input, shape index: {}]
  %s9 = inlined_call_operand.hbm [shape: f32[2,16,16,128], index: 9, kind: output, shape index: {}]
  %s10 = sld [smem:[#allocation0]]
  $region89: #{tpu_custom_call.1} parent=0
    _
  %s12 = ssub.s32 1, %s10
  %s13 = scalar_select 0, %s12, %s10
  $region1: #{tpu_custom_call.1} parent=0
    #allocation4 [shape = 'u8[98304]{0}', space=vmem, size = 0x18000, scoped, tag = 'input window, operand 2, single buffered']
    #allocation5 [shape = 's32[2]{0}', space=sflag, size = 0x8, scoped, tag = 'scoped memory for tpu_custom_call.1']
    #allocation6 [shape = 's32[2]{0}', space=sflag, size = 0x8, scoped, tag = 'scoped memory for tpu_custom_call.1']
    #allocation7 [shape = 'u8[131072]{0}', space=vmem, size = 0x20000, scoped, tag = 'input window, operand 6, single buffered']
    #allocation8 [shape = 's32[1]{0}', space=sflag, size = 0x4, scoped, tag = 'scoped memory for tpu_custom_call.1']
    #allocation9 [shape = 'u8[131072]{0}', space=vmem, size = 0x20000, scoped, tag = 'output window, operand 0']
    %14 = vsyncpa [#allocation5], 0
    %15 = vsyncpa [#allocation8], 0
    %16 = vsyncpa [#allocation6], 0
    %s17 = scalar_lea.sflag [#allocation6], 1
    %18 = vsyncpa %s17, 0
    loop: start=0, step=1, limit=6
    $region2: #{tpu_custom_call.1} parent=1 // loop_pre_header
      _
    $region3: #{tpu_custom_call.1} parent=1 // loop_header
      %s20 = sphi 0, %s24
      %p21 = scmp.ge.s32.totalorder %s20, 6
      %s27 = sphi 0, %s39
      %s28 = sphi 0, %s35
      %s29 = sphi 0, %s27
      %s30 = sphi 0, %s28
      %s31 = sphi 0, %s29
      %s32 = sphi 0, %s30
      %s40 = sphi 0, %s40
      %s42 = sphi 0, %s40
      %s43 = sphi 0, %s42
      %s57 = sphi 0, %s43
      %s61 = sphi 0, %s61
      %s63 = sphi 0, %s61
      %s64 = sphi 0, %s63
      %s78 = sphi 0, %s64
      %s82 = sphi 0, %s82
      %s84 = sphi 0, %s82
      %s85 = sphi 0, %s84
      %s99 = sphi 0, %s85
      %s103 = sphi 0, %s103
      %s105 = sphi 0, %s103
      %s106 = sphi 0, %s105
      %s120 = sphi 0, %s106
      %s124 = sphi 0, %s124
      %s126 = sphi 0, %s124
      %s127 = sphi 0, %s126
      %s141 = sphi 0, %s127
      %s145 = sphi 0, %s145
      %s147 = sphi 0, %s145
      %s148 = sphi 0, %s147
      %s162 = sphi 0, %s148
      %s168 = sphi 0, %s170
      %s171 = sphi 0, %s168
      %s172 = sphi 0, %s171
      %s188 = sphi 0, %s172
      %s192 = sphi 0, %s192
      %s194 = sphi 0, %s192
      %s195 = sphi 0, %s194
      %s209 = sphi 0, %s195
      %s217 = sphi 0, %s219
      %s220 = sphi 0, %s217
      %s221 = sphi 0, %s220
      %s237 = sphi 0, %s221
    $region4: #{tpu_custom_call.1} parent=1 // loop_header_branch
      %23 = sbr.rel (%p21) target = $region8
    $region5: #{tpu_custom_call.1} parent=1 // loop_body
      %s25 = ssub.s32 %s20, 1
      %s26 = ssub.s32 %s20, 2
      %s33 = sadd.s32 1, %s28
      %p34 = scmp.ge.s32.totalorder %s33, 2
      %s35 = scalar_select %p34, 0, %s33
      %s36 = sadd.s32 1, %s27
      %s37 = scalar_select %p34, %s36, %s27
      %p38 = scmp.ge.s32.totalorder %s37, 2
      %s39 = scalar_select %p38, 0, %s37
      %s41 = sadd.s32 %s40, 1
      %p44 = scmp.eq.s32.totalorder %s20, 3
      %p45 = scmp.ne.s32.totalorder %s40, %s42
      %p46 = scmp.eq.s32.totalorder %s20, 0
      %p47 = por %p45, %p46
      %p48 = scmp.ne.s32.totalorder %s40, %s42
      %p49 = scmp.eq.s32.totalorder %s25, 3
      %p50 = por %p48, %p49
      %p51 = scmp.ne.s32.totalorder %s42, %s43
      %p52 = scmp.eq.s32.totalorder %s25, 0
      %p53 = por %p51, %p52
      %p54 = scmp.ne.s32.totalorder %s42, %s43
      %p55 = scmp.eq.s32.totalorder %s26, 3
      %p56 = por %p54, %p55
      %p58 = scmp.ne.s32.totalorder %s43, %s57
      %p59 = scmp.eq.s32.totalorder %s26, 0
      %p60 = por %p58, %p59
      %s62 = sadd.s32 %s61, 1
      %p65 = scmp.eq.s32.totalorder %s20, 3
      %p66 = scmp.ne.s32.totalorder %s61, %s63
      %p67 = scmp.eq.s32.totalorder %s20, 0
      %p68 = por %p66, %p67
      %p69 = scmp.ne.s32.totalorder %s61, %s63
      %p70 = scmp.eq.s32.totalorder %s25, 3
      %p71 = por %p69, %p70
      %p72 = scmp.ne.s32.totalorder %s63, %s64
      %p73 = scmp.eq.s32.totalorder %s25, 0
      %p74 = por %p72, %p73
      %p75 = scmp.ne.s32.totalorder %s63, %s64
      %p76 = scmp.eq.s32.totalorder %s26, 3
      %p77 = por %p75, %p76
      %p79 = scmp.ne.s32.totalorder %s64, %s78
      %p80 = scmp.eq.s32.totalorder %s26, 0
      %p81 = por %p79, %p80
      %s83 = sadd.s32 %s82, 1
      %p86 = scmp.eq.s32.totalorder %s20, 3
      %p87 = scmp.ne.s32.totalorder %s82, %s84
      %p88 = scmp.eq.s32.totalorder %s20, 0
      %p89 = por %p87, %p88
      %p90 = scmp.ne.s32.totalorder %s82, %s84
      %p91 = scmp.eq.s32.totalorder %s25, 3
      %p92 = por %p90, %p91
      %p93 = scmp.ne.s32.totalorder %s84, %s85
      %p94 = scmp.eq.s32.totalorder %s25, 0
      %p95 = por %p93, %p94
      %p96 = scmp.ne.s32.totalorder %s84, %s85
      %p97 = scmp.eq.s32.totalorder %s26, 3
      %p98 = por %p96, %p97
      %p100 = scmp.ne.s32.totalorder %s85, %s99
      %p101 = scmp.eq.s32.totalorder %s26, 0
      %p102 = por %p100, %p101
      %s104 = sadd.s32 %s103, 1
      %p107 = scmp.eq.s32.totalorder %s20, 3
      %p108 = scmp.ne.s32.totalorder %s103, %s105
      %p109 = scmp.eq.s32.totalorder %s20, 0
      %p110 = por %p108, %p109
      %p111 = scmp.ne.s32.totalorder %s103, %s105
      %p112 = scmp.eq.s32.totalorder %s25, 3
      %p113 = por %p111, %p112
      %p114 = scmp.ne.s32.totalorder %s105, %s106
      %p115 = scmp.eq.s32.totalorder %s25, 0
      %p116 = por %p114, %p115
      %p117 = scmp.ne.s32.totalorder %s105, %s106
      %p118 = scmp.eq.s32.totalorder %s26, 3
      %p119 = por %p117, %p118
      %p121 = scmp.ne.s32.totalorder %s106, %s120
      %p122 = scmp.eq.s32.totalorder %s26, 0
      %p123 = por %p121, %p122
      %s125 = sadd.s32 %s124, 1
      %p128 = scmp.eq.s32.totalorder %s20, 3
      %p129 = scmp.ne.s32.totalorder %s124, %s126
      %p130 = scmp.eq.s32.totalorder %s20, 0
      %p131 = por %p129, %p130
      %p132 = scmp.ne.s32.totalorder %s124, %s126
      %p133 = scmp.eq.s32.totalorder %s25, 3
      %p134 = por %p132, %p133
      %p135 = scmp.ne.s32.totalorder %s126, %s127
      %p136 = scmp.eq.s32.totalorder %s25, 0
      %p137 = por %p135, %p136
      %p138 = scmp.ne.s32.totalorder %s126, %s127
      %p139 = scmp.eq.s32.totalorder %s26, 3
      %p140 = por %p138, %p139
      %p142 = scmp.ne.s32.totalorder %s127, %s141
      %p143 = scmp.eq.s32.totalorder %s26, 0
      %p144 = por %p142, %p143
      %s146 = sadd.s32 %s145, 1
      %p149 = scmp.eq.s32.totalorder %s20, 3
      %p150 = scmp.ne.s32.totalorder %s145, %s147
      %p151 = scmp.eq.s32.totalorder %s20, 0
      %p152 = por %p150, %p151
      %p153 = scmp.ne.s32.totalorder %s145, %s147
      %p154 = scmp.eq.s32.totalorder %s25, 3
      %p155 = por %p153, %p154
      %p156 = scmp.ne.s32.totalorder %s147, %s148
      %p157 = scmp.eq.s32.totalorder %s25, 0
      %p158 = por %p156, %p157
      %p159 = scmp.ne.s32.totalorder %s147, %s148
      %p160 = scmp.eq.s32.totalorder %s26, 3
      %p161 = por %p159, %p160
      %p163 = scmp.ne.s32.totalorder %s148, %s162
      %p164 = scmp.eq.s32.totalorder %s26, 0
      %p165 = por %p163, %p164
      %s166 = ssub.s32 %s27, %s39
      %p167 = scmp.eq.s32.totalorder %s166, 0
      %s169 = sadd.s32 %s168, 1
      %s170 = scalar_select %p167, %s168, %s169
      %p173 = pneg %p167
      %p174 = scmp.eq.s32.totalorder %s20, 3
      %p175 = por %p173, %p174
      %p176 = scmp.ne.s32.totalorder %s168, %s171
      %p177 = scmp.eq.s32.totalorder %s20, 0
      %p178 = por %p176, %p177
      %p179 = scmp.ne.s32.totalorder %s168, %s171
      %p180 = scmp.eq.s32.totalorder %s25, 3
      %p181 = por %p179, %p180
      %p182 = scmp.ne.s32.totalorder %s171, %s172
      %p183 = scmp.eq.s32.totalorder %s25, 0
      %p184 = por %p182, %p183
      %p185 = scmp.ne.s32.totalorder %s171, %s172
      %p186 = scmp.eq.s32.totalorder %s26, 3
      %p187 = por %p185, %p186
      %p189 = scmp.ne.s32.totalorder %s172, %s188
      %p190 = scmp.eq.s32.totalorder %s26, 0
      %p191 = por %p189, %p190
      %s193 = sadd.s32 %s192, 1
      %p196 = scmp.eq.s32.totalorder %s20, 3
      %p197 = scmp.ne.s32.totalorder %s192, %s194
      %p198 = scmp.eq.s32.totalorder %s20, 0
      %p199 = por %p197, %p198
      %p200 = scmp.ne.s32.totalorder %s192, %s194
      %p201 = scmp.eq.s32.totalorder %s25, 3
      %p202 = por %p200, %p201
      %p203 = scmp.ne.s32.totalorder %s194, %s195
      %p204 = scmp.eq.s32.totalorder %s25, 0
      %p205 = por %p203, %p204
      %p206 = scmp.ne.s32.totalorder %s194, %s195
      %p207 = scmp.eq.s32.totalorder %s26, 3
      %p208 = por %p206, %p207
      %p210 = scmp.ne.s32.totalorder %s195, %s209
      %p211 = scmp.eq.s32.totalorder %s26, 0
      %p212 = por %p210, %p211
      %s213 = ssub.s32 %s27, %s39
      %s214 = ssub.s32 %s28, %s35
      %s215 = sor.u32 %s213, %s214
      %p216 = scmp.eq.s32.totalorder %s215, 0
      %s218 = sadd.s32 %s217, 1
      %s219 = scalar_select %p216, %s217, %s218
      %p222 = pneg %p216
      %p223 = scmp.eq.s32.totalorder %s20, 3
      %p224 = por %p222, %p223
      %p225 = scmp.ne.s32.totalorder %s217, %s220
      %p226 = scmp.eq.s32.totalorder %s20, 0
      %p227 = por %p225, %p226
      %p228 = scmp.ne.s32.totalorder %s217, %s220
      %p229 = scmp.eq.s32.totalorder %s25, 3
      %p230 = por %p228, %p229
      %p231 = scmp.ne.s32.totalorder %s220, %s221
      %p232 = scmp.eq.s32.totalorder %s25, 0
      %p233 = por %p231, %p232
      %p234 = scmp.ne.s32.totalorder %s220, %s221
      %p235 = scmp.eq.s32.totalorder %s26, 3
      %p236 = por %p234, %p235
      %p238 = scmp.ne.s32.totalorder %s221, %s237
      %p239 = scmp.eq.s32.totalorder %s26, 0
      %p240 = por %p238, %p239
      %p241 = scmp.le.s32.totalorder 1, %s20
      %p242 = scmp.lt.s32.totalorder %s20, 5
      %p243 = pnand %p241, %p242
      %p244 = pneg %p243
      // Predicated region
      $region9: #{tpu_custom_call.1} parent=5 // pred_check
        _
      $region10: #{tpu_custom_call.1} parent=5 // pred_check_branch
        %246 = sbr.rel (%p243) target = $region12
      $region11: #{tpu_custom_call.1} parent=5 // pred_region
        %s247 = ssub.s32 %s20, 1
        // Predicated region
        $region13: #{tpu_custom_call.1} parent=11 // pred_check
          %p248 = pneg %p53
        $region14: #{tpu_custom_call.1} parent=11 // pred_check_branch
          %250 = sbr.rel (%p248) target = $region16
        $region15: #{tpu_custom_call.1} parent=11 // pred_region
          _
        $region16: #{tpu_custom_call.1} parent=11 // pred_fallthru
          _
        // Predicated region
        $region17: #{tpu_custom_call.1} parent=11 // pred_check
          %p251 = pneg %p74
        $region18: #{tpu_custom_call.1} parent=11 // pred_check_branch
          %253 = sbr.rel (%p251) target = $region20
        $region19: #{tpu_custom_call.1} parent=11 // pred_region
          %s255 = ssub.s32 3072, 3072
          %256 = vsyncadd [#allocation5], %s255
          %s257 = sshll.u32 [#allocation4], 4
          %s258 = int_to_ptr.vmem [resolvable:$true] %s257
          %263 = dma.hbm_to_vmem [thread:$0]  %s2, 3072, %s258, [#allocation5], 64, 64, 4
        $region20: #{tpu_custom_call.1} parent=11 // pred_fallthru
          _
        // Predicated region
        $region21: #{tpu_custom_call.1} parent=11 // pred_check
          %p264 = pneg %p95
        $region22: #{tpu_custom_call.1} parent=11 // pred_check_branch
          %266 = sbr.rel (%p264) target = $region24
        $region23: #{tpu_custom_call.1} parent=11 // pred_region
          _
        $region24: #{tpu_custom_call.1} parent=11 // pred_fallthru
          _
        // Predicated region
        $region25: #{tpu_custom_call.1} parent=11 // pred_check
          %p267 = pneg %p116
        $region26: #{tpu_custom_call.1} parent=11 // pred_check_branch
          %269 = sbr.rel (%p267) target = $region28
        $region27: #{tpu_custom_call.1} parent=11 // pred_region
          _
        $region28: #{tpu_custom_call.1} parent=11 // pred_fallthru
          _
        // Predicated region
        $region29: #{tpu_custom_call.1} parent=11 // pred_check
          %p270 = pneg %p137
        $region30: #{tpu_custom_call.1} parent=11 // pred_check_branch
          %272 = sbr.rel (%p270) target = $region32
        $region31: #{tpu_custom_call.1} parent=11 // pred_region
          _
        $region32: #{tpu_custom_call.1} parent=11 // pred_fallthru
          _
        // Predicated region
        $region33: #{tpu_custom_call.1} parent=11 // pred_check
          %p273 = pneg %p158
        $region34: #{tpu_custom_call.1} parent=11 // pred_check_branch
          %275 = sbr.rel (%p273) target = $region36
        $region35: #{tpu_custom_call.1} parent=11 // pred_region
          %s277 = ssub.s32 4096, 4096
          %278 = vsyncadd [#allocation8], %s277
          %s279 = sshll.u32 [#allocation7], 4
          %s280 = int_to_ptr.vmem [resolvable:$true] %s279
          %285 = dma.hbm_to_vmem [thread:$0]  %s6, 4096, %s280, [#allocation8], 64, 64, 4
        $region36: #{tpu_custom_call.1} parent=11 // pred_fallthru
          _
        // Predicated region
        $region37: #{tpu_custom_call.1} parent=11 // pred_check
          %p286 = pneg %p205
        $region38: #{tpu_custom_call.1} parent=11 // pred_check_branch
          %288 = sbr.rel (%p286) target = $region40
        $region39: #{tpu_custom_call.1} parent=11 // pred_region
          _
        $region40: #{tpu_custom_call.1} parent=11 // pred_fallthru
          _
      $region12: #{tpu_custom_call.1} parent=5 // pred_fallthru
        _
      %p289 = scmp.lt.s32.totalorder %s20, 4
      // Predicated region
      $region41: #{tpu_custom_call.1} parent=5 // pred_check
        %p290 = pneg %p289
      $region42: #{tpu_custom_call.1} parent=5 // pred_check_branch
        %292 = sbr.rel (%p290) target = $region44
      $region43: #{tpu_custom_call.1} parent=5 // pred_region
        // Predicated region
        $region45: #{tpu_custom_call.1} parent=43 // pred_check
          %p293 = pneg %p178
        $region46: #{tpu_custom_call.1} parent=43 // pred_check_branch
          %295 = sbr.rel (%p293) target = $region48
        $region47: #{tpu_custom_call.1} parent=43 // pred_region
          %p296 = scmp.lt.s32.totalorder %s27, 1
          %s297 = scalar_select %p296, %s27, 1
          %s298 = scalar_lea.vmem %s7, %s297
        $region48: #{tpu_custom_call.1} parent=43 // pred_fallthru
          _
      $region44: #{tpu_custom_call.1} parent=5 // pred_fallthru
        _
      %p299 = scmp.le.s32.totalorder 1, %s20
      %p300 = scmp.lt.s32.totalorder %s20, 5
      %p301 = pnand %p299, %p300
      %p302 = pneg %p301
      // Predicated region
      $region49: #{tpu_custom_call.1} parent=5 // pred_check
        _
      $region50: #{tpu_custom_call.1} parent=5 // pred_check_branch
        %304 = sbr.rel (%p301) target = $region52
      $region51: #{tpu_custom_call.1} parent=5 // pred_region
        %s305 = ssub.s32 %s20, 1
        // Predicated region
        $region53: #{tpu_custom_call.1} parent=51 // pred_check
          %p306 = pneg %p74
        $region54: #{tpu_custom_call.1} parent=51 // pred_check_branch
          %308 = sbr.rel (%p306) target = $region56
        $region55: #{tpu_custom_call.1} parent=51 // pred_region
          %309 = dma.done [#allocation5], 3072
        $region56: #{tpu_custom_call.1} parent=51 // pred_fallthru
          _
        // Predicated region
        $region57: #{tpu_custom_call.1} parent=51 // pred_check
          %p310 = pneg %p158
        $region58: #{tpu_custom_call.1} parent=51 // pred_check_branch
          %312 = sbr.rel (%p310) target = $region60
        $region59: #{tpu_custom_call.1} parent=51 // pred_region
          %313 = dma.done [#allocation8], 4096
        $region60: #{tpu_custom_call.1} parent=51 // pred_fallthru
          _
        %p314 = pneg %p53
        %p315 = pneg %p50
        %p316 = pneg %p74
        %p317 = pneg %p71
        %p318 = pneg %p95
        %p319 = pneg %p92
        %p320 = pneg %p116
        %p321 = pneg %p113
        %p322 = pneg %p137
        %p323 = pneg %p134
        %p324 = pneg %p158
        %p325 = pneg %p155
        %p326 = scmp.lt.s32.totalorder %s29, 1
        %s327 = scalar_select %p326, %s29, 1
        %s328 = scalar_lea.vmem %s7, %s327
        %p329 = pneg %p184
        %p330 = pneg %p181
        %p331 = pneg %p205
        %p332 = pneg %p202
        %p333 = pneg %p233
        %p334 = pneg %p230
        %s335 = sand.u32 %s220, 1
        %s336 = scalar_lea.sflag [#allocation6], %s335
        %s337 = sand.u32 %s220, 1
        %s338 = smul.addr %s337, 128
        %s339 = scalar_lea.vmem [#allocation9], %s338
        %p340 = scmp.lt.s32.totalorder %s29, 1
        %s341 = scalar_select %p340, %s29, 1
        %s342 = scalar_lea.vmem %s7, %s341
        %s343 = smul.u32 8, %s30
        %p345 = scmp.eq.s32.totalorder %s30, 0
        // Predicated region
        $region61: #{tpu_custom_call.1} parent=51 // pred_check
          %p346 = pneg %p345
        $region62: #{tpu_custom_call.1} parent=51 // pred_check_branch
          %348 = sbr.rel (%p346) target = $region64
        $region63: #{tpu_custom_call.1} parent=51 // pred_region
          %s349 = smul.u32 %s29, 88
          %s350 = smul.addr %s349, 64
          %s351 = scalar_lea.hbm %s0, %s350
          // Predicated region
          $region65: #{tpu_custom_call.1} parent=63 // pred_check
            _
          $region66: #{tpu_custom_call.1} parent=63 // pred_check_branch
            %353 = sbr.rel target = $region68
          $region67: #{tpu_custom_call.1} parent=63 // pred_region
            %354 = sst [smem:[#allocation12]] [#allocation11]
            %355 = sst [smem:[#allocation13]] [#allocation10]
          $region68: #{tpu_custom_call.1} parent=63 // pred_fallthru
            _
          %357 = shalt.err (0)
          %s359 = sshll.u32 [#allocation2], 4
          %s360 = int_to_ptr.vmem [resolvable:$true] %s359
          %362 = dma.hbm_to_vmem [thread:$0]  %s351, 3584, %s360, [#allocation3]
        $region64: #{tpu_custom_call.1} parent=51 // pred_fallthru
          _
        %p363 = scmp.lt.s32.totalorder %s30, 0
        %s364 = ssub.s32 0, %s30
        %s365 = scalar_select %p363, %s364, %s30
        %s366 = sand.u32 %s365, 1
        %s367 = ssub.s32 0, %s366
        %s368 = scalar_select %p363, %s367, %s366
        %p369 = scmp.ne.s32.totalorder %s368, 0
        %p370 = scmp.lt.s32.totalorder %s368, 0
        %p371 = pnand %p370, %p369
        %p372 = pneg %p371
        %s373 = sadd.s32 %s368, 2
        %s374 = scalar_select %p372, %s373, %s368
        %s375 = smul.u32 %s374, 28
        %s376 = smul.addr %s375, 8
        %s377 = scalar_lea.vmem [#allocation2], %s376
        %s378 = scalar_lea.sflag [#allocation3], %s374
        %s379 = smul.u32 4, 14
        %s380 = smul.u32 %s379, 4
        %s381 = smul.u32 %s380, 1
        %s382 = sshll.u32 %s381, 4
        %383 = dma.done %s378, %s382
        %s384 = sadd.s32 %s30, 1
        %p385 = scmp.lt.s32.totalorder %s384, 2
        // Predicated region
        $region69: #{tpu_custom_call.1} parent=51 // pred_check
          %p386 = pneg %p385
        $region70: #{tpu_custom_call.1} parent=51 // pred_check_branch
          %388 = sbr.rel (%p386) target = $region72
        $region71: #{tpu_custom_call.1} parent=51 // pred_region
          %s389 = ssub.s32 1, %s374
          %s390 = smul.u32 %s384, 8
          %s391 = smul.u32 %s390, 4
          %s392 = smul.u32 %s29, 88
          %s393 = sadd.s32 %s391, %s392
          %s394 = smul.addr %s393, 64
          %s395 = scalar_lea.hbm %s0, %s394
          %s396 = smul.u32 %s389, 28
          %s397 = smul.addr %s396, 8
          %s398 = scalar_lea.vmem [#allocation2], %s397
          %s399 = scalar_lea.sflag [#allocation3], %s389
          // Predicated region
          $region73: #{tpu_custom_call.1} parent=71 // pred_check
            _
          $region74: #{tpu_custom_call.1} parent=71 // pred_check_branch
            %401 = sbr.rel target = $region76
          $region75: #{tpu_custom_call.1} parent=71 // pred_region
            %402 = sst [smem:[#allocation12]] [#allocation15]
            %403 = sst [smem:[#allocation13]] [#allocation14]
          $region76: #{tpu_custom_call.1} parent=71 // pred_fallthru
            _
          %405 = shalt.err (0)
          %s407 = sshll.u32 %s398, 4
          %s408 = int_to_ptr.vmem [resolvable:$true] %s407
          %410 = dma.hbm_to_vmem [thread:$0]  %s395, 3584, %s408, %s399
        $region72: #{tpu_custom_call.1} parent=51 // pred_fallthru
          _
        %v411 = vld [vmem:[%s377] sm:$0xff]
        %v412 = vld [vmem:[%s377 + $0x8] sm:$0xff]
        %v413 = vld [vmem:[%s377 + $0x10] sm:$0xff]
        %v414 = vld [vmem:[%s377 + $0x18] sm:$0xff]
        %v415 = vld [vmem:[%s377 + $0x20] sm:$0xff]
        %v416 = vld [vmem:[%s377 + $0x28] sm:$0xff]
        %v417 = vld [vmem:[%s377 + $0x30] sm:$0xff]
        %v418 = vld [vmem:[%s377 + $0x38] sm:$0xff]
        %v419 = vld [vmem:[%s377 + $0x40] sm:$0xff]
        %v420 = vld [vmem:[%s377 + $0x48] sm:$0xff]
        %v421 = vld [vmem:[%s377 + $0x50] sm:$0xff]
        %v422 = vld [vmem:[%s377 + $0x58] sm:$0xff]
        %v423 = vld [vmem:[%s377 + $0x60] sm:$0xff]
        %v424 = vld [vmem:[%s377 + $0x68] sm:$0xff]
        %v425 = vld [vmem:[%s377 + $0x70] sm:$0xff]
        %v426 = vld [vmem:[%s377 + $0x78] sm:$0xff]
        %v427 = vld [vmem:[%s377 + $0x80] sm:$0xff]
        %v428 = vld [vmem:[%s377 + $0x88] sm:$0xff]
        %v429 = vld [vmem:[%s377 + $0x90] sm:$0xff]
        %v430 = vld [vmem:[%s377 + $0x98] sm:$0xff]
        %v431 = vld [vmem:[%s377 + $0xa0] sm:$0xff]
        %v432 = vld [vmem:[%s377 + $0xa8] sm:$0xff]
        %v433 = vld [vmem:[%s377 + $0xb0] sm:$0xff]
        %v434 = vld [vmem:[%s377 + $0xb8] sm:$0xff]
        %v435 = vld [vmem:[%s377 + $0xc0] sm:$0xff]
        %v436 = vld [vmem:[%s377 + $0xc8] sm:$0xff]
        %v437 = vld [vmem:[%s377 + $0xd0] sm:$0xff]
        %v438 = vld [vmem:[%s377 + $0xd8] sm:$0xff]
        %v439 = vunpack.c.l.bf16 %v411
        %v440 = vunpack.c.h.bf16 %v411
        %v441 = vunpack.c.l.bf16 %v412
        %v442 = vunpack.c.h.bf16 %v412
        %v443 = vunpack.c.l.bf16 %v413
        %v444 = vunpack.c.h.bf16 %v413
        %v445 = vunpack.c.l.bf16 %v414
        %v446 = vunpack.c.h.bf16 %v414
        %v447 = vunpack.c.l.bf16 %v415
        %v448 = vunpack.c.h.bf16 %v415
        %v449 = vunpack.c.l.bf16 %v416
        %v450 = vunpack.c.h.bf16 %v416
        %v451 = vunpack.c.l.bf16 %v417
        %v452 = vunpack.c.h.bf16 %v417
        %v453 = vunpack.c.l.bf16 %v418
        %v454 = vunpack.c.h.bf16 %v418
        %v455 = vunpack.c.l.bf16 %v419
        %v456 = vunpack.c.h.bf16 %v419
        %v457 = vunpack.c.l.bf16 %v420
        %v458 = vunpack.c.h.bf16 %v420
        %v459 = vunpack.c.l.bf16 %v421
        %v460 = vunpack.c.h.bf16 %v421
        %v461 = vunpack.c.l.bf16 %v422
        %v462 = vunpack.c.h.bf16 %v422
        %v463 = vunpack.c.l.bf16 %v423
        %v464 = vunpack.c.h.bf16 %v423
        %v465 = vunpack.c.l.bf16 %v424
        %v466 = vunpack.c.h.bf16 %v424
        %v467 = vunpack.c.l.bf16 %v425
        %v468 = vunpack.c.h.bf16 %v425
        %v469 = vunpack.c.l.bf16 %v426
        %v470 = vunpack.c.h.bf16 %v426
        %v471 = vunpack.c.l.bf16 %v427
        %v472 = vunpack.c.h.bf16 %v427
        %v473 = vunpack.c.l.bf16 %v428
        %v474 = vunpack.c.h.bf16 %v428
        %v475 = vunpack.c.l.bf16 %v429
        %v476 = vunpack.c.h.bf16 %v429
        %v477 = vunpack.c.l.bf16 %v430
        %v478 = vunpack.c.h.bf16 %v430
        %v479 = vunpack.c.l.bf16 %v431
        %v480 = vunpack.c.h.bf16 %v431
        %v481 = vunpack.c.l.bf16 %v432
        %v482 = vunpack.c.h.bf16 %v432
        %v483 = vunpack.c.l.bf16 %v433
        %v484 = vunpack.c.h.bf16 %v433
        %v485 = vunpack.c.l.bf16 %v434
        %v486 = vunpack.c.h.bf16 %v434
        %v487 = vunpack.c.l.bf16 %v435
        %v488 = vunpack.c.h.bf16 %v435
        %v489 = vunpack.c.l.bf16 %v436
        %v490 = vunpack.c.h.bf16 %v436
        %v491 = vunpack.c.l.bf16 %v437
        %v492 = vunpack.c.h.bf16 %v437
        %v493 = vunpack.c.l.bf16 %v438
        %v494 = vunpack.c.h.bf16 %v438
        %v495 = vpack.c.bf16 %v453, %v452
        %v496 = vpack.c.bf16 %v457, %v456
        %v497 = vpack.c.bf16 %v461, %v460
        %v498 = vpack.c.bf16 %v465, %v464
        %v499 = vpack.c.bf16 %v469, %v468
        %v500 = vpack.c.bf16 %v473, %v472
        %v501 = vpack.c.bf16 %v477, %v476
        %v502 = vpack.c.bf16 %v481, %v480
        %v503 = vld [vmem:[%s4] sm:$0xf]
        %v504 = vld [vmem:[%s4 + $0x4] sm:$0xf]
        %v505 = vld [vmem:[%s4 + $0x8] sm:$0xf]
        %v506 = vld [vmem:[%s4 + $0xc] sm:$0xf]
        %v507 = vld [vmem:[%s4 + $0x10] sm:$0xf]
        %v508 = vld [vmem:[%s4 + $0x14] sm:$0xf]
        %v509 = vld [vmem:[%s4 + $0x18] sm:$0xf]
        %v510 = vld [vmem:[%s4 + $0x1c] sm:$0xf]
        %v511 = vld [vmem:[%s4 + $0x20] sm:$0xf]
        %v512 = vld [vmem:[%s4 + $0x24] sm:$0xf]
        %v513 = vld [vmem:[%s4 + $0x28] sm:$0xf]
        %v514 = vld [vmem:[%s4 + $0x2c] sm:$0xf]
        %v515 = vld [vmem:[%s4 + $0x30] sm:$0xf]
        %v516 = vld [vmem:[%s4 + $0x34] sm:$0xf]
        %v517 = vld [vmem:[%s4 + $0x38] sm:$0xf]
        %v518 = vld [vmem:[%s4 + $0x3c] sm:$0xf]
        %v519 = vld [vmem:[%s5] sm:$0x1]
        %v521 = vlaneseq
        %v522 = vshrl.u32 %v521, 7
        %v523 = vsub.s32 0, %v522
        %v524 = vrot.slane %v519, %v523
        %v542 = vunpack.c.l.b16 %v503
        %v543 = vunpack.c.l.b16 %v504
        %v544 = vunpack.c.l.b16 %v505
        %v545 = vunpack.c.l.b16 %v506
        %v546 = vunpack.c.l.b16 %v507
        %v547 = vunpack.c.l.b16 %v508
        %v548 = vunpack.c.l.b16 %v509
        %v549 = vunpack.c.l.b16 %v510
        %v550 = vunpack.c.l.b16 %v511
        %v551 = vunpack.c.l.b16 %v512
        %v552 = vunpack.c.l.b16 %v513
        %v553 = vunpack.c.l.b16 %v514
        %v554 = vunpack.c.l.b16 %v515
        %v555 = vunpack.c.l.b16 %v516
        %v556 = vunpack.c.l.b16 %v517
        %v557 = vunpack.c.l.b16 %v518
        %v558 = vpack.c.b16 %v543, %v542
        %v559 = vpack.c.b16 %v545, %v544
        %v560 = vpack.c.b16 %v547, %v546
        %v561 = vpack.c.b16 %v549, %v548
        %v562 = vpack.c.b16 %v551, %v550
        %v563 = vpack.c.b16 %v553, %v552
        %v564 = vpack.c.b16 %v555, %v554
        %v565 = vpack.c.b16 %v557, %v556
        %574 = vmatprep.subr.bf16.mxu0 0
        %575 = vmatpush1.bf16.msra.mxu0 %v558
        %576 = vmatprep.subr.bf16.mxu0 0
        %577 = vmatpush1.bf16.msra.mxu0 %v559
        %578 = vmatprep.subr.bf16.mxu0 0
        %579 = vmatpush1.bf16.msra.mxu0 %v560
        %580 = vmatprep.subr.bf16.mxu0 0
        %581 = vmatpush1.bf16.msra.mxu0 %v561
        %582 = vmatprep.subr.bf16.mxu0 0
        %583 = vmatpush1.bf16.msra.mxu0 %v562
        %584 = vmatprep.subr.bf16.mxu0 0
        %585 = vmatpush1.bf16.msra.mxu0 %v563
        %586 = vmatprep.subr.bf16.mxu0 0
        %587 = vmatpush1.bf16.msra.mxu0 %v564
        %588 = vmatprep.subr.bf16.mxu0 0
        %589 = vmatpush1.bf16.msra.mxu0 %v565
        %590 = vmatprep.subr.bf16.mxu0 0
        %591 = vmatpush1.bf16.msra.mxu0 0
        %592 = vmatprep.subr.bf16.mxu0 0
        %593 = vmatpush1.bf16.msra.mxu0 0
        %594 = vmatprep.subr.bf16.mxu0 0
        %595 = vmatpush1.bf16.msra.mxu0 0
        %596 = vmatprep.subr.bf16.mxu0 0
        %597 = vmatpush1.bf16.msra.mxu0 0
        %598 = vmatprep.subr.bf16.mxu0 0
        %599 = vmatpush1.bf16.msra.mxu0 0
        %600 = vmatprep.subr.bf16.mxu0 0
        %601 = vmatpush1.bf16.msra.mxu0 0
        %602 = vmatprep.subr.bf16.mxu0 0
        %603 = vmatpush1.bf16.msra.mxu0 0
        %604 = vmatprep.subr.bf16.mxu0 0
        %605 = vmatpush1.bf16.msra.mxu0 0
        %606 = vmatprep.mubr.bf16.mxu0 0
        %607 = vmatmul.mubr.bf16.gmra.mrb[0].mxu0 %v495
        %v608 = vpop.f32.mrb[0].mxu0
        %v609 = vadd.f32 %v524, %v608
        %v610 = vpop.f32.mrb[0].mxu0
        %v611 = vpop.f32.mrb[0].mxu0
        %v612 = vadd.f32 %v524, %v611
        %v613 = vpop.f32.mrb[0].mxu0
        %614 = vmatprep.mubr.bf16.mxu0 0
        %615 = vmatmul.mubr.bf16.gmra.mrb[0].mxu0 %v496
        %v616 = vpop.f32.mrb[0].mxu0
        %v617 = vadd.f32 %v524, %v616
        %v618 = vpop.f32.mrb[0].mxu0
        %v619 = vpop.f32.mrb[0].mxu0
        %v620 = vadd.f32 %v524, %v619
        %v621 = vpop.f32.mrb[0].mxu0
        %622 = vmatprep.mubr.bf16.mxu0 0
        %623 = vmatmul.mubr.bf16.gmra.mrb[0].mxu0 %v497
        %v624 = vpop.f32.mrb[0].mxu0
        %v625 = vadd.f32 %v524, %v624
        %v626 = vpop.f32.mrb[0].mxu0
        %v627 = vpop.f32.mrb[0].mxu0
        %v628 = vadd.f32 %v524, %v627
        %v629 = vpop.f32.mrb[0].mxu0
        %630 = vmatprep.mubr.bf16.mxu0 0
        %631 = vmatmul.mubr.bf16.gmra.mrb[0].mxu0 %v498
        %v632 = vpop.f32.mrb[0].mxu0
        %v633 = vadd.f32 %v524, %v632
        %v634 = vpop.f32.mrb[0].mxu0
        %v635 = vpop.f32.mrb[0].mxu0
        %v636 = vadd.f32 %v524, %v635
        %v637 = vpop.f32.mrb[0].mxu0
        %638 = vmatprep.mubr.bf16.mxu0 0
        %639 = vmatmul.mubr.bf16.gmra.mrb[0].mxu0 %v499
        %v640 = vpop.f32.mrb[0].mxu0
        %v641 = vadd.f32 %v524, %v640
        %v642 = vpop.f32.mrb[0].mxu0
        %v643 = vpop.f32.mrb[0].mxu0
        %v644 = vadd.f32 %v524, %v643
        %v645 = vpop.f32.mrb[0].mxu0
        %646 = vmatprep.mubr.bf16.mxu0 0
        %647 = vmatmul.mubr.bf16.gmra.mrb[0].mxu0 %v500
        %v648 = vpop.f32.mrb[0].mxu0
        %v649 = vadd.f32 %v524, %v648
        %v650 = vpop.f32.mrb[0].mxu0
        %v651 = vpop.f32.mrb[0].mxu0
        %v652 = vadd.f32 %v524, %v651
        %v653 = vpop.f32.mrb[0].mxu0
        %654 = vmatprep.mubr.bf16.mxu0 0
        %655 = vmatmul.mubr.bf16.gmra.mrb[0].mxu0 %v501
        %v656 = vpop.f32.mrb[0].mxu0
        %v657 = vadd.f32 %v524, %v656
        %v658 = vpop.f32.mrb[0].mxu0
        %v659 = vpop.f32.mrb[0].mxu0
        %v660 = vadd.f32 %v524, %v659
        %v661 = vpop.f32.mrb[0].mxu0
        %662 = vmatprep.mubr.bf16.mxu0 0
        %663 = vmatmul.mubr.bf16.gmra.mrb[0].mxu0 %v502
        %v664 = vpop.f32.mrb[0].mxu0
        %v665 = vadd.f32 %v524, %v664
        %v666 = vpop.f32.mrb[0].mxu0
        %v667 = vpop.f32.mrb[0].mxu0
        %v668 = vadd.f32 %v524, %v667
        %v669 = vpop.f32.mrb[0].mxu0
        %670 = vdwg.mxu0
        %v671 = vmax.f32 %v609, 0.0
        %v672 = vmax.f32 %v612, 0.0
        %v673 = vmax.f32 %v617, 0.0
        %v674 = vmax.f32 %v620, 0.0
        %v675 = vmax.f32 %v625, 0.0
        %v676 = vmax.f32 %v628, 0.0
        %v677 = vmax.f32 %v633, 0.0
        %v678 = vmax.f32 %v636, 0.0
        %v679 = vmax.f32 %v641, 0.0
        %v680 = vmax.f32 %v644, 0.0
        %v681 = vmax.f32 %v649, 0.0
        %v682 = vmax.f32 %v652, 0.0
        %v683 = vmax.f32 %v657, 0.0
        %v684 = vmax.f32 %v660, 0.0
        %v685 = vmax.f32 %v665, 0.0
        %v686 = vmax.f32 %v668, 0.0
        %v687 = vpack.c.bf16 %v672, %v671
        %v688 = vpack.c.bf16 %v674, %v673
        %v689 = vpack.c.bf16 %v676, %v675
        %v690 = vpack.c.bf16 %v678, %v677
        %v691 = vpack.c.bf16 %v680, %v679
        %v692 = vpack.c.bf16 %v682, %v681
        %v693 = vpack.c.bf16 %v684, %v683
        %v694 = vpack.c.bf16 %v686, %v685
        %s695 = scalar_lea.vmem [#allocation7], 192
        %v696 = vld [vmem:[%s695] sm:$0xf]
        %v697 = vld [vmem:[%s695 + $0x4] sm:$0xf]
        %v698 = vld [vmem:[%s695 + $0x8] sm:$0xf]
        %v699 = vld [vmem:[%s695 + $0xc] sm:$0xf]
        %v700 = vld [vmem:[%s695 + $0x10] sm:$0xf]
        %v701 = vld [vmem:[%s695 + $0x14] sm:$0xf]
        %v702 = vld [vmem:[%s695 + $0x18] sm:$0xf]
        %v703 = vld [vmem:[%s695 + $0x1c] sm:$0xf]
        %v704 = vld [vmem:[%s695 + $0x20] sm:$0xf]
        %v705 = vld [vmem:[%s695 + $0x24] sm:$0xf]
        %v706 = vld [vmem:[%s695 + $0x28] sm:$0xf]
        %v707 = vld [vmem:[%s695 + $0x2c] sm:$0xf]
        %v708 = vld [vmem:[%s695 + $0x30] sm:$0xf]
        %v709 = vld [vmem:[%s695 + $0x34] sm:$0xf]
        %v710 = vld [vmem:[%s695 + $0x38] sm:$0xf]
        %v711 = vld [vmem:[%s695 + $0x3c] sm:$0xf]
        %v712 = vld [vmem:[%s1] sm:$0xff]
        %v713 = vld [vmem:[%s1 + $0x8] sm:$0x1]
        %v714 = vlaneseq
        %v715 = vshrl.u32 %v714, 7
        %v716 = vsub.s32 0, %v715
        %v717 = vrot.slane %v712, %v716
        %v718 = vmul.f32 %v447, %v717
        %v719 = vmul.f32 %v448, %v717
        %v720 = vmul.f32 %v449, %v717
        %v721 = vmul.f32 %v451, %v717
        %v722 = vmul.f32 %v452, %v717
        %v723 = vmul.f32 %v453, %v717
        %v724 = vmul.f32 %v455, %v717
        %v725 = vmul.f32 %v456, %v717
        %v726 = vmul.f32 %v457, %v717
        %v727 = vmul.f32 %v459, %v717
        %v728 = vmul.f32 %v460, %v717
        %v729 = vmul.f32 %v461, %v717
        %v730 = vmul.f32 %v463, %v717
        %v731 = vmul.f32 %v464, %v717
        %v732 = vmul.f32 %v465, %v717
        %v733 = vmul.f32 %v467, %v717
        %v734 = vmul.f32 %v468, %v717
        %v735 = vmul.f32 %v469, %v717
        %v736 = vmul.f32 %v471, %v717
        %v737 = vmul.f32 %v472, %v717
        %v738 = vmul.f32 %v473, %v717
        %v739 = vmul.f32 %v475, %v717
        %v740 = vmul.f32 %v476, %v717
        %v741 = vmul.f32 %v477, %v717
        %v742 = vlaneseq
        %v743 = vshrl.u32 %v742, 7
        %v744 = vsub.s32 1, %v743
        %v745 = vrot.slane %v712, %v744
        %v746 = vmul.f32 %v448, %v745
        %v747 = vmul.f32 %v449, %v745
        %v748 = vmul.f32 %v452, %v745
        %v749 = vmul.f32 %v453, %v745
        %v750 = vmul.f32 %v456, %v745
        %v751 = vmul.f32 %v457, %v745
        %v752 = vmul.f32 %v460, %v745
        %v753 = vmul.f32 %v461, %v745
        %v754 = vmul.f32 %v464, %v745
        %v755 = vmul.f32 %v465, %v745
        %v756 = vmul.f32 %v468, %v745
        %v757 = vmul.f32 %v469, %v745
        %v758 = vmul.f32 %v472, %v745
        %v759 = vmul.f32 %v473, %v745
        %v760 = vmul.f32 %v476, %v745
        %v761 = vmul.f32 %v477, %v745
        %vm778 = vcmask 1046528
        %v779 = vrot.slane %v746, 1
        %v780 = vrot.slane %v747, 1
        %v781 = vsel %vm778, %v779, %v780
        %v782 = vrot.slane %v748, 1
        %v783 = vrot.slane %v749, 1
        %v784 = vsel %vm778, %v782, %v783
        %v785 = vrot.slane %v750, 1
        %v786 = vrot.slane %v751, 1
        %v787 = vsel %vm778, %v785, %v786
        %v788 = vrot.slane %v752, 1
        %v789 = vrot.slane %v753, 1
        %v790 = vsel %vm778, %v788, %v789
        %v791 = vrot.slane %v754, 1
        %v792 = vrot.slane %v755, 1
        %v793 = vsel %vm778, %v791, %v792
        %v794 = vrot.slane %v756, 1
        %v795 = vrot.slane %v757, 1
        %v796 = vsel %vm778, %v794, %v795
        %v797 = vrot.slane %v758, 1
        %v798 = vrot.slane %v759, 1
        %v799 = vsel %vm778, %v797, %v798
        %v800 = vrot.slane %v760, 1
        %v801 = vrot.slane %v761, 1
        %v802 = vsel %vm778, %v800, %v801
        %v827 = vadd.f32 %v718, %v779
        %v828 = vadd.f32 %v719, %v781
        %v829 = vadd.f32 %v720, %v780
        %v830 = vadd.f32 %v721, %v782
        %v831 = vadd.f32 %v722, %v784
        %v832 = vadd.f32 %v723, %v783
        %v833 = vadd.f32 %v724, %v785
        %v834 = vadd.f32 %v725, %v787
        %v835 = vadd.f32 %v726, %v786
        %v836 = vadd.f32 %v727, %v788
        %v837 = vadd.f32 %v728, %v790
        %v838 = vadd.f32 %v729, %v789
        %v839 = vadd.f32 %v730, %v791
        %v840 = vadd.f32 %v731, %v793
        %v841 = vadd.f32 %v732, %v792
        %v842 = vadd.f32 %v733, %v794
        %v843 = vadd.f32 %v734, %v796
        %v844 = vadd.f32 %v735, %v795
        %v845 = vadd.f32 %v736, %v797
        %v846 = vadd.f32 %v737, %v799
        %v847 = vadd.f32 %v738, %v798
        %v848 = vadd.f32 %v739, %v800
        %v849 = vadd.f32 %v740, %v802
        %v850 = vadd.f32 %v741, %v801
        %v851 = vlaneseq
        %v852 = vshrl.u32 %v851, 7
        %v853 = vsub.s32 2, %v852
        %v854 = vrot.slane %v712, %v853
        %v855 = vmul.f32 %v448, %v854
        %v856 = vmul.f32 %v449, %v854
        %v857 = vmul.f32 %v450, %v854
        %v858 = vmul.f32 %v452, %v854
        %v859 = vmul.f32 %v453, %v854
        %v860 = vmul.f32 %v454, %v854
        %v861 = vmul.f32 %v456, %v854
        %v862 = vmul.f32 %v457, %v854
        %v863 = vmul.f32 %v458, %v854
        %v864 = vmul.f32 %v460, %v854
        %v865 = vmul.f32 %v461, %v854
        %v866 = vmul.f32 %v462, %v854
        %v867 = vmul.f32 %v464, %v854
        %v868 = vmul.f32 %v465, %v854
        %v869 = vmul.f32 %v466, %v854
        %v870 = vmul.f32 %v468, %v854
        %v871 = vmul.f32 %v469, %v854
        %v872 = vmul.f32 %v470, %v854
        %v873 = vmul.f32 %v472, %v854
        %v874 = vmul.f32 %v473, %v854
        %v875 = vmul.f32 %v474, %v854
        %v876 = vmul.f32 %v476, %v854
        %v877 = vmul.f32 %v477, %v854
        %v878 = vmul.f32 %v478, %v854
        %vm903 = vcmask 1045504
        %v904 = vrot.slane %v855, 2
        %v905 = vrot.slane %v856, 2
        %v906 = vsel %vm903, %v904, %v905
        %v907 = vrot.slane %v857, 2
        %v908 = vsel %vm903, %v905, %v907
        %v909 = vrot.slane %v858, 2
        %v910 = vrot.slane %v859, 2
        %v911 = vsel %vm903, %v909, %v910
        %v912 = vrot.slane %v860, 2
        %v913 = vsel %vm903, %v910, %v912
        %v914 = vrot.slane %v861, 2
        %v915 = vrot.slane %v862, 2
        %v916 = vsel %vm903, %v914, %v915
        %v917 = vrot.slane %v863, 2
        %v918 = vsel %vm903, %v915, %v917
        %v919 = vrot.slane %v864, 2
        %v920 = vrot.slane %v865, 2
        %v921 = vsel %vm903, %v919, %v920
        %v922 = vrot.slane %v866, 2
        %v923 = vsel %vm903, %v920, %v922
        %v924 = vrot.slane %v867, 2
        %v925 = vrot.slane %v868, 2
        %v926 = vsel %vm903, %v924, %v925
        %v927 = vrot.slane %v869, 2
        %v928 = vsel %vm903, %v925, %v927
        %v929 = vrot.slane %v870, 2
        %v930 = vrot.slane %v871, 2
        %v931 = vsel %vm903, %v929, %v930
        %v932 = vrot.slane %v872, 2
        %v933 = vsel %vm903, %v930, %v932
        %v934 = vrot.slane %v873, 2
        %v935 = vrot.slane %v874, 2
        %v936 = vsel %vm903, %v934, %v935
        %v937 = vrot.slane %v875, 2
        %v938 = vsel %vm903, %v935, %v937
        %v939 = vrot.slane %v876, 2
        %v940 = vrot.slane %v877, 2
        %v941 = vsel %vm903, %v939, %v940
        %v942 = vrot.slane %v878, 2
        %v943 = vsel %vm903, %v940, %v942
        %v968 = vadd.f32 %v827, %v904
        %v969 = vadd.f32 %v828, %v906
        %v970 = vadd.f32 %v829, %v908
        %v971 = vadd.f32 %v830, %v909
        %v972 = vadd.f32 %v831, %v911
        %v973 = vadd.f32 %v832, %v913
        %v974 = vadd.f32 %v833, %v914
        %v975 = vadd.f32 %v834, %v916
        %v976 = vadd.f32 %v835, %v918
        %v977 = vadd.f32 %v836, %v919
        %v978 = vadd.f32 %v837, %v921
        %v979 = vadd.f32 %v838, %v923
        %v980 = vadd.f32 %v839, %v924
        %v981 = vadd.f32 %v840, %v926
        %v982 = vadd.f32 %v841, %v928
        %v983 = vadd.f32 %v842, %v929
        %v984 = vadd.f32 %v843, %v931
        %v985 = vadd.f32 %v844, %v933
        %v986 = vadd.f32 %v845, %v934
        %v987 = vadd.f32 %v846, %v936
        %v988 = vadd.f32 %v847, %v938
        %v989 = vadd.f32 %v848, %v939
        %v990 = vadd.f32 %v849, %v941
        %v991 = vadd.f32 %v850, %v943
        %v992 = vlaneseq
        %v993 = vshrl.u32 %v992, 7
        %v994 = vsub.s32 3, %v993
        %v995 = vrot.slane %v712, %v994
        %v996 = vmul.f32 %v451, %v995
        %v997 = vmul.f32 %v452, %v995
        %v998 = vmul.f32 %v453, %v995
        %v999 = vmul.f32 %v455, %v995
        %v1000 = vmul.f32 %v456, %v995
        %v1001 = vmul.f32 %v457, %v995
        %v1002 = vmul.f32 %v459, %v995
        %v1003 = vmul.f32 %v460, %v995
        %v1004 = vmul.f32 %v461, %v995
        %v1005 = vmul.f32 %v463, %v995
        %v1006 = vmul.f32 %v464, %v995
        %v1007 = vmul.f32 %v465, %v995
        %v1008 = vmul.f32 %v467, %v995
        %v1009 = vmul.f32 %v468, %v995
        %v1010 = vmul.f32 %v469, %v995
        %v1011 = vmul.f32 %v471, %v995
        %v1012 = vmul.f32 %v472, %v995
        %v1013 = vmul.f32 %v473, %v995
        %v1014 = vmul.f32 %v475, %v995
        %v1015 = vmul.f32 %v476, %v995
        %v1016 = vmul.f32 %v477, %v995
        %v1017 = vmul.f32 %v479, %v995
        %v1018 = vmul.f32 %v480, %v995
        %v1019 = vmul.f32 %v481, %v995
        %v1020 = vadd.f32 %v968, %v996
        %v1021 = vadd.f32 %v969, %v997
        %v1022 = vadd.f32 %v970, %v998
        %v1023 = vadd.f32 %v971, %v999
        %v1024 = vadd.f32 %v972, %v1000
        %v1025 = vadd.f32 %v973, %v1001
        %v1026 = vadd.f32 %v974, %v1002
        %v1027 = vadd.f32 %v975, %v1003
        %v1028 = vadd.f32 %v976, %v1004
        %v1029 = vadd.f32 %v977, %v1005
        %v1030 = vadd.f32 %v978, %v1006
        %v1031 = vadd.f32 %v979, %v1007
        %v1032 = vadd.f32 %v980, %v1008
        %v1033 = vadd.f32 %v981, %v1009
        %v1034 = vadd.f32 %v982, %v1010
        %v1035 = vadd.f32 %v983, %v1011
        %v1036 = vadd.f32 %v984, %v1012
        %v1037 = vadd.f32 %v985, %v1013
        %v1038 = vadd.f32 %v986, %v1014
        %v1039 = vadd.f32 %v987, %v1015
        %v1040 = vadd.f32 %v988, %v1016
        %v1041 = vadd.f32 %v989, %v1017
        %v1042 = vadd.f32 %v990, %v1018
        %v1043 = vadd.f32 %v991, %v1019
        %v1044 = vlaneseq
        %v1045 = vshrl.u32 %v1044, 7
        %v1046 = vsub.s32 4, %v1045
        %v1047 = vrot.slane %v712, %v1046
        %v1048 = vmul.f32 %v452, %v1047
        %v1049 = vmul.f32 %v453, %v1047
        %v1050 = vmul.f32 %v456, %v1047
        %v1051 = vmul.f32 %v457, %v1047
        %v1052 = vmul.f32 %v460, %v1047
        %v1053 = vmul.f32 %v461, %v1047
        %v1054 = vmul.f32 %v464, %v1047
        %v1055 = vmul.f32 %v465, %v1047
        %v1056 = vmul.f32 %v468, %v1047
        %v1057 = vmul.f32 %v469, %v1047
        %v1058 = vmul.f32 %v472, %v1047
        %v1059 = vmul.f32 %v473, %v1047
        %v1060 = vmul.f32 %v476, %v1047
        %v1061 = vmul.f32 %v477, %v1047
        %v1062 = vmul.f32 %v480, %v1047
        %v1063 = vmul.f32 %v481, %v1047
        %v1080 = vrot.slane %v1048, 1
        %v1081 = vrot.slane %v1049, 1
        %v1082 = vsel %vm778, %v1080, %v1081
        %v1083 = vrot.slane %v1050, 1
        %v1084 = vrot.slane %v1051, 1
        %v1085 = vsel %vm778, %v1083, %v1084
        %v1086 = vrot.slane %v1052, 1
        %v1087 = vrot.slane %v1053, 1
        %v1088 = vsel %vm778, %v1086, %v1087
        %v1089 = vrot.slane %v1054, 1
        %v1090 = vrot.slane %v1055, 1
        %v1091 = vsel %vm778, %v1089, %v1090
        %v1092 = vrot.slane %v1056, 1
        %v1093 = vrot.slane %v1057, 1
        %v1094 = vsel %vm778, %v1092, %v1093
        %v1095 = vrot.slane %v1058, 1
        %v1096 = vrot.slane %v1059, 1
        %v1097 = vsel %vm778, %v1095, %v1096
        %v1098 = vrot.slane %v1060, 1
        %v1099 = vrot.slane %v1061, 1
        %v1100 = vsel %vm778, %v1098, %v1099
        %v1101 = vrot.slane %v1062, 1
        %v1102 = vrot.slane %v1063, 1
        %v1103 = vsel %vm778, %v1101, %v1102
        %v1128 = vadd.f32 %v1020, %v1080
        %v1129 = vadd.f32 %v1021, %v1082
        %v1130 = vadd.f32 %v1022, %v1081
        %v1131 = vadd.f32 %v1023, %v1083
        %v1132 = vadd.f32 %v1024, %v1085
        %v1133 = vadd.f32 %v1025, %v1084
        %v1134 = vadd.f32 %v1026, %v1086
        %v1135 = vadd.f32 %v1027, %v1088
        %v1136 = vadd.f32 %v1028, %v1087
        %v1137 = vadd.f32 %v1029, %v1089
        %v1138 = vadd.f32 %v1030, %v1091
        %v1139 = vadd.f32 %v1031, %v1090
        %v1140 = vadd.f32 %v1032, %v1092
        %v1141 = vadd.f32 %v1033, %v1094
        %v1142 = vadd.f32 %v1034, %v1093
        %v1143 = vadd.f32 %v1035, %v1095
        %v1144 = vadd.f32 %v1036, %v1097
        %v1145 = vadd.f32 %v1037, %v1096
        %v1146 = vadd.f32 %v1038, %v1098
        %v1147 = vadd.f32 %v1039, %v1100
        %v1148 = vadd.f32 %v1040, %v1099
        %v1149 = vadd.f32 %v1041, %v1101
        %v1150 = vadd.f32 %v1042, %v1103
        %v1151 = vadd.f32 %v1043, %v1102
        %v1152 = vlaneseq
        %v1153 = vshrl.u32 %v1152, 7
        %v1154 = vsub.s32 5, %v1153
        %v1155 = vrot.slane %v712, %v1154
        %v1156 = vmul.f32 %v452, %v1155
        %v1157 = vmul.f32 %v453, %v1155
        %v1158 = vmul.f32 %v454, %v1155
        %v1159 = vmul.f32 %v456, %v1155
        %v1160 = vmul.f32 %v457, %v1155
        %v1161 = vmul.f32 %v458, %v1155
        %v1162 = vmul.f32 %v460, %v1155
        %v1163 = vmul.f32 %v461, %v1155
        %v1164 = vmul.f32 %v462, %v1155
        %v1165 = vmul.f32 %v464, %v1155
        %v1166 = vmul.f32 %v465, %v1155
        %v1167 = vmul.f32 %v466, %v1155
        %v1168 = vmul.f32 %v468, %v1155
        %v1169 = vmul.f32 %v469, %v1155
        %v1170 = vmul.f32 %v470, %v1155
        %v1171 = vmul.f32 %v472, %v1155
        %v1172 = vmul.f32 %v473, %v1155
        %v1173 = vmul.f32 %v474, %v1155
        %v1174 = vmul.f32 %v476, %v1155
        %v1175 = vmul.f32 %v477, %v1155
        %v1176 = vmul.f32 %v478, %v1155
        %v1177 = vmul.f32 %v480, %v1155
        %v1178 = vmul.f32 %v481, %v1155
        %v1179 = vmul.f32 %v482, %v1155
        %v1204 = vrot.slane %v1156, 2
        %v1205 = vrot.slane %v1157, 2
        %v1206 = vsel %vm903, %v1204, %v1205
        %v1207 = vrot.slane %v1158, 2
        %v1208 = vsel %vm903, %v1205, %v1207
        %v1209 = vrot.slane %v1159, 2
        %v1210 = vrot.slane %v1160, 2
        %v1211 = vsel %vm903, %v1209, %v1210
        %v1212 = vrot.slane %v1161, 2
        %v1213 = vsel %vm903, %v1210, %v1212
        %v1214 = vrot.slane %v1162, 2
        %v1215 = vrot.slane %v1163, 2
        %v1216 = vsel %vm903, %v1214, %v1215
        %v1217 = vrot.slane %v1164, 2
        %v1218 = vsel %vm903, %v1215, %v1217
        %v1219 = vrot.slane %v1165, 2
        %v1220 = vrot.slane %v1166, 2
        %v1221 = vsel %vm903, %v1219, %v1220
        %v1222 = vrot.slane %v1167, 2
        %v1223 = vsel %vm903, %v1220, %v1222
        %v1224 = vrot.slane %v1168, 2
        %v1225 = vrot.slane %v1169, 2
        %v1226 = vsel %vm903, %v1224, %v1225
        %v1227 = vrot.slane %v1170, 2
        %v1228 = vsel %vm903, %v1225, %v1227
        %v1229 = vrot.slane %v1171, 2
        %v1230 = vrot.slane %v1172, 2
        %v1231 = vsel %vm903, %v1229, %v1230
        %v1232 = vrot.slane %v1173, 2
        %v1233 = vsel %vm903, %v1230, %v1232
        %v1234 = vrot.slane %v1174, 2
        %v1235 = vrot.slane %v1175, 2
        %v1236 = vsel %vm903, %v1234, %v1235
        %v1237 = vrot.slane %v1176, 2
        %v1238 = vsel %vm903, %v1235, %v1237
        %v1239 = vrot.slane %v1177, 2
        %v1240 = vrot.slane %v1178, 2
        %v1241 = vsel %vm903, %v1239, %v1240
        %v1242 = vrot.slane %v1179, 2
        %v1243 = vsel %vm903, %v1240, %v1242
        %v1268 = vadd.f32 %v1128, %v1204
        %v1269 = vadd.f32 %v1129, %v1206
        %v1270 = vadd.f32 %v1130, %v1208
        %v1271 = vadd.f32 %v1131, %v1209
        %v1272 = vadd.f32 %v1132, %v1211
        %v1273 = vadd.f32 %v1133, %v1213
        %v1274 = vadd.f32 %v1134, %v1214
        %v1275 = vadd.f32 %v1135, %v1216
        %v1276 = vadd.f32 %v1136, %v1218
        %v1277 = vadd.f32 %v1137, %v1219
        %v1278 = vadd.f32 %v1138, %v1221
        %v1279 = vadd.f32 %v1139, %v1223
        %v1280 = vadd.f32 %v1140, %v1224
        %v1281 = vadd.f32 %v1141, %v1226
        %v1282 = vadd.f32 %v1142, %v1228
        %v1283 = vadd.f32 %v1143, %v1229
        %v1284 = vadd.f32 %v1144, %v1231
        %v1285 = vadd.f32 %v1145, %v1233
        %v1286 = vadd.f32 %v1146, %v1234
        %v1287 = vadd.f32 %v1147, %v1236
        %v1288 = vadd.f32 %v1148, %v1238
        %v1289 = vadd.f32 %v1149, %v1239
        %v1290 = vadd.f32 %v1150, %v1241
        %v1291 = vadd.f32 %v1151, %v1243
        %v1292 = vlaneseq
        %v1293 = vshrl.u32 %v1292, 7
        %v1294 = vsub.s32 6, %v1293
        %v1295 = vrot.slane %v712, %v1294
        %v1296 = vmul.f32 %v455, %v1295
        %v1297 = vmul.f32 %v456, %v1295
        %v1298 = vmul.f32 %v457, %v1295
        %v1299 = vmul.f32 %v459, %v1295
        %v1300 = vmul.f32 %v460, %v1295
        %v1301 = vmul.f32 %v461, %v1295
        %v1302 = vmul.f32 %v463, %v1295
        %v1303 = vmul.f32 %v464, %v1295
        %v1304 = vmul.f32 %v465, %v1295
        %v1305 = vmul.f32 %v467, %v1295
        %v1306 = vmul.f32 %v468, %v1295
        %v1307 = vmul.f32 %v469, %v1295
        %v1308 = vmul.f32 %v471, %v1295
        %v1309 = vmul.f32 %v472, %v1295
        %v1310 = vmul.f32 %v473, %v1295
        %v1311 = vmul.f32 %v475, %v1295
        %v1312 = vmul.f32 %v476, %v1295
        %v1313 = vmul.f32 %v477, %v1295
        %v1314 = vmul.f32 %v479, %v1295
        %v1315 = vmul.f32 %v480, %v1295
        %v1316 = vmul.f32 %v481, %v1295
        %v1317 = vmul.f32 %v483, %v1295
        %v1318 = vmul.f32 %v484, %v1295
        %v1319 = vmul.f32 %v485, %v1295
        %v1320 = vadd.f32 %v1268, %v1296
        %v1321 = vadd.f32 %v1269, %v1297
        %v1322 = vadd.f32 %v1270, %v1298
        %v1323 = vadd.f32 %v1271, %v1299
        %v1324 = vadd.f32 %v1272, %v1300
        %v1325 = vadd.f32 %v1273, %v1301
        %v1326 = vadd.f32 %v1274, %v1302
        %v1327 = vadd.f32 %v1275, %v1303
        %v1328 = vadd.f32 %v1276, %v1304
        %v1329 = vadd.f32 %v1277, %v1305
        %v1330 = vadd.f32 %v1278, %v1306
        %v1331 = vadd.f32 %v1279, %v1307
        %v1332 = vadd.f32 %v1280, %v1308
        %v1333 = vadd.f32 %v1281, %v1309
        %v1334 = vadd.f32 %v1282, %v1310
        %v1335 = vadd.f32 %v1283, %v1311
        %v1336 = vadd.f32 %v1284, %v1312
        %v1337 = vadd.f32 %v1285, %v1313
        %v1338 = vadd.f32 %v1286, %v1314
        %v1339 = vadd.f32 %v1287, %v1315
        %v1340 = vadd.f32 %v1288, %v1316
        %v1341 = vadd.f32 %v1289, %v1317
        %v1342 = vadd.f32 %v1290, %v1318
        %v1343 = vadd.f32 %v1291, %v1319
        %v1344 = vlaneseq
        %v1345 = vshrl.u32 %v1344, 7
        %v1346 = vsub.s32 7, %v1345
        %v1347 = vrot.slane %v712, %v1346
        %v1348 = vmul.f32 %v456, %v1347
        %v1349 = vmul.f32 %v457, %v1347
        %v1350 = vmul.f32 %v460, %v1347
        %v1351 = vmul.f32 %v461, %v1347
        %v1352 = vmul.f32 %v464, %v1347
        %v1353 = vmul.f32 %v465, %v1347
        %v1354 = vmul.f32 %v468, %v1347
        %v1355 = vmul.f32 %v469, %v1347
        %v1356 = vmul.f32 %v472, %v1347
        %v1357 = vmul.f32 %v473, %v1347
        %v1358 = vmul.f32 %v476, %v1347
        %v1359 = vmul.f32 %v477, %v1347
        %v1360 = vmul.f32 %v480, %v1347
        %v1361 = vmul.f32 %v481, %v1347
        %v1362 = vmul.f32 %v484, %v1347
        %v1363 = vmul.f32 %v485, %v1347
        %v1380 = vrot.slane %v1348, 1
        %v1381 = vrot.slane %v1349, 1
        %v1382 = vsel %vm778, %v1380, %v1381
        %v1383 = vrot.slane %v1350, 1
        %v1384 = vrot.slane %v1351, 1
        %v1385 = vsel %vm778, %v1383, %v1384
        %v1386 = vrot.slane %v1352, 1
        %v1387 = vrot.slane %v1353, 1
        %v1388 = vsel %vm778, %v1386, %v1387
        %v1389 = vrot.slane %v1354, 1
        %v1390 = vrot.slane %v1355, 1
        %v1391 = vsel %vm778, %v1389, %v1390
        %v1392 = vrot.slane %v1356, 1
        %v1393 = vrot.slane %v1357, 1
        %v1394 = vsel %vm778, %v1392, %v1393
        %v1395 = vrot.slane %v1358, 1
        %v1396 = vrot.slane %v1359, 1
        %v1397 = vsel %vm778, %v1395, %v1396
        %v1398 = vrot.slane %v1360, 1
        %v1399 = vrot.slane %v1361, 1
        %v1400 = vsel %vm778, %v1398, %v1399
        %v1401 = vrot.slane %v1362, 1
        %v1402 = vrot.slane %v1363, 1
        %v1403 = vsel %vm778, %v1401, %v1402
        %v1428 = vadd.f32 %v1320, %v1380
        %v1429 = vadd.f32 %v1321, %v1382
        %v1430 = vadd.f32 %v1322, %v1381
        %v1431 = vadd.f32 %v1323, %v1383
        %v1432 = vadd.f32 %v1324, %v1385
        %v1433 = vadd.f32 %v1325, %v1384
        %v1434 = vadd.f32 %v1326, %v1386
        %v1435 = vadd.f32 %v1327, %v1388
        %v1436 = vadd.f32 %v1328, %v1387
        %v1437 = vadd.f32 %v1329, %v1389
        %v1438 = vadd.f32 %v1330, %v1391
        %v1439 = vadd.f32 %v1331, %v1390
        %v1440 = vadd.f32 %v1332, %v1392
        %v1441 = vadd.f32 %v1333, %v1394
        %v1442 = vadd.f32 %v1334, %v1393
        %v1443 = vadd.f32 %v1335, %v1395
        %v1444 = vadd.f32 %v1336, %v1397
        %v1445 = vadd.f32 %v1337, %v1396
        %v1446 = vadd.f32 %v1338, %v1398
        %v1447 = vadd.f32 %v1339, %v1400
        %v1448 = vadd.f32 %v1340, %v1399
        %v1449 = vadd.f32 %v1341, %v1401
        %v1450 = vadd.f32 %v1342, %v1403
        %v1451 = vadd.f32 %v1343, %v1402
        %v1452 = vlaneseq
        %v1453 = vshrl.u32 %v1452, 7
        %v1454 = vsub.s32 0, %v1453
        %v1455 = vrot.slane %v713, %v1454
        %v1456 = vmul.f32 %v456, %v1455
        %v1457 = vmul.f32 %v457, %v1455
        %v1458 = vmul.f32 %v458, %v1455
        %v1459 = vmul.f32 %v460, %v1455
        %v1460 = vmul.f32 %v461, %v1455
        %v1461 = vmul.f32 %v462, %v1455
        %v1462 = vmul.f32 %v464, %v1455
        %v1463 = vmul.f32 %v465, %v1455
        %v1464 = vmul.f32 %v466, %v1455
        %v1465 = vmul.f32 %v468, %v1455
        %v1466 = vmul.f32 %v469, %v1455
        %v1467 = vmul.f32 %v470, %v1455
        %v1468 = vmul.f32 %v472, %v1455
        %v1469 = vmul.f32 %v473, %v1455
        %v1470 = vmul.f32 %v474, %v1455
        %v1471 = vmul.f32 %v476, %v1455
        %v1472 = vmul.f32 %v477, %v1455
        %v1473 = vmul.f32 %v478, %v1455
        %v1474 = vmul.f32 %v480, %v1455
        %v1475 = vmul.f32 %v481, %v1455
        %v1476 = vmul.f32 %v482, %v1455
        %v1477 = vmul.f32 %v484, %v1455
        %v1478 = vmul.f32 %v485, %v1455
        %v1479 = vmul.f32 %v486, %v1455
        %v1504 = vrot.slane %v1456, 2
        %v1505 = vrot.slane %v1457, 2
        %v1506 = vsel %vm903, %v1504, %v1505
        %v1507 = vrot.slane %v1458, 2
        %v1508 = vsel %vm903, %v1505, %v1507
        %v1509 = vrot.slane %v1459, 2
        %v1510 = vrot.slane %v1460, 2
        %v1511 = vsel %vm903, %v1509, %v1510
        %v1512 = vrot.slane %v1461, 2
        %v1513 = vsel %vm903, %v1510, %v1512
        %v1514 = vrot.slane %v1462, 2
        %v1515 = vrot.slane %v1463, 2
        %v1516 = vsel %vm903, %v1514, %v1515
        %v1517 = vrot.slane %v1464, 2
        %v1518 = vsel %vm903, %v1515, %v1517
        %v1519 = vrot.slane %v1465, 2
        %v1520 = vrot.slane %v1466, 2
        %v1521 = vsel %vm903, %v1519, %v1520
        %v1522 = vrot.slane %v1467, 2
        %v1523 = vsel %vm903, %v1520, %v1522
        %v1524 = vrot.slane %v1468, 2
        %v1525 = vrot.slane %v1469, 2
        %v1526 = vsel %vm903, %v1524, %v1525
        %v1527 = vrot.slane %v1470, 2
        %v1528 = vsel %vm903, %v1525, %v1527
        %v1529 = vrot.slane %v1471, 2
        %v1530 = vrot.slane %v1472, 2
        %v1531 = vsel %vm903, %v1529, %v1530
        %v1532 = vrot.slane %v1473, 2
        %v1533 = vsel %vm903, %v1530, %v1532
        %v1534 = vrot.slane %v1474, 2
        %v1535 = vrot.slane %v1475, 2
        %v1536 = vsel %vm903, %v1534, %v1535
        %v1537 = vrot.slane %v1476, 2
        %v1538 = vsel %vm903, %v1535, %v1537
        %v1539 = vrot.slane %v1477, 2
        %v1540 = vrot.slane %v1478, 2
        %v1541 = vsel %vm903, %v1539, %v1540
        %v1542 = vrot.slane %v1479, 2
        %v1543 = vsel %vm903, %v1540, %v1542
        %v1568 = vadd.f32 %v1428, %v1504
        %v1569 = vadd.f32 %v1429, %v1506
        %v1570 = vadd.f32 %v1430, %v1508
        %v1571 = vadd.f32 %v1431, %v1509
        %v1572 = vadd.f32 %v1432, %v1511
        %v1573 = vadd.f32 %v1433, %v1513
        %v1574 = vadd.f32 %v1434, %v1514
        %v1575 = vadd.f32 %v1435, %v1516
        %v1576 = vadd.f32 %v1436, %v1518
        %v1577 = vadd.f32 %v1437, %v1519
        %v1578 = vadd.f32 %v1438, %v1521
        %v1579 = vadd.f32 %v1439, %v1523
        %v1580 = vadd.f32 %v1440, %v1524
        %v1581 = vadd.f32 %v1441, %v1526
        %v1582 = vadd.f32 %v1442, %v1528
        %v1583 = vadd.f32 %v1443, %v1529
        %v1584 = vadd.f32 %v1444, %v1531
        %v1585 = vadd.f32 %v1445, %v1533
        %v1586 = vadd.f32 %v1446, %v1534
        %v1587 = vadd.f32 %v1447, %v1536
        %v1588 = vadd.f32 %v1448, %v1538
        %v1589 = vadd.f32 %v1449, %v1539
        %v1590 = vadd.f32 %v1450, %v1541
        %v1591 = vadd.f32 %v1451, %v1543
        %vm1616 = vcmask 1040384
        %v1617 = vrot.slane %v1568, 7
        %v1618 = vrot.slane %v1569, 7
        %v1619 = vsel %vm1616, %v1617, %v1618
        %v1620 = vrot.slane %v1570, 7
        %v1621 = vsel %vm1616, %v1618, %v1620
        %v1622 = vrot.slane %v1571, 7
        %v1623 = vrot.slane %v1572, 7
        %v1624 = vsel %vm1616, %v1622, %v1623
        %v1625 = vrot.slane %v1573, 7
        %v1626 = vsel %vm1616, %v1623, %v1625
        %v1627 = vrot.slane %v1574, 7
        %v1628 = vrot.slane %v1575, 7
        %v1629 = vsel %vm1616, %v1627, %v1628
        %v1630 = vrot.slane %v1576, 7
        %v1631 = vsel %vm1616, %v1628, %v1630
        %v1632 = vrot.slane %v1577, 7
        %v1633 = vrot.slane %v1578, 7
        %v1634 = vsel %vm1616, %v1632, %v1633
        %v1635 = vrot.slane %v1579, 7
        %v1636 = vsel %vm1616, %v1633, %v1635
        %v1637 = vrot.slane %v1580, 7
        %v1638 = vrot.slane %v1581, 7
        %v1639 = vsel %vm1616, %v1637, %v1638
        %v1640 = vrot.slane %v1582, 7
        %v1641 = vsel %vm1616, %v1638, %v1640
        %v1642 = vrot.slane %v1583, 7
        %v1643 = vrot.slane %v1584, 7
        %v1644 = vsel %vm1616, %v1642, %v1643
        %v1645 = vrot.slane %v1585, 7
        %v1646 = vsel %vm1616, %v1643, %v1645
        %v1647 = vrot.slane %v1586, 7
        %v1648 = vrot.slane %v1587, 7
        %v1649 = vsel %vm1616, %v1647, %v1648
        %v1650 = vrot.slane %v1588, 7
        %v1651 = vsel %vm1616, %v1648, %v1650
        %v1652 = vrot.slane %v1589, 7
        %v1653 = vrot.slane %v1590, 7
        %v1654 = vsel %vm1616, %v1652, %v1653
        %v1655 = vrot.slane %v1591, 7
        %v1656 = vsel %vm1616, %v1653, %v1655
        %v1673 = vpack.c.bf16 %v1621, %v1619
        %v1674 = vpack.c.bf16 %v1626, %v1624
        %v1675 = vpack.c.bf16 %v1631, %v1629
        %v1676 = vpack.c.bf16 %v1636, %v1634
        %v1677 = vpack.c.bf16 %v1641, %v1639
        %v1678 = vpack.c.bf16 %v1646, %v1644
        %v1679 = vpack.c.bf16 %v1651, %v1649
        %v1680 = vpack.c.bf16 %v1656, %v1654
        %v1681 = vld [vmem:[#allocation4] sm:$0xf]
        %v1682 = vld [vmem:[#allocation4 + $0x4] sm:$0xf]
        %v1683 = vld [vmem:[#allocation4 + $0x8] sm:$0xf]
        %v1684 = vld [vmem:[#allocation4 + $0xc] sm:$0xf]
        %v1685 = vld [vmem:[#allocation4 + $0x10] sm:$0xf]
        %v1686 = vld [vmem:[#allocation4 + $0x14] sm:$0xf]
        %v1687 = vld [vmem:[#allocation4 + $0x18] sm:$0xf]
        %v1688 = vld [vmem:[#allocation4 + $0x1c] sm:$0xf]
        %v1689 = vld [vmem:[#allocation4 + $0x20] sm:$0xf]
        %v1690 = vld [vmem:[#allocation4 + $0x24] sm:$0xf]
        %v1691 = vld [vmem:[#allocation4 + $0x28] sm:$0xf]
        %v1692 = vld [vmem:[#allocation4 + $0x2c] sm:$0xf]
        %v1693 = vld [vmem:[#allocation4 + $0x30] sm:$0xf]
        %v1694 = vld [vmem:[#allocation4 + $0x34] sm:$0xf]
        %v1695 = vld [vmem:[#allocation4 + $0x38] sm:$0xf]
        %v1696 = vld [vmem:[#allocation4 + $0x3c] sm:$0xf]
        %v1697 = vld [vmem:[%s3] sm:$0x1]
        %v1699 = vlaneseq
        %v1700 = vshrl.u32 %v1699, 7
        %v1701 = vsub.s32 0, %v1700
        %v1702 = vrot.slane %v1697, %v1701
        %v1720 = vunpack.c.l.b16 %v1681
        %v1721 = vunpack.c.l.b16 %v1682
        %v1722 = vunpack.c.l.b16 %v1683
        %v1723 = vunpack.c.l.b16 %v1684
        %v1724 = vunpack.c.l.b16 %v1685
        %v1725 = vunpack.c.l.b16 %v1686
        %v1726 = vunpack.c.l.b16 %v1687
        %v1727 = vunpack.c.l.b16 %v1688
        %v1728 = vunpack.c.l.b16 %v1689
        %v1729 = vunpack.c.l.b16 %v1690
        %v1730 = vunpack.c.l.b16 %v1691
        %v1731 = vunpack.c.l.b16 %v1692
        %v1732 = vunpack.c.l.b16 %v1693
        %v1733 = vunpack.c.l.b16 %v1694
        %v1734 = vunpack.c.l.b16 %v1695
        %v1735 = vunpack.c.l.b16 %v1696
        %v1736 = vpack.c.b16 %v1721, %v1720
        %v1737 = vpack.c.b16 %v1723, %v1722
        %v1738 = vpack.c.b16 %v1725, %v1724
        %v1739 = vpack.c.b16 %v1727, %v1726
        %v1740 = vpack.c.b16 %v1729, %v1728
        %v1741 = vpack.c.b16 %v1731, %v1730
        %v1742 = vpack.c.b16 %v1733, %v1732
        %v1743 = vpack.c.b16 %v1735, %v1734
        %1752 = vmatprep.subr.bf16.mxu0 0
        %1753 = vmatpush1.bf16.msra.mxu0 %v1736
        %1754 = vmatprep.subr.bf16.mxu0 0
        %1755 = vmatpush1.bf16.msra.mxu0 %v1737
        %1756 = vmatprep.subr.bf16.mxu0 0
        %1757 = vmatpush1.bf16.msra.mxu0 %v1738
        %1758 = vmatprep.subr.bf16.mxu0 0
        %1759 = vmatpush1.bf16.msra.mxu0 %v1739
        %1760 = vmatprep.subr.bf16.mxu0 0
        %1761 = vmatpush1.bf16.msra.mxu0 %v1740
        %1762 = vmatprep.subr.bf16.mxu0 0
        %1763 = vmatpush1.bf16.msra.mxu0 %v1741
        %1764 = vmatprep.subr.bf16.mxu0 0
        %1765 = vmatpush1.bf16.msra.mxu0 %v1742
        %1766 = vmatprep.subr.bf16.mxu0 0
        %1767 = vmatpush1.bf16.msra.mxu0 %v1743
        %1768 = vmatprep.subr.bf16.mxu0 0
        %1769 = vmatpush1.bf16.msra.mxu0 0
        %1770 = vmatprep.subr.bf16.mxu0 0
        %1771 = vmatpush1.bf16.msra.mxu0 0
        %1772 = vmatprep.subr.bf16.mxu0 0
        %1773 = vmatpush1.bf16.msra.mxu0 0
        %1774 = vmatprep.subr.bf16.mxu0 0
        %1775 = vmatpush1.bf16.msra.mxu0 0
        %1776 = vmatprep.subr.bf16.mxu0 0
        %1777 = vmatpush1.bf16.msra.mxu0 0
        %1778 = vmatprep.subr.bf16.mxu0 0
        %1779 = vmatpush1.bf16.msra.mxu0 0
        %1780 = vmatprep.subr.bf16.mxu0 0
        %1781 = vmatpush1.bf16.msra.mxu0 0
        %1782 = vmatprep.subr.bf16.mxu0 0
        %1783 = vmatpush1.bf16.msra.mxu0 0
        %1784 = vmatprep.mubr.bf16.mxu0 0
        %1785 = vmatmul.mubr.bf16.gmra.mrb[0].mxu0 %v1673
        %v1786 = vpop.f32.mrb[0].mxu0
        %v1787 = vadd.f32 %v1702, %v1786
        %v1788 = vpop.f32.mrb[0].mxu0
        %v1789 = vpop.f32.mrb[0].mxu0
        %v1790 = vadd.f32 %v1702, %v1789
        %v1791 = vpop.f32.mrb[0].mxu0
        %1792 = vmatprep.mubr.bf16.mxu0 0
        %1793 = vmatmul.mubr.bf16.gmra.mrb[0].mxu0 %v1674
        %v1794 = vpop.f32.mrb[0].mxu0
        %v1795 = vadd.f32 %v1702, %v1794
        %v1796 = vpop.f32.mrb[0].mxu0
        %v1797 = vpop.f32.mrb[0].mxu0
        %v1798 = vadd.f32 %v1702, %v1797
        %v1799 = vpop.f32.mrb[0].mxu0
        %1800 = vmatprep.mubr.bf16.mxu0 0
        %1801 = vmatmul.mubr.bf16.gmra.mrb[0].mxu0 %v1675
        %v1802 = vpop.f32.mrb[0].mxu0
        %v1803 = vadd.f32 %v1702, %v1802
        %v1804 = vpop.f32.mrb[0].mxu0
        %v1805 = vpop.f32.mrb[0].mxu0
        %v1806 = vadd.f32 %v1702, %v1805
        %v1807 = vpop.f32.mrb[0].mxu0
        %1808 = vmatprep.mubr.bf16.mxu0 0
        %1809 = vmatmul.mubr.bf16.gmra.mrb[0].mxu0 %v1676
        %v1810 = vpop.f32.mrb[0].mxu0
        %v1811 = vadd.f32 %v1702, %v1810
        %v1812 = vpop.f32.mrb[0].mxu0
        %v1813 = vpop.f32.mrb[0].mxu0
        %v1814 = vadd.f32 %v1702, %v1813
        %v1815 = vpop.f32.mrb[0].mxu0
        %1816 = vmatprep.mubr.bf16.mxu0 0
        %1817 = vmatmul.mubr.bf16.gmra.mrb[0].mxu0 %v1677
        %v1818 = vpop.f32.mrb[0].mxu0
        %v1819 = vadd.f32 %v1702, %v1818
        %v1820 = vpop.f32.mrb[0].mxu0
        %v1821 = vpop.f32.mrb[0].mxu0
        %v1822 = vadd.f32 %v1702, %v1821
        %v1823 = vpop.f32.mrb[0].mxu0
        %1824 = vmatprep.mubr.bf16.mxu0 0
        %1825 = vmatmul.mubr.bf16.gmra.mrb[0].mxu0 %v1678
        %v1826 = vpop.f32.mrb[0].mxu0
        %v1827 = vadd.f32 %v1702, %v1826
        %v1828 = vpop.f32.mrb[0].mxu0
        %v1829 = vpop.f32.mrb[0].mxu0
        %v1830 = vadd.f32 %v1702, %v1829
        %v1831 = vpop.f32.mrb[0].mxu0
        %1832 = vmatprep.mubr.bf16.mxu0 0
        %1833 = vmatmul.mubr.bf16.gmra.mrb[0].mxu0 %v1679
        %v1834 = vpop.f32.mrb[0].mxu0
        %v1835 = vadd.f32 %v1702, %v1834
        %v1836 = vpop.f32.mrb[0].mxu0
        %v1837 = vpop.f32.mrb[0].mxu0
        %v1838 = vadd.f32 %v1702, %v1837
        %v1839 = vpop.f32.mrb[0].mxu0
        %1840 = vmatprep.mubr.bf16.mxu0 0
        %1841 = vmatmul.mubr.bf16.gmra.mrb[0].mxu0 %v1680
        %v1842 = vpop.f32.mrb[0].mxu0
        %v1843 = vadd.f32 %v1702, %v1842
        %v1844 = vpop.f32.mrb[0].mxu0
        %v1845 = vpop.f32.mrb[0].mxu0
        %v1846 = vadd.f32 %v1702, %v1845
        %v1847 = vpop.f32.mrb[0].mxu0
        %1848 = vdwg.mxu0
        %v1849 = vmax.f32 %v1787, 0.0
        %v1850 = vmax.f32 %v1790, 0.0
        %v1851 = vmax.f32 %v1795, 0.0
        %v1852 = vmax.f32 %v1798, 0.0
        %v1853 = vmax.f32 %v1803, 0.0
        %v1854 = vmax.f32 %v1806, 0.0
        %v1855 = vmax.f32 %v1811, 0.0
        %v1856 = vmax.f32 %v1814, 0.0
        %v1857 = vmax.f32 %v1819, 0.0
        %v1858 = vmax.f32 %v1822, 0.0
        %v1859 = vmax.f32 %v1827, 0.0
        %v1860 = vmax.f32 %v1830, 0.0
        %v1861 = vmax.f32 %v1835, 0.0
        %v1862 = vmax.f32 %v1838, 0.0
        %v1863 = vmax.f32 %v1843, 0.0
        %v1864 = vmax.f32 %v1846, 0.0
        %v1865 = vpack.c.bf16 %v1850, %v1849
        %v1866 = vpack.c.bf16 %v1852, %v1851
        %v1867 = vpack.c.bf16 %v1854, %v1853
        %v1868 = vpack.c.bf16 %v1856, %v1855
        %v1869 = vpack.c.bf16 %v1858, %v1857
        %v1870 = vpack.c.bf16 %v1860, %v1859
        %v1871 = vpack.c.bf16 %v1862, %v1861
        %v1872 = vpack.c.bf16 %v1864, %v1863
        %v1873 = vld [vmem:[#allocation7] sm:$0xf]
        %v1874 = vld [vmem:[#allocation7 + $0x4] sm:$0xf]
        %v1875 = vld [vmem:[#allocation7 + $0x8] sm:$0xf]
        %v1876 = vld [vmem:[#allocation7 + $0xc] sm:$0xf]
        %v1877 = vld [vmem:[#allocation7 + $0x10] sm:$0xf]
        %v1878 = vld [vmem:[#allocation7 + $0x14] sm:$0xf]
        %v1879 = vld [vmem:[#allocation7 + $0x18] sm:$0xf]
        %v1880 = vld [vmem:[#allocation7 + $0x1c] sm:$0xf]
        %v1881 = vld [vmem:[#allocation7 + $0x20] sm:$0xf]
        %v1882 = vld [vmem:[#allocation7 + $0x24] sm:$0xf]
        %v1883 = vld [vmem:[#allocation7 + $0x28] sm:$0xf]
        %v1884 = vld [vmem:[#allocation7 + $0x2c] sm:$0xf]
        %v1885 = vld [vmem:[#allocation7 + $0x30] sm:$0xf]
        %v1886 = vld [vmem:[#allocation7 + $0x34] sm:$0xf]
        %v1887 = vld [vmem:[#allocation7 + $0x38] sm:$0xf]
        %v1888 = vld [vmem:[#allocation7 + $0x3c] sm:$0xf]
        %v1905 = vunpack.c.l.b16 %v1873
        %v1906 = vunpack.c.l.b16 %v1874
        %v1907 = vunpack.c.l.b16 %v1875
        %v1908 = vunpack.c.l.b16 %v1876
        %v1909 = vunpack.c.l.b16 %v1877
        %v1910 = vunpack.c.l.b16 %v1878
        %v1911 = vunpack.c.l.b16 %v1879
        %v1912 = vunpack.c.l.b16 %v1880
        %v1913 = vunpack.c.l.b16 %v1881
        %v1914 = vunpack.c.l.b16 %v1882
        %v1915 = vunpack.c.l.b16 %v1883
        %v1916 = vunpack.c.l.b16 %v1884
        %v1917 = vunpack.c.l.b16 %v1885
        %v1918 = vunpack.c.l.b16 %v1886
        %v1919 = vunpack.c.l.b16 %v1887
        %v1920 = vunpack.c.l.b16 %v1888
        %v1921 = vpack.c.b16 %v1906, %v1905
        %v1922 = vpack.c.b16 %v1908, %v1907
        %v1923 = vpack.c.b16 %v1910, %v1909
        %v1924 = vpack.c.b16 %v1912, %v1911
        %v1925 = vpack.c.b16 %v1914, %v1913
        %v1926 = vpack.c.b16 %v1916, %v1915
        %v1927 = vpack.c.b16 %v1918, %v1917
        %v1928 = vpack.c.b16 %v1920, %v1919
        %1937 = vmatprep.subr.bf16.mxu0 0
        %1938 = vmatpush1.bf16.msra.mxu0 %v1921
        %1939 = vmatprep.subr.bf16.mxu0 0
        %1940 = vmatpush1.bf16.msra.mxu0 %v1922
        %1941 = vmatprep.subr.bf16.mxu0 0
        %1942 = vmatpush1.bf16.msra.mxu0 %v1923
        %1943 = vmatprep.subr.bf16.mxu0 0
        %1944 = vmatpush1.bf16.msra.mxu0 %v1924
        %1945 = vmatprep.subr.bf16.mxu0 0
        %1946 = vmatpush1.bf16.msra.mxu0 %v1925
        %1947 = vmatprep.subr.bf16.mxu0 0
        %1948 = vmatpush1.bf16.msra.mxu0 %v1926
        %1949 = vmatprep.subr.bf16.mxu0 0
        %1950 = vmatpush1.bf16.msra.mxu0 %v1927
        %1951 = vmatprep.subr.bf16.mxu0 0
        %1952 = vmatpush1.bf16.msra.mxu0 %v1928
        %1953 = vmatprep.subr.bf16.mxu0 0
        %1954 = vmatpush1.bf16.msra.mxu0 0
        %1955 = vmatprep.subr.bf16.mxu0 0
        %1956 = vmatpush1.bf16.msra.mxu0 0
        %1957 = vmatprep.subr.bf16.mxu0 0
        %1958 = vmatpush1.bf16.msra.mxu0 0
        %1959 = vmatprep.subr.bf16.mxu0 0
        %1960 = vmatpush1.bf16.msra.mxu0 0
        %1961 = vmatprep.subr.bf16.mxu0 0
        %1962 = vmatpush1.bf16.msra.mxu0 0
        %1963 = vmatprep.subr.bf16.mxu0 0
        %1964 = vmatpush1.bf16.msra.mxu0 0
        %1965 = vmatprep.subr.bf16.mxu0 0
        %1966 = vmatpush1.bf16.msra.mxu0 0
        %1967 = vmatprep.subr.bf16.mxu0 0
        %1968 = vmatpush1.bf16.msra.mxu0 0
        %1969 = vmatprep.mubr.bf16.mxu0 0
        %1970 = vmatmul.mubr.bf16.gmra.mrb[0].mxu0 %v1865
        %v1971 = vpop.f32.mrb[0].mxu0
        %v1972 = vadd.f32 0.0, %v1971
        %v1973 = vpop.f32.mrb[0].mxu0
        %v1974 = vpop.f32.mrb[0].mxu0
        %v1975 = vadd.f32 0.0, %v1974
        %v1976 = vpop.f32.mrb[0].mxu0
        %1977 = vmatprep.mubr.bf16.mxu0 0
        %1978 = vmatmul.mubr.bf16.gmra.mrb[0].mxu0 %v1866
        %v1979 = vpop.f32.mrb[0].mxu0
        %v1980 = vadd.f32 0.0, %v1979
        %v1981 = vpop.f32.mrb[0].mxu0
        %v1982 = vpop.f32.mrb[0].mxu0
        %v1983 = vadd.f32 0.0, %v1982
        %v1984 = vpop.f32.mrb[0].mxu0
        %1985 = vmatprep.mubr.bf16.mxu0 0
        %1986 = vmatmul.mubr.bf16.gmra.mrb[0].mxu0 %v1867
        %v1987 = vpop.f32.mrb[0].mxu0
        %v1988 = vadd.f32 0.0, %v1987
        %v1989 = vpop.f32.mrb[0].mxu0
        %v1990 = vpop.f32.mrb[0].mxu0
        %v1991 = vadd.f32 0.0, %v1990
        %v1992 = vpop.f32.mrb[0].mxu0
        %1993 = vmatprep.mubr.bf16.mxu0 0
        %1994 = vmatmul.mubr.bf16.gmra.mrb[0].mxu0 %v1868
        %v1995 = vpop.f32.mrb[0].mxu0
        %v1996 = vadd.f32 0.0, %v1995
        %v1997 = vpop.f32.mrb[0].mxu0
        %v1998 = vpop.f32.mrb[0].mxu0
        %v1999 = vadd.f32 0.0, %v1998
        %v2000 = vpop.f32.mrb[0].mxu0
        %2001 = vmatprep.mubr.bf16.mxu0 0
        %2002 = vmatmul.mubr.bf16.gmra.mrb[0].mxu0 %v1869
        %v2003 = vpop.f32.mrb[0].mxu0
        %v2004 = vadd.f32 0.0, %v2003
        %v2005 = vpop.f32.mrb[0].mxu0
        %v2006 = vpop.f32.mrb[0].mxu0
        %v2007 = vadd.f32 0.0, %v2006
        %v2008 = vpop.f32.mrb[0].mxu0
        %2009 = vmatprep.mubr.bf16.mxu0 0
        %2010 = vmatmul.mubr.bf16.gmra.mrb[0].mxu0 %v1870
        %v2011 = vpop.f32.mrb[0].mxu0
        %v2012 = vadd.f32 0.0, %v2011
        %v2013 = vpop.f32.mrb[0].mxu0
        %v2014 = vpop.f32.mrb[0].mxu0
        %v2015 = vadd.f32 0.0, %v2014
        %v2016 = vpop.f32.mrb[0].mxu0
        %2017 = vmatprep.mubr.bf16.mxu0 0
        %2018 = vmatmul.mubr.bf16.gmra.mrb[0].mxu0 %v1871
        %v2019 = vpop.f32.mrb[0].mxu0
        %v2020 = vadd.f32 0.0, %v2019
        %v2021 = vpop.f32.mrb[0].mxu0
        %v2022 = vpop.f32.mrb[0].mxu0
        %v2023 = vadd.f32 0.0, %v2022
        %v2024 = vpop.f32.mrb[0].mxu0
        %2025 = vmatprep.mubr.bf16.mxu0 0
        %2026 = vmatmul.mubr.bf16.gmra.mrb[0].mxu0 %v1872
        %v2027 = vpop.f32.mrb[0].mxu0
        %v2028 = vadd.f32 0.0, %v2027
        %v2029 = vpop.f32.mrb[0].mxu0
        %v2030 = vpop.f32.mrb[0].mxu0
        %v2031 = vadd.f32 0.0, %v2030
        %v2032 = vpop.f32.mrb[0].mxu0
        %2033 = vdwg.mxu0
        %v2050 = vunpack.c.l.b16 %v696
        %v2051 = vunpack.c.l.b16 %v697
        %v2052 = vunpack.c.l.b16 %v698
        %v2053 = vunpack.c.l.b16 %v699
        %v2054 = vunpack.c.l.b16 %v700
        %v2055 = vunpack.c.l.b16 %v701
        %v2056 = vunpack.c.l.b16 %v702
        %v2057 = vunpack.c.l.b16 %v703
        %v2058 = vunpack.c.l.b16 %v704
        %v2059 = vunpack.c.l.b16 %v705
        %v2060 = vunpack.c.l.b16 %v706
        %v2061 = vunpack.c.l.b16 %v707
        %v2062 = vunpack.c.l.b16 %v708
        %v2063 = vunpack.c.l.b16 %v709
        %v2064 = vunpack.c.l.b16 %v710
        %v2065 = vunpack.c.l.b16 %v711
        %v2066 = vpack.c.b16 %v2051, %v2050
        %v2067 = vpack.c.b16 %v2053, %v2052
        %v2068 = vpack.c.b16 %v2055, %v2054
        %v2069 = vpack.c.b16 %v2057, %v2056
        %v2070 = vpack.c.b16 %v2059, %v2058
        %v2071 = vpack.c.b16 %v2061, %v2060
        %v2072 = vpack.c.b16 %v2063, %v2062
        %v2073 = vpack.c.b16 %v2065, %v2064
        %2082 = vmatprep.subr.bf16.mxu0 0
        %2083 = vmatpush1.bf16.msra.mxu0 %v2066
        %2084 = vmatprep.subr.bf16.mxu0 0
        %2085 = vmatpush1.bf16.msra.mxu0 %v2067
        %2086 = vmatprep.subr.bf16.mxu0 0
        %2087 = vmatpush1.bf16.msra.mxu0 %v2068
        %2088 = vmatprep.subr.bf16.mxu0 0
        %2089 = vmatpush1.bf16.msra.mxu0 %v2069
        %2090 = vmatprep.subr.bf16.mxu0 0
        %2091 = vmatpush1.bf16.msra.mxu0 %v2070
        %2092 = vmatprep.subr.bf16.mxu0 0
        %2093 = vmatpush1.bf16.msra.mxu0 %v2071
        %2094 = vmatprep.subr.bf16.mxu0 0
        %2095 = vmatpush1.bf16.msra.mxu0 %v2072
        %2096 = vmatprep.subr.bf16.mxu0 0
        %2097 = vmatpush1.bf16.msra.mxu0 %v2073
        %2098 = vmatprep.subr.bf16.mxu0 0
        %2099 = vmatpush1.bf16.msra.mxu0 0
        %2100 = vmatprep.subr.bf16.mxu0 0
        %2101 = vmatpush1.bf16.msra.mxu0 0
        %2102 = vmatprep.subr.bf16.mxu0 0
        %2103 = vmatpush1.bf16.msra.mxu0 0
        %2104 = vmatprep.subr.bf16.mxu0 0
        %2105 = vmatpush1.bf16.msra.mxu0 0
        %2106 = vmatprep.subr.bf16.mxu0 0
        %2107 = vmatpush1.bf16.msra.mxu0 0
        %2108 = vmatprep.subr.bf16.mxu0 0
        %2109 = vmatpush1.bf16.msra.mxu0 0
        %2110 = vmatprep.subr.bf16.mxu0 0
        %2111 = vmatpush1.bf16.msra.mxu0 0
        %2112 = vmatprep.subr.bf16.mxu0 0
        %2113 = vmatpush1.bf16.msra.mxu0 0
        %2114 = vmatprep.mubr.bf16.mxu0 0
        %2115 = vmatmul.mubr.bf16.gmra.mrb[0].mxu0 %v687
        %v2116 = vpop.f32.mrb[0].mxu0
        %v2117 = vadd.f32 %v1972, %v2116
        %v2118 = vpop.f32.mrb[0].mxu0
        %v2119 = vpop.f32.mrb[0].mxu0
        %v2120 = vadd.f32 %v1975, %v2119
        %v2121 = vpop.f32.mrb[0].mxu0
        %2122 = vmatprep.mubr.bf16.mxu0 0
        %2123 = vmatmul.mubr.bf16.gmra.mrb[0].mxu0 %v688
        %v2124 = vpop.f32.mrb[0].mxu0
        %v2125 = vadd.f32 %v1980, %v2124
        %v2126 = vpop.f32.mrb[0].mxu0
        %v2127 = vpop.f32.mrb[0].mxu0
        %v2128 = vadd.f32 %v1983, %v2127
        %v2129 = vpop.f32.mrb[0].mxu0
        %2130 = vmatprep.mubr.bf16.mxu0 0
        %2131 = vmatmul.mubr.bf16.gmra.mrb[0].mxu0 %v689
        %v2132 = vpop.f32.mrb[0].mxu0
        %v2133 = vadd.f32 %v1988, %v2132
        %v2134 = vpop.f32.mrb[0].mxu0
        %v2135 = vpop.f32.mrb[0].mxu0
        %v2136 = vadd.f32 %v1991, %v2135
        %v2137 = vpop.f32.mrb[0].mxu0
        %2138 = vmatprep.mubr.bf16.mxu0 0
        %2139 = vmatmul.mubr.bf16.gmra.mrb[0].mxu0 %v690
        %v2140 = vpop.f32.mrb[0].mxu0
        %v2141 = vadd.f32 %v1996, %v2140
        %v2142 = vpop.f32.mrb[0].mxu0
        %v2143 = vpop.f32.mrb[0].mxu0
        %v2144 = vadd.f32 %v1999, %v2143
        %v2145 = vpop.f32.mrb[0].mxu0
        %2146 = vmatprep.mubr.bf16.mxu0 0
        %2147 = vmatmul.mubr.bf16.gmra.mrb[0].mxu0 %v691
        %v2148 = vpop.f32.mrb[0].mxu0
        %v2149 = vadd.f32 %v2004, %v2148
        %v2150 = vpop.f32.mrb[0].mxu0
        %v2151 = vpop.f32.mrb[0].mxu0
        %v2152 = vadd.f32 %v2007, %v2151
        %v2153 = vpop.f32.mrb[0].mxu0
        %2154 = vmatprep.mubr.bf16.mxu0 0
        %2155 = vmatmul.mubr.bf16.gmra.mrb[0].mxu0 %v692
        %v2156 = vpop.f32.mrb[0].mxu0
        %v2157 = vadd.f32 %v2012, %v2156
        %v2158 = vpop.f32.mrb[0].mxu0
        %v2159 = vpop.f32.mrb[0].mxu0
        %v2160 = vadd.f32 %v2015, %v2159
        %v2161 = vpop.f32.mrb[0].mxu0
        %2162 = vmatprep.mubr.bf16.mxu0 0
        %2163 = vmatmul.mubr.bf16.gmra.mrb[0].mxu0 %v693
        %v2164 = vpop.f32.mrb[0].mxu0
        %v2165 = vadd.f32 %v2020, %v2164
        %v2166 = vpop.f32.mrb[0].mxu0
        %v2167 = vpop.f32.mrb[0].mxu0
        %v2168 = vadd.f32 %v2023, %v2167
        %v2169 = vpop.f32.mrb[0].mxu0
        %2170 = vmatprep.mubr.bf16.mxu0 0
        %2171 = vmatmul.mubr.bf16.gmra.mrb[0].mxu0 %v694
        %v2172 = vpop.f32.mrb[0].mxu0
        %v2173 = vadd.f32 %v2028, %v2172
        %v2174 = vpop.f32.mrb[0].mxu0
        %v2175 = vpop.f32.mrb[0].mxu0
        %v2176 = vadd.f32 %v2031, %v2175
        %v2177 = vpop.f32.mrb[0].mxu0
        %2178 = vdwg.mxu0
        %s2179 = scalar_lea.vmem %s1, 16
        %v2180 = vld [vmem:[%s2179] sm:$0xff]
        %v2181 = vld [vmem:[%s2179 + $0x8] sm:$0x1]
        %v2182 = vlaneseq
        %v2183 = vshrl.u32 %v2182, 7
        %v2184 = vsub.s32 0, %v2183
        %v2185 = vrot.slane %v2180, %v2184
        %v2186 = vmul.f32 %v443, %v2185
        %v2187 = vmul.f32 %v444, %v2185
        %v2188 = vmul.f32 %v445, %v2185
        %v2189 = vmul.f32 %v447, %v2185
        %v2190 = vmul.f32 %v448, %v2185
        %v2191 = vmul.f32 %v449, %v2185
        %v2192 = vmul.f32 %v451, %v2185
        %v2193 = vmul.f32 %v452, %v2185
        %v2194 = vmul.f32 %v453, %v2185
        %v2195 = vmul.f32 %v455, %v2185
        %v2196 = vmul.f32 %v456, %v2185
        %v2197 = vmul.f32 %v457, %v2185
        %v2198 = vmul.f32 %v459, %v2185
        %v2199 = vmul.f32 %v460, %v2185
        %v2200 = vmul.f32 %v461, %v2185
        %v2201 = vmul.f32 %v463, %v2185
        %v2202 = vmul.f32 %v464, %v2185
        %v2203 = vmul.f32 %v465, %v2185
        %v2204 = vmul.f32 %v467, %v2185
        %v2205 = vmul.f32 %v468, %v2185
        %v2206 = vmul.f32 %v469, %v2185
        %v2207 = vmul.f32 %v471, %v2185
        %v2208 = vmul.f32 %v472, %v2185
        %v2209 = vmul.f32 %v473, %v2185
        %v2210 = vlaneseq
        %v2211 = vshrl.u32 %v2210, 7
        %v2212 = vsub.s32 1, %v2211
        %v2213 = vrot.slane %v2180, %v2212
        %v2214 = vmul.f32 %v444, %v2213
        %v2215 = vmul.f32 %v445, %v2213
        %v2216 = vmul.f32 %v448, %v2213
        %v2217 = vmul.f32 %v449, %v2213
        %v2218 = vmul.f32 %v452, %v2213
        %v2219 = vmul.f32 %v453, %v2213
        %v2220 = vmul.f32 %v456, %v2213
        %v2221 = vmul.f32 %v457, %v2213
        %v2222 = vmul.f32 %v460, %v2213
        %v2223 = vmul.f32 %v461, %v2213
        %v2224 = vmul.f32 %v464, %v2213
        %v2225 = vmul.f32 %v465, %v2213
        %v2226 = vmul.f32 %v468, %v2213
        %v2227 = vmul.f32 %v469, %v2213
        %v2228 = vmul.f32 %v472, %v2213
        %v2229 = vmul.f32 %v473, %v2213
        %v2246 = vrot.slane %v2214, 2
        %v2247 = vrot.slane %v2215, 2
        %v2248 = vsel %vm903, %v2246, %v2247
        %v2249 = vrot.slane %v2216, 2
        %v2250 = vrot.slane %v2217, 2
        %v2251 = vsel %vm903, %v2249, %v2250
        %v2252 = vrot.slane %v2218, 2
        %v2253 = vrot.slane %v2219, 2
        %v2254 = vsel %vm903, %v2252, %v2253
        %v2255 = vrot.slane %v2220, 2
        %v2256 = vrot.slane %v2221, 2
        %v2257 = vsel %vm903, %v2255, %v2256
        %v2258 = vrot.slane %v2222, 2
        %v2259 = vrot.slane %v2223, 2
        %v2260 = vsel %vm903, %v2258, %v2259
        %v2261 = vrot.slane %v2224, 2
        %v2262 = vrot.slane %v2225, 2
        %v2263 = vsel %vm903, %v2261, %v2262
        %v2264 = vrot.slane %v2226, 2
        %v2265 = vrot.slane %v2227, 2
        %v2266 = vsel %vm903, %v2264, %v2265
        %v2267 = vrot.slane %v2228, 2
        %v2268 = vrot.slane %v2229, 2
        %v2269 = vsel %vm903, %v2267, %v2268
        %v2294 = vadd.f32 %v2186, %v2246
        %v2295 = vadd.f32 %v2187, %v2248
        %v2296 = vadd.f32 %v2188, %v2247
        %v2297 = vadd.f32 %v2189, %v2249
        %v2298 = vadd.f32 %v2190, %v2251
        %v2299 = vadd.f32 %v2191, %v2250
        %v2300 = vadd.f32 %v2192, %v2252
        %v2301 = vadd.f32 %v2193, %v2254
        %v2302 = vadd.f32 %v2194, %v2253
        %v2303 = vadd.f32 %v2195, %v2255
        %v2304 = vadd.f32 %v2196, %v2257
        %v2305 = vadd.f32 %v2197, %v2256
        %v2306 = vadd.f32 %v2198, %v2258
        %v2307 = vadd.f32 %v2199, %v2260
        %v2308 = vadd.f32 %v2200, %v2259
        %v2309 = vadd.f32 %v2201, %v2261
        %v2310 = vadd.f32 %v2202, %v2263
        %v2311 = vadd.f32 %v2203, %v2262
        %v2312 = vadd.f32 %v2204, %v2264
        %v2313 = vadd.f32 %v2205, %v2266
        %v2314 = vadd.f32 %v2206, %v2265
        %v2315 = vadd.f32 %v2207, %v2267
        %v2316 = vadd.f32 %v2208, %v2269
        %v2317 = vadd.f32 %v2209, %v2268
        %v2318 = vlaneseq
        %v2319 = vshrl.u32 %v2318, 7
        %v2320 = vsub.s32 2, %v2319
        %v2321 = vrot.slane %v2180, %v2320
        %v2322 = vmul.f32 %v444, %v2321
        %v2323 = vmul.f32 %v445, %v2321
        %v2324 = vmul.f32 %v446, %v2321
        %v2325 = vmul.f32 %v448, %v2321
        %v2326 = vmul.f32 %v449, %v2321
        %v2327 = vmul.f32 %v450, %v2321
        %v2328 = vmul.f32 %v452, %v2321
        %v2329 = vmul.f32 %v453, %v2321
        %v2330 = vmul.f32 %v454, %v2321
        %v2331 = vmul.f32 %v456, %v2321
        %v2332 = vmul.f32 %v457, %v2321
        %v2333 = vmul.f32 %v458, %v2321
        %v2334 = vmul.f32 %v460, %v2321
        %v2335 = vmul.f32 %v461, %v2321
        %v2336 = vmul.f32 %v462, %v2321
        %v2337 = vmul.f32 %v464, %v2321
        %v2338 = vmul.f32 %v465, %v2321
        %v2339 = vmul.f32 %v466, %v2321
        %v2340 = vmul.f32 %v468, %v2321
        %v2341 = vmul.f32 %v469, %v2321
        %v2342 = vmul.f32 %v470, %v2321
        %v2343 = vmul.f32 %v472, %v2321
        %v2344 = vmul.f32 %v473, %v2321
        %v2345 = vmul.f32 %v474, %v2321
        %vm2370 = vcmask 1043456
        %v2371 = vrot.slane %v2322, 4
        %v2372 = vrot.slane %v2323, 4
        %v2373 = vsel %vm2370, %v2371, %v2372
        %v2374 = vrot.slane %v2324, 4
        %v2375 = vsel %vm2370, %v2372, %v2374
        %v2376 = vrot.slane %v2325, 4
        %v2377 = vrot.slane %v2326, 4
        %v2378 = vsel %vm2370, %v2376, %v2377
        %v2379 = vrot.slane %v2327, 4
        %v2380 = vsel %vm2370, %v2377, %v2379
        %v2381 = vrot.slane %v2328, 4
        %v2382 = vrot.slane %v2329, 4
        %v2383 = vsel %vm2370, %v2381, %v2382
        %v2384 = vrot.slane %v2330, 4
        %v2385 = vsel %vm2370, %v2382, %v2384
        %v2386 = vrot.slane %v2331, 4
        %v2387 = vrot.slane %v2332, 4
        %v2388 = vsel %vm2370, %v2386, %v2387
        %v2389 = vrot.slane %v2333, 4
        %v2390 = vsel %vm2370, %v2387, %v2389
        %v2391 = vrot.slane %v2334, 4
        %v2392 = vrot.slane %v2335, 4
        %v2393 = vsel %vm2370, %v2391, %v2392
        %v2394 = vrot.slane %v2336, 4
        %v2395 = vsel %vm2370, %v2392, %v2394
        %v2396 = vrot.slane %v2337, 4
        %v2397 = vrot.slane %v2338, 4
        %v2398 = vsel %vm2370, %v2396, %v2397
        %v2399 = vrot.slane %v2339, 4
        %v2400 = vsel %vm2370, %v2397, %v2399
        %v2401 = vrot.slane %v2340, 4
        %v2402 = vrot.slane %v2341, 4
        %v2403 = vsel %vm2370, %v2401, %v2402
        %v2404 = vrot.slane %v2342, 4
        %v2405 = vsel %vm2370, %v2402, %v2404
        %v2406 = vrot.slane %v2343, 4
        %v2407 = vrot.slane %v2344, 4
        %v2408 = vsel %vm2370, %v2406, %v2407
        %v2409 = vrot.slane %v2345, 4
        %v2410 = vsel %vm2370, %v2407, %v2409
        %v2435 = vadd.f32 %v2294, %v2371
        %v2436 = vadd.f32 %v2295, %v2373
        %v2437 = vadd.f32 %v2296, %v2375
        %v2438 = vadd.f32 %v2297, %v2376
        %v2439 = vadd.f32 %v2298, %v2378
        %v2440 = vadd.f32 %v2299, %v2380
        %v2441 = vadd.f32 %v2300, %v2381
        %v2442 = vadd.f32 %v2301, %v2383
        %v2443 = vadd.f32 %v2302, %v2385
        %v2444 = vadd.f32 %v2303, %v2386
        %v2445 = vadd.f32 %v2304, %v2388
        %v2446 = vadd.f32 %v2305, %v2390
        %v2447 = vadd.f32 %v2306, %v2391
        %v2448 = vadd.f32 %v2307, %v2393
        %v2449 = vadd.f32 %v2308, %v2395
        %v2450 = vadd.f32 %v2309, %v2396
        %v2451 = vadd.f32 %v2310, %v2398
        %v2452 = vadd.f32 %v2311, %v2400
        %v2453 = vadd.f32 %v2312, %v2401
        %v2454 = vadd.f32 %v2313, %v2403
        %v2455 = vadd.f32 %v2314, %v2405
        %v2456 = vadd.f32 %v2315, %v2406
        %v2457 = vadd.f32 %v2316, %v2408
        %v2458 = vadd.f32 %v2317, %v2410
        %v2459 = vlaneseq
        %v2460 = vshrl.u32 %v2459, 7
        %v2461 = vsub.s32 3, %v2460
        %v2462 = vrot.slane %v2180, %v2461
        %v2463 = vmul.f32 %v451, %v2462
        %v2464 = vmul.f32 %v452, %v2462
        %v2465 = vmul.f32 %v453, %v2462
        %v2466 = vmul.f32 %v455, %v2462
        %v2467 = vmul.f32 %v456, %v2462
        %v2468 = vmul.f32 %v457, %v2462
        %v2469 = vmul.f32 %v459, %v2462
        %v2470 = vmul.f32 %v460, %v2462
        %v2471 = vmul.f32 %v461, %v2462
        %v2472 = vmul.f32 %v463, %v2462
        %v2473 = vmul.f32 %v464, %v2462
        %v2474 = vmul.f32 %v465, %v2462
        %v2475 = vmul.f32 %v467, %v2462
        %v2476 = vmul.f32 %v468, %v2462
        %v2477 = vmul.f32 %v469, %v2462
        %v2478 = vmul.f32 %v471, %v2462
        %v2479 = vmul.f32 %v472, %v2462
        %v2480 = vmul.f32 %v473, %v2462
        %v2481 = vmul.f32 %v475, %v2462
        %v2482 = vmul.f32 %v476, %v2462
        %v2483 = vmul.f32 %v477, %v2462
        %v2484 = vmul.f32 %v479, %v2462
        %v2485 = vmul.f32 %v480, %v2462
        %v2486 = vmul.f32 %v481, %v2462
        %v2487 = vadd.f32 %v2435, %v2463
        %v2488 = vadd.f32 %v2436, %v2464
        %v2489 = vadd.f32 %v2437, %v2465
        %v2490 = vadd.f32 %v2438, %v2466
        %v2491 = vadd.f32 %v2439, %v2467
        %v2492 = vadd.f32 %v2440, %v2468
        %v2493 = vadd.f32 %v2441, %v2469
        %v2494 = vadd.f32 %v2442, %v2470
        %v2495 = vadd.f32 %v2443, %v2471
        %v2496 = vadd.f32 %v2444, %v2472
        %v2497 = vadd.f32 %v2445, %v2473
        %v2498 = vadd.f32 %v2446, %v2474
        %v2499 = vadd.f32 %v2447, %v2475
        %v2500 = vadd.f32 %v2448, %v2476
        %v2501 = vadd.f32 %v2449, %v2477
        %v2502 = vadd.f32 %v2450, %v2478
        %v2503 = vadd.f32 %v2451, %v2479
        %v2504 = vadd.f32 %v2452, %v2480
        %v2505 = vadd.f32 %v2453, %v2481
        %v2506 = vadd.f32 %v2454, %v2482
        %v2507 = vadd.f32 %v2455, %v2483
        %v2508 = vadd.f32 %v2456, %v2484
        %v2509 = vadd.f32 %v2457, %v2485
        %v2510 = vadd.f32 %v2458, %v2486
        %v2511 = vlaneseq
        %v2512 = vshrl.u32 %v2511, 7
        %v2513 = vsub.s32 4, %v2512
        %v2514 = vrot.slane %v2180, %v2513
        %v2515 = vmul.f32 %v452, %v2514
        %v2516 = vmul.f32 %v453, %v2514
        %v2517 = vmul.f32 %v456, %v2514
        %v2518 = vmul.f32 %v457, %v2514
        %v2519 = vmul.f32 %v460, %v2514
        %v2520 = vmul.f32 %v461, %v2514
        %v2521 = vmul.f32 %v464, %v2514
        %v2522 = vmul.f32 %v465, %v2514
        %v2523 = vmul.f32 %v468, %v2514
        %v2524 = vmul.f32 %v469, %v2514
        %v2525 = vmul.f32 %v472, %v2514
        %v2526 = vmul.f32 %v473, %v2514
        %v2527 = vmul.f32 %v476, %v2514
        %v2528 = vmul.f32 %v477, %v2514
        %v2529 = vmul.f32 %v480, %v2514
        %v2530 = vmul.f32 %v481, %v2514
        %v2547 = vrot.slane %v2515, 2
        %v2548 = vrot.slane %v2516, 2
        %v2549 = vsel %vm903, %v2547, %v2548
        %v2550 = vrot.slane %v2517, 2
        %v2551 = vrot.slane %v2518, 2
        %v2552 = vsel %vm903, %v2550, %v2551
        %v2553 = vrot.slane %v2519, 2
        %v2554 = vrot.slane %v2520, 2
        %v2555 = vsel %vm903, %v2553, %v2554
        %v2556 = vrot.slane %v2521, 2
        %v2557 = vrot.slane %v2522, 2
        %v2558 = vsel %vm903, %v2556, %v2557
        %v2559 = vrot.slane %v2523, 2
        %v2560 = vrot.slane %v2524, 2
        %v2561 = vsel %vm903, %v2559, %v2560
        %v2562 = vrot.slane %v2525, 2
        %v2563 = vrot.slane %v2526, 2
        %v2564 = vsel %vm903, %v2562, %v2563
        %v2565 = vrot.slane %v2527, 2
        %v2566 = vrot.slane %v2528, 2
        %v2567 = vsel %vm903, %v2565, %v2566
        %v2568 = vrot.slane %v2529, 2
        %v2569 = vrot.slane %v2530, 2
        %v2570 = vsel %vm903, %v2568, %v2569
        %v2595 = vadd.f32 %v2487, %v2547
        %v2596 = vadd.f32 %v2488, %v2549
        %v2597 = vadd.f32 %v2489, %v2548
        %v2598 = vadd.f32 %v2490, %v2550
        %v2599 = vadd.f32 %v2491, %v2552
        %v2600 = vadd.f32 %v2492, %v2551
        %v2601 = vadd.f32 %v2493, %v2553
        %v2602 = vadd.f32 %v2494, %v2555
        %v2603 = vadd.f32 %v2495, %v2554
        %v2604 = vadd.f32 %v2496, %v2556
        %v2605 = vadd.f32 %v2497, %v2558
        %v2606 = vadd.f32 %v2498, %v2557
        %v2607 = vadd.f32 %v2499, %v2559
        %v2608 = vadd.f32 %v2500, %v2561
        %v2609 = vadd.f32 %v2501, %v2560
        %v2610 = vadd.f32 %v2502, %v2562
        %v2611 = vadd.f32 %v2503, %v2564
        %v2612 = vadd.f32 %v2504, %v2563
        %v2613 = vadd.f32 %v2505, %v2565
        %v2614 = vadd.f32 %v2506, %v2567
        %v2615 = vadd.f32 %v2507, %v2566
        %v2616 = vadd.f32 %v2508, %v2568
        %v2617 = vadd.f32 %v2509, %v2570
        %v2618 = vadd.f32 %v2510, %v2569
        %v2619 = vlaneseq
        %v2620 = vshrl.u32 %v2619, 7
        %v2621 = vsub.s32 5, %v2620
        %v2622 = vrot.slane %v2180, %v2621
        %v2623 = vmul.f32 %v452, %v2622
        %v2624 = vmul.f32 %v453, %v2622
        %v2625 = vmul.f32 %v454, %v2622
        %v2626 = vmul.f32 %v456, %v2622
        %v2627 = vmul.f32 %v457, %v2622
        %v2628 = vmul.f32 %v458, %v2622
        %v2629 = vmul.f32 %v460, %v2622
        %v2630 = vmul.f32 %v461, %v2622
        %v2631 = vmul.f32 %v462, %v2622
        %v2632 = vmul.f32 %v464, %v2622
        %v2633 = vmul.f32 %v465, %v2622
        %v2634 = vmul.f32 %v466, %v2622
        %v2635 = vmul.f32 %v468, %v2622
        %v2636 = vmul.f32 %v469, %v2622
        %v2637 = vmul.f32 %v470, %v2622
        %v2638 = vmul.f32 %v472, %v2622
        %v2639 = vmul.f32 %v473, %v2622
        %v2640 = vmul.f32 %v474, %v2622
        %v2641 = vmul.f32 %v476, %v2622
        %v2642 = vmul.f32 %v477, %v2622
        %v2643 = vmul.f32 %v478, %v2622
        %v2644 = vmul.f32 %v480, %v2622
        %v2645 = vmul.f32 %v481, %v2622
        %v2646 = vmul.f32 %v482, %v2622
        %v2671 = vrot.slane %v2623, 4
        %v2672 = vrot.slane %v2624, 4
        %v2673 = vsel %vm2370, %v2671, %v2672
        %v2674 = vrot.slane %v2625, 4
        %v2675 = vsel %vm2370, %v2672, %v2674
        %v2676 = vrot.slane %v2626, 4
        %v2677 = vrot.slane %v2627, 4
        %v2678 = vsel %vm2370, %v2676, %v2677
        %v2679 = vrot.slane %v2628, 4
        %v2680 = vsel %vm2370, %v2677, %v2679
        %v2681 = vrot.slane %v2629, 4
        %v2682 = vrot.slane %v2630, 4
        %v2683 = vsel %vm2370, %v2681, %v2682
        %v2684 = vrot.slane %v2631, 4
        %v2685 = vsel %vm2370, %v2682, %v2684
        %v2686 = vrot.slane %v2632, 4
        %v2687 = vrot.slane %v2633, 4
        %v2688 = vsel %vm2370, %v2686, %v2687
        %v2689 = vrot.slane %v2634, 4
        %v2690 = vsel %vm2370, %v2687, %v2689
        %v2691 = vrot.slane %v2635, 4
        %v2692 = vrot.slane %v2636, 4
        %v2693 = vsel %vm2370, %v2691, %v2692
        %v2694 = vrot.slane %v2637, 4
        %v2695 = vsel %vm2370, %v2692, %v2694
        %v2696 = vrot.slane %v2638, 4
        %v2697 = vrot.slane %v2639, 4
        %v2698 = vsel %vm2370, %v2696, %v2697
        %v2699 = vrot.slane %v2640, 4
        %v2700 = vsel %vm2370, %v2697, %v2699
        %v2701 = vrot.slane %v2641, 4
        %v2702 = vrot.slane %v2642, 4
        %v2703 = vsel %vm2370, %v2701, %v2702
        %v2704 = vrot.slane %v2643, 4
        %v2705 = vsel %vm2370, %v2702, %v2704
        %v2706 = vrot.slane %v2644, 4
        %v2707 = vrot.slane %v2645, 4
        %v2708 = vsel %vm2370, %v2706, %v2707
        %v2709 = vrot.slane %v2646, 4
        %v2710 = vsel %vm2370, %v2707, %v2709
        %v2735 = vadd.f32 %v2595, %v2671
        %v2736 = vadd.f32 %v2596, %v2673
        %v2737 = vadd.f32 %v2597, %v2675
        %v2738 = vadd.f32 %v2598, %v2676
        %v2739 = vadd.f32 %v2599, %v2678
        %v2740 = vadd.f32 %v2600, %v2680
        %v2741 = vadd.f32 %v2601, %v2681
        %v2742 = vadd.f32 %v2602, %v2683
        %v2743 = vadd.f32 %v2603, %v2685
        %v2744 = vadd.f32 %v2604, %v2686
        %v2745 = vadd.f32 %v2605, %v2688
        %v2746 = vadd.f32 %v2606, %v2690
        %v2747 = vadd.f32 %v2607, %v2691
        %v2748 = vadd.f32 %v2608, %v2693
        %v2749 = vadd.f32 %v2609, %v2695
        %v2750 = vadd.f32 %v2610, %v2696
        %v2751 = vadd.f32 %v2611, %v2698
        %v2752 = vadd.f32 %v2612, %v2700
        %v2753 = vadd.f32 %v2613, %v2701
        %v2754 = vadd.f32 %v2614, %v2703
        %v2755 = vadd.f32 %v2615, %v2705
        %v2756 = vadd.f32 %v2616, %v2706
        %v2757 = vadd.f32 %v2617, %v2708
        %v2758 = vadd.f32 %v2618, %v2710
        %v2759 = vlaneseq
        %v2760 = vshrl.u32 %v2759, 7
        %v2761 = vsub.s32 6, %v2760
        %v2762 = vrot.slane %v2180, %v2761
        %v2763 = vmul.f32 %v459, %v2762
        %v2764 = vmul.f32 %v460, %v2762
        %v2765 = vmul.f32 %v461, %v2762
        %v2766 = vmul.f32 %v463, %v2762
        %v2767 = vmul.f32 %v464, %v2762
        %v2768 = vmul.f32 %v465, %v2762
        %v2769 = vmul.f32 %v467, %v2762
        %v2770 = vmul.f32 %v468, %v2762
        %v2771 = vmul.f32 %v469, %v2762
        %v2772 = vmul.f32 %v471, %v2762
        %v2773 = vmul.f32 %v472, %v2762
        %v2774 = vmul.f32 %v473, %v2762
        %v2775 = vmul.f32 %v475, %v2762
        %v2776 = vmul.f32 %v476, %v2762
        %v2777 = vmul.f32 %v477, %v2762
        %v2778 = vmul.f32 %v479, %v2762
        %v2779 = vmul.f32 %v480, %v2762
        %v2780 = vmul.f32 %v481, %v2762
        %v2781 = vmul.f32 %v483, %v2762
        %v2782 = vmul.f32 %v484, %v2762
        %v2783 = vmul.f32 %v485, %v2762
        %v2784 = vmul.f32 %v487, %v2762
        %v2785 = vmul.f32 %v488, %v2762
        %v2786 = vmul.f32 %v489, %v2762
        %v2787 = vadd.f32 %v2735, %v2763
        %v2788 = vadd.f32 %v2736, %v2764
        %v2789 = vadd.f32 %v2737, %v2765
        %v2790 = vadd.f32 %v2738, %v2766
        %v2791 = vadd.f32 %v2739, %v2767
        %v2792 = vadd.f32 %v2740, %v2768
        %v2793 = vadd.f32 %v2741, %v2769
        %v2794 = vadd.f32 %v2742, %v2770
        %v2795 = vadd.f32 %v2743, %v2771
        %v2796 = vadd.f32 %v2744, %v2772
        %v2797 = vadd.f32 %v2745, %v2773
        %v2798 = vadd.f32 %v2746, %v2774
        %v2799 = vadd.f32 %v2747, %v2775
        %v2800 = vadd.f32 %v2748, %v2776
        %v2801 = vadd.f32 %v2749, %v2777
        %v2802 = vadd.f32 %v2750, %v2778
        %v2803 = vadd.f32 %v2751, %v2779
        %v2804 = vadd.f32 %v2752, %v2780
        %v2805 = vadd.f32 %v2753, %v2781
        %v2806 = vadd.f32 %v2754, %v2782
        %v2807 = vadd.f32 %v2755, %v2783
        %v2808 = vadd.f32 %v2756, %v2784
        %v2809 = vadd.f32 %v2757, %v2785
        %v2810 = vadd.f32 %v2758, %v2786
        %v2811 = vlaneseq
        %v2812 = vshrl.u32 %v2811, 7
        %v2813 = vsub.s32 7, %v2812
        %v2814 = vrot.slane %v2180, %v2813
        %v2815 = vmul.f32 %v460, %v2814
        %v2816 = vmul.f32 %v461, %v2814
        %v2817 = vmul.f32 %v464, %v2814
        %v2818 = vmul.f32 %v465, %v2814
        %v2819 = vmul.f32 %v468, %v2814
        %v2820 = vmul.f32 %v469, %v2814
        %v2821 = vmul.f32 %v472, %v2814
        %v2822 = vmul.f32 %v473, %v2814
        %v2823 = vmul.f32 %v476, %v2814
        %v2824 = vmul.f32 %v477, %v2814
        %v2825 = vmul.f32 %v480, %v2814
        %v2826 = vmul.f32 %v481, %v2814
        %v2827 = vmul.f32 %v484, %v2814
        %v2828 = vmul.f32 %v485, %v2814
        %v2829 = vmul.f32 %v488, %v2814
        %v2830 = vmul.f32 %v489, %v2814
        %v2847 = vrot.slane %v2815, 2
        %v2848 = vrot.slane %v2816, 2
        %v2849 = vsel %vm903, %v2847, %v2848
        %v2850 = vrot.slane %v2817, 2
        %v2851 = vrot.slane %v2818, 2
        %v2852 = vsel %vm903, %v2850, %v2851
        %v2853 = vrot.slane %v2819, 2
        %v2854 = vrot.slane %v2820, 2
        %v2855 = vsel %vm903, %v2853, %v2854
        %v2856 = vrot.slane %v2821, 2
        %v2857 = vrot.slane %v2822, 2
        %v2858 = vsel %vm903, %v2856, %v2857
        %v2859 = vrot.slane %v2823, 2
        %v2860 = vrot.slane %v2824, 2
        %v2861 = vsel %vm903, %v2859, %v2860
        %v2862 = vrot.slane %v2825, 2
        %v2863 = vrot.slane %v2826, 2
        %v2864 = vsel %vm903, %v2862, %v2863
        %v2865 = vrot.slane %v2827, 2
        %v2866 = vrot.slane %v2828, 2
        %v2867 = vsel %vm903, %v2865, %v2866
        %v2868 = vrot.slane %v2829, 2
        %v2869 = vrot.slane %v2830, 2
        %v2870 = vsel %vm903, %v2868, %v2869
        %v2895 = vadd.f32 %v2787, %v2847
        %v2896 = vadd.f32 %v2788, %v2849
        %v2897 = vadd.f32 %v2789, %v2848
        %v2898 = vadd.f32 %v2790, %v2850
        %v2899 = vadd.f32 %v2791, %v2852
        %v2900 = vadd.f32 %v2792, %v2851
        %v2901 = vadd.f32 %v2793, %v2853
        %v2902 = vadd.f32 %v2794, %v2855
        %v2903 = vadd.f32 %v2795, %v2854
        %v2904 = vadd.f32 %v2796, %v2856
        %v2905 = vadd.f32 %v2797, %v2858
        %v2906 = vadd.f32 %v2798, %v2857
        %v2907 = vadd.f32 %v2799, %v2859
        %v2908 = vadd.f32 %v2800, %v2861
        %v2909 = vadd.f32 %v2801, %v2860
        %v2910 = vadd.f32 %v2802, %v2862
        %v2911 = vadd.f32 %v2803, %v2864
        %v2912 = vadd.f32 %v2804, %v2863
        %v2913 = vadd.f32 %v2805, %v2865
        %v2914 = vadd.f32 %v2806, %v2867
        %v2915 = vadd.f32 %v2807, %v2866
        %v2916 = vadd.f32 %v2808, %v2868
        %v2917 = vadd.f32 %v2809, %v2870
        %v2918 = vadd.f32 %v2810, %v2869
        %v2919 = vlaneseq
        %v2920 = vshrl.u32 %v2919, 7
        %v2921 = vsub.s32 0, %v2920
        %v2922 = vrot.slane %v2181, %v2921
        %v2923 = vmul.f32 %v460, %v2922
        %v2924 = vmul.f32 %v461, %v2922
        %v2925 = vmul.f32 %v462, %v2922
        %v2926 = vmul.f32 %v464, %v2922
        %v2927 = vmul.f32 %v465, %v2922
        %v2928 = vmul.f32 %v466, %v2922
        %v2929 = vmul.f32 %v468, %v2922
        %v2930 = vmul.f32 %v469, %v2922
        %v2931 = vmul.f32 %v470, %v2922
        %v2932 = vmul.f32 %v472, %v2922
        %v2933 = vmul.f32 %v473, %v2922
        %v2934 = vmul.f32 %v474, %v2922
        %v2935 = vmul.f32 %v476, %v2922
        %v2936 = vmul.f32 %v477, %v2922
        %v2937 = vmul.f32 %v478, %v2922
        %v2938 = vmul.f32 %v480, %v2922
        %v2939 = vmul.f32 %v481, %v2922
        %v2940 = vmul.f32 %v482, %v2922
        %v2941 = vmul.f32 %v484, %v2922
        %v2942 = vmul.f32 %v485, %v2922
        %v2943 = vmul.f32 %v486, %v2922
        %v2944 = vmul.f32 %v488, %v2922
        %v2945 = vmul.f32 %v489, %v2922
        %v2946 = vmul.f32 %v490, %v2922
        %v2971 = vrot.slane %v2923, 4
        %v2972 = vrot.slane %v2924, 4
        %v2973 = vsel %vm2370, %v2971, %v2972
        %v2974 = vrot.slane %v2925, 4
        %v2975 = vsel %vm2370, %v2972, %v2974
        %v2976 = vrot.slane %v2926, 4
        %v2977 = vrot.slane %v2927, 4
        %v2978 = vsel %vm2370, %v2976, %v2977
        %v2979 = vrot.slane %v2928, 4
        %v2980 = vsel %vm2370, %v2977, %v2979
        %v2981 = vrot.slane %v2929, 4
        %v2982 = vrot.slane %v2930, 4
        %v2983 = vsel %vm2370, %v2981, %v2982
        %v2984 = vrot.slane %v2931, 4
        %v2985 = vsel %vm2370, %v2982, %v2984
        %v2986 = vrot.slane %v2932, 4
        %v2987 = vrot.slane %v2933, 4
        %v2988 = vsel %vm2370, %v2986, %v2987
        %v2989 = vrot.slane %v2934, 4
        %v2990 = vsel %vm2370, %v2987, %v2989
        %v2991 = vrot.slane %v2935, 4
        %v2992 = vrot.slane %v2936, 4
        %v2993 = vsel %vm2370, %v2991, %v2992
        %v2994 = vrot.slane %v2937, 4
        %v2995 = vsel %vm2370, %v2992, %v2994
        %v2996 = vrot.slane %v2938, 4
        %v2997 = vrot.slane %v2939, 4
        %v2998 = vsel %vm2370, %v2996, %v2997
        %v2999 = vrot.slane %v2940, 4
        %v3000 = vsel %vm2370, %v2997, %v2999
        %v3001 = vrot.slane %v2941, 4
        %v3002 = vrot.slane %v2942, 4
        %v3003 = vsel %vm2370, %v3001, %v3002
        %v3004 = vrot.slane %v2943, 4
        %v3005 = vsel %vm2370, %v3002, %v3004
        %v3006 = vrot.slane %v2944, 4
        %v3007 = vrot.slane %v2945, 4
        %v3008 = vsel %vm2370, %v3006, %v3007
        %v3009 = vrot.slane %v2946, 4
        %v3010 = vsel %vm2370, %v3007, %v3009
        %v3035 = vadd.f32 %v2895, %v2971
        %v3036 = vadd.f32 %v2896, %v2973
        %v3037 = vadd.f32 %v2897, %v2975
        %v3038 = vadd.f32 %v2898, %v2976
        %v3039 = vadd.f32 %v2899, %v2978
        %v3040 = vadd.f32 %v2900, %v2980
        %v3041 = vadd.f32 %v2901, %v2981
        %v3042 = vadd.f32 %v2902, %v2983
        %v3043 = vadd.f32 %v2903, %v2985
        %v3044 = vadd.f32 %v2904, %v2986
        %v3045 = vadd.f32 %v2905, %v2988
        %v3046 = vadd.f32 %v2906, %v2990
        %v3047 = vadd.f32 %v2907, %v2991
        %v3048 = vadd.f32 %v2908, %v2993
        %v3049 = vadd.f32 %v2909, %v2995
        %v3050 = vadd.f32 %v2910, %v2996
        %v3051 = vadd.f32 %v2911, %v2998
        %v3052 = vadd.f32 %v2912, %v3000
        %v3053 = vadd.f32 %v2913, %v3001
        %v3054 = vadd.f32 %v2914, %v3003
        %v3055 = vadd.f32 %v2915, %v3005
        %v3056 = vadd.f32 %v2916, %v3006
        %v3057 = vadd.f32 %v2917, %v3008
        %v3058 = vadd.f32 %v2918, %v3010
        %vm3083 = vcmask 1041408
        %v3084 = vrot.slane %v3035, 6
        %v3085 = vrot.slane %v3036, 6
        %v3086 = vsel %vm3083, %v3084, %v3085
        %v3087 = vrot.slane %v3037, 6
        %v3088 = vsel %vm3083, %v3085, %v3087
        %v3089 = vrot.slane %v3038, 6
        %v3090 = vrot.slane %v3039, 6
        %v3091 = vsel %vm3083, %v3089, %v3090
        %v3092 = vrot.slane %v3040, 6
        %v3093 = vsel %vm3083, %v3090, %v3092
        %v3094 = vrot.slane %v3041, 6
        %v3095 = vrot.slane %v3042, 6
        %v3096 = vsel %vm3083, %v3094, %v3095
        %v3097 = vrot.slane %v3043, 6
        %v3098 = vsel %vm3083, %v3095, %v3097
        %v3099 = vrot.slane %v3044, 6
        %v3100 = vrot.slane %v3045, 6
        %v3101 = vsel %vm3083, %v3099, %v3100
        %v3102 = vrot.slane %v3046, 6
        %v3103 = vsel %vm3083, %v3100, %v3102
        %v3104 = vrot.slane %v3047, 6
        %v3105 = vrot.slane %v3048, 6
        %v3106 = vsel %vm3083, %v3104, %v3105
        %v3107 = vrot.slane %v3049, 6
        %v3108 = vsel %vm3083, %v3105, %v3107
        %v3109 = vrot.slane %v3050, 6
        %v3110 = vrot.slane %v3051, 6
        %v3111 = vsel %vm3083, %v3109, %v3110
        %v3112 = vrot.slane %v3052, 6
        %v3113 = vsel %vm3083, %v3110, %v3112
        %v3114 = vrot.slane %v3053, 6
        %v3115 = vrot.slane %v3054, 6
        %v3116 = vsel %vm3083, %v3114, %v3115
        %v3117 = vrot.slane %v3055, 6
        %v3118 = vsel %vm3083, %v3115, %v3117
        %v3119 = vrot.slane %v3056, 6
        %v3120 = vrot.slane %v3057, 6
        %v3121 = vsel %vm3083, %v3119, %v3120
        %v3122 = vrot.slane %v3058, 6
        %v3123 = vsel %vm3083, %v3120, %v3122
        %v3140 = vpack.c.bf16 %v3088, %v3086
        %v3141 = vpack.c.bf16 %v3093, %v3091
        %v3142 = vpack.c.bf16 %v3098, %v3096
        %v3143 = vpack.c.bf16 %v3103, %v3101
        %v3144 = vpack.c.bf16 %v3108, %v3106
        %v3145 = vpack.c.bf16 %v3113, %v3111
        %v3146 = vpack.c.bf16 %v3118, %v3116
        %v3147 = vpack.c.bf16 %v3123, %v3121
        %s3148 = scalar_lea.vmem [#allocation4], 64
        %v3149 = vld [vmem:[%s3148] sm:$0xf]
        %v3150 = vld [vmem:[%s3148 + $0x4] sm:$0xf]
        %v3151 = vld [vmem:[%s3148 + $0x8] sm:$0xf]
        %v3152 = vld [vmem:[%s3148 + $0xc] sm:$0xf]
        %v3153 = vld [vmem:[%s3148 + $0x10] sm:$0xf]
        %v3154 = vld [vmem:[%s3148 + $0x14] sm:$0xf]
        %v3155 = vld [vmem:[%s3148 + $0x18] sm:$0xf]
        %v3156 = vld [vmem:[%s3148 + $0x1c] sm:$0xf]
        %v3157 = vld [vmem:[%s3148 + $0x20] sm:$0xf]
        %v3158 = vld [vmem:[%s3148 + $0x24] sm:$0xf]
        %v3159 = vld [vmem:[%s3148 + $0x28] sm:$0xf]
        %v3160 = vld [vmem:[%s3148 + $0x2c] sm:$0xf]
        %v3161 = vld [vmem:[%s3148 + $0x30] sm:$0xf]
        %v3162 = vld [vmem:[%s3148 + $0x34] sm:$0xf]
        %v3163 = vld [vmem:[%s3148 + $0x38] sm:$0xf]
        %v3164 = vld [vmem:[%s3148 + $0x3c] sm:$0xf]
        %s3165 = scalar_lea.vmem %s3, 1
        %v3166 = vld [vmem:[%s3165] sm:$0x1]
        %v3168 = vlaneseq
        %v3169 = vshrl.u32 %v3168, 7
        %v3170 = vsub.s32 0, %v3169
        %v3171 = vrot.slane %v3166, %v3170
        %v3189 = vunpack.c.l.b16 %v3149
        %v3190 = vunpack.c.l.b16 %v3150
        %v3191 = vunpack.c.l.b16 %v3151
        %v3192 = vunpack.c.l.b16 %v3152
        %v3193 = vunpack.c.l.b16 %v3153
        %v3194 = vunpack.c.l.b16 %v3154
        %v3195 = vunpack.c.l.b16 %v3155
        %v3196 = vunpack.c.l.b16 %v3156
        %v3197 = vunpack.c.l.b16 %v3157
        %v3198 = vunpack.c.l.b16 %v3158
        %v3199 = vunpack.c.l.b16 %v3159
        %v3200 = vunpack.c.l.b16 %v3160
        %v3201 = vunpack.c.l.b16 %v3161
        %v3202 = vunpack.c.l.b16 %v3162
        %v3203 = vunpack.c.l.b16 %v3163
        %v3204 = vunpack.c.l.b16 %v3164
        %v3205 = vpack.c.b16 %v3190, %v3189
        %v3206 = vpack.c.b16 %v3192, %v3191
        %v3207 = vpack.c.b16 %v3194, %v3193
        %v3208 = vpack.c.b16 %v3196, %v3195
        %v3209 = vpack.c.b16 %v3198, %v3197
        %v3210 = vpack.c.b16 %v3200, %v3199
        %v3211 = vpack.c.b16 %v3202, %v3201
        %v3212 = vpack.c.b16 %v3204, %v3203
        %3221 = vmatprep.subr.bf16.mxu0 0
        %3222 = vmatpush1.bf16.msra.mxu0 %v3205
        %3223 = vmatprep.subr.bf16.mxu0 0
        %3224 = vmatpush1.bf16.msra.mxu0 %v3206
        %3225 = vmatprep.subr.bf16.mxu0 0
        %3226 = vmatpush1.bf16.msra.mxu0 %v3207
        %3227 = vmatprep.subr.bf16.mxu0 0
        %3228 = vmatpush1.bf16.msra.mxu0 %v3208
        %3229 = vmatprep.subr.bf16.mxu0 0
        %3230 = vmatpush1.bf16.msra.mxu0 %v3209
        %3231 = vmatprep.subr.bf16.mxu0 0
        %3232 = vmatpush1.bf16.msra.mxu0 %v3210
        %3233 = vmatprep.subr.bf16.mxu0 0
        %3234 = vmatpush1.bf16.msra.mxu0 %v3211
        %3235 = vmatprep.subr.bf16.mxu0 0
        %3236 = vmatpush1.bf16.msra.mxu0 %v3212
        %3237 = vmatprep.subr.bf16.mxu0 0
        %3238 = vmatpush1.bf16.msra.mxu0 0
        %3239 = vmatprep.subr.bf16.mxu0 0
        %3240 = vmatpush1.bf16.msra.mxu0 0
        %3241 = vmatprep.subr.bf16.mxu0 0
        %3242 = vmatpush1.bf16.msra.mxu0 0
        %3243 = vmatprep.subr.bf16.mxu0 0
        %3244 = vmatpush1.bf16.msra.mxu0 0
        %3245 = vmatprep.subr.bf16.mxu0 0
        %3246 = vmatpush1.bf16.msra.mxu0 0
        %3247 = vmatprep.subr.bf16.mxu0 0
        %3248 = vmatpush1.bf16.msra.mxu0 0
        %3249 = vmatprep.subr.bf16.mxu0 0
        %3250 = vmatpush1.bf16.msra.mxu0 0
        %3251 = vmatprep.subr.bf16.mxu0 0
        %3252 = vmatpush1.bf16.msra.mxu0 0
        %3253 = vmatprep.mubr.bf16.mxu0 0
        %3254 = vmatmul.mubr.bf16.gmra.mrb[0].mxu0 %v3140
        %v3255 = vpop.f32.mrb[0].mxu0
        %v3256 = vadd.f32 %v3171, %v3255
        %v3257 = vpop.f32.mrb[0].mxu0
        %v3258 = vpop.f32.mrb[0].mxu0
        %v3259 = vadd.f32 %v3171, %v3258
        %v3260 = vpop.f32.mrb[0].mxu0
        %3261 = vmatprep.mubr.bf16.mxu0 0
        %3262 = vmatmul.mubr.bf16.gmra.mrb[0].mxu0 %v3141
        %v3263 = vpop.f32.mrb[0].mxu0
        %v3264 = vadd.f32 %v3171, %v3263
        %v3265 = vpop.f32.mrb[0].mxu0
        %v3266 = vpop.f32.mrb[0].mxu0
        %v3267 = vadd.f32 %v3171, %v3266
        %v3268 = vpop.f32.mrb[0].mxu0
        %3269 = vmatprep.mubr.bf16.mxu0 0
        %3270 = vmatmul.mubr.bf16.gmra.mrb[0].mxu0 %v3142
        %v3271 = vpop.f32.mrb[0].mxu0
        %v3272 = vadd.f32 %v3171, %v3271
        %v3273 = vpop.f32.mrb[0].mxu0
        %v3274 = vpop.f32.mrb[0].mxu0
        %v3275 = vadd.f32 %v3171, %v3274
        %v3276 = vpop.f32.mrb[0].mxu0
        %3277 = vmatprep.mubr.bf16.mxu0 0
        %3278 = vmatmul.mubr.bf16.gmra.mrb[0].mxu0 %v3143
        %v3279 = vpop.f32.mrb[0].mxu0
        %v3280 = vadd.f32 %v3171, %v3279
        %v3281 = vpop.f32.mrb[0].mxu0
        %v3282 = vpop.f32.mrb[0].mxu0
        %v3283 = vadd.f32 %v3171, %v3282
        %v3284 = vpop.f32.mrb[0].mxu0
        %3285 = vmatprep.mubr.bf16.mxu0 0
        %3286 = vmatmul.mubr.bf16.gmra.mrb[0].mxu0 %v3144
        %v3287 = vpop.f32.mrb[0].mxu0
        %v3288 = vadd.f32 %v3171, %v3287
        %v3289 = vpop.f32.mrb[0].mxu0
        %v3290 = vpop.f32.mrb[0].mxu0
        %v3291 = vadd.f32 %v3171, %v3290
        %v3292 = vpop.f32.mrb[0].mxu0
        %3293 = vmatprep.mubr.bf16.mxu0 0
        %3294 = vmatmul.mubr.bf16.gmra.mrb[0].mxu0 %v3145
        %v3295 = vpop.f32.mrb[0].mxu0
        %v3296 = vadd.f32 %v3171, %v3295
        %v3297 = vpop.f32.mrb[0].mxu0
        %v3298 = vpop.f32.mrb[0].mxu0
        %v3299 = vadd.f32 %v3171, %v3298
        %v3300 = vpop.f32.mrb[0].mxu0
        %3301 = vmatprep.mubr.bf16.mxu0 0
        %3302 = vmatmul.mubr.bf16.gmra.mrb[0].mxu0 %v3146
        %v3303 = vpop.f32.mrb[0].mxu0
        %v3304 = vadd.f32 %v3171, %v3303
        %v3305 = vpop.f32.mrb[0].mxu0
        %v3306 = vpop.f32.mrb[0].mxu0
        %v3307 = vadd.f32 %v3171, %v3306
        %v3308 = vpop.f32.mrb[0].mxu0
        %3309 = vmatprep.mubr.bf16.mxu0 0
        %3310 = vmatmul.mubr.bf16.gmra.mrb[0].mxu0 %v3147
        %v3311 = vpop.f32.mrb[0].mxu0
        %v3312 = vadd.f32 %v3171, %v3311
        %v3313 = vpop.f32.mrb[0].mxu0
        %v3314 = vpop.f32.mrb[0].mxu0
        %v3315 = vadd.f32 %v3171, %v3314
        %v3316 = vpop.f32.mrb[0].mxu0
        %3317 = vdwg.mxu0
        %v3318 = vmax.f32 %v3256, 0.0
        %v3319 = vmax.f32 %v3259, 0.0
        %v3320 = vmax.f32 %v3264, 0.0
        %v3321 = vmax.f32 %v3267, 0.0
        %v3322 = vmax.f32 %v3272, 0.0
        %v3323 = vmax.f32 %v3275, 0.0
        %v3324 = vmax.f32 %v3280, 0.0
        %v3325 = vmax.f32 %v3283, 0.0
        %v3326 = vmax.f32 %v3288, 0.0
        %v3327 = vmax.f32 %v3291, 0.0
        %v3328 = vmax.f32 %v3296, 0.0
        %v3329 = vmax.f32 %v3299, 0.0
        %v3330 = vmax.f32 %v3304, 0.0
        %v3331 = vmax.f32 %v3307, 0.0
        %v3332 = vmax.f32 %v3312, 0.0
        %v3333 = vmax.f32 %v3315, 0.0
        %v3334 = vpack.c.bf16 %v3319, %v3318
        %v3335 = vpack.c.bf16 %v3321, %v3320
        %v3336 = vpack.c.bf16 %v3323, %v3322
        %v3337 = vpack.c.bf16 %v3325, %v3324
        %v3338 = vpack.c.bf16 %v3327, %v3326
        %v3339 = vpack.c.bf16 %v3329, %v3328
        %v3340 = vpack.c.bf16 %v3331, %v3330
        %v3341 = vpack.c.bf16 %v3333, %v3332
        %s3342 = scalar_lea.vmem [#allocation7], 64
        %v3343 = vld [vmem:[%s3342] sm:$0xf]
        %v3344 = vld [vmem:[%s3342 + $0x4] sm:$0xf]
        %v3345 = vld [vmem:[%s3342 + $0x8] sm:$0xf]
        %v3346 = vld [vmem:[%s3342 + $0xc] sm:$0xf]
        %v3347 = vld [vmem:[%s3342 + $0x10] sm:$0xf]
        %v3348 = vld [vmem:[%s3342 + $0x14] sm:$0xf]
        %v3349 = vld [vmem:[%s3342 + $0x18] sm:$0xf]
        %v3350 = vld [vmem:[%s3342 + $0x1c] sm:$0xf]
        %v3351 = vld [vmem:[%s3342 + $0x20] sm:$0xf]
        %v3352 = vld [vmem:[%s3342 + $0x24] sm:$0xf]
        %v3353 = vld [vmem:[%s3342 + $0x28] sm:$0xf]
        %v3354 = vld [vmem:[%s3342 + $0x2c] sm:$0xf]
        %v3355 = vld [vmem:[%s3342 + $0x30] sm:$0xf]
        %v3356 = vld [vmem:[%s3342 + $0x34] sm:$0xf]
        %v3357 = vld [vmem:[%s3342 + $0x38] sm:$0xf]
        %v3358 = vld [vmem:[%s3342 + $0x3c] sm:$0xf]
        %v3375 = vunpack.c.l.b16 %v3343
        %v3376 = vunpack.c.l.b16 %v3344
        %v3377 = vunpack.c.l.b16 %v3345
        %v3378 = vunpack.c.l.b16 %v3346
        %v3379 = vunpack.c.l.b16 %v3347
        %v3380 = vunpack.c.l.b16 %v3348
        %v3381 = vunpack.c.l.b16 %v3349
        %v3382 = vunpack.c.l.b16 %v3350
        %v3383 = vunpack.c.l.b16 %v3351
        %v3384 = vunpack.c.l.b16 %v3352
        %v3385 = vunpack.c.l.b16 %v3353
        %v3386 = vunpack.c.l.b16 %v3354
        %v3387 = vunpack.c.l.b16 %v3355
        %v3388 = vunpack.c.l.b16 %v3356
        %v3389 = vunpack.c.l.b16 %v3357
        %v3390 = vunpack.c.l.b16 %v3358
        %v3391 = vpack.c.b16 %v3376, %v3375
        %v3392 = vpack.c.b16 %v3378, %v3377
        %v3393 = vpack.c.b16 %v3380, %v3379
        %v3394 = vpack.c.b16 %v3382, %v3381
        %v3395 = vpack.c.b16 %v3384, %v3383
        %v3396 = vpack.c.b16 %v3386, %v3385
        %v3397 = vpack.c.b16 %v3388, %v3387
        %v3398 = vpack.c.b16 %v3390, %v3389
        %3407 = vmatprep.subr.bf16.mxu0 0
        %3408 = vmatpush1.bf16.msra.mxu0 %v3391
        %3409 = vmatprep.subr.bf16.mxu0 0
        %3410 = vmatpush1.bf16.msra.mxu0 %v3392
        %3411 = vmatprep.subr.bf16.mxu0 0
        %3412 = vmatpush1.bf16.msra.mxu0 %v3393
        %3413 = vmatprep.subr.bf16.mxu0 0
        %3414 = vmatpush1.bf16.msra.mxu0 %v3394
        %3415 = vmatprep.subr.bf16.mxu0 0
        %3416 = vmatpush1.bf16.msra.mxu0 %v3395
        %3417 = vmatprep.subr.bf16.mxu0 0
        %3418 = vmatpush1.bf16.msra.mxu0 %v3396
        %3419 = vmatprep.subr.bf16.mxu0 0
        %3420 = vmatpush1.bf16.msra.mxu0 %v3397
        %3421 = vmatprep.subr.bf16.mxu0 0
        %3422 = vmatpush1.bf16.msra.mxu0 %v3398
        %3423 = vmatprep.subr.bf16.mxu0 0
        %3424 = vmatpush1.bf16.msra.mxu0 0
        %3425 = vmatprep.subr.bf16.mxu0 0
        %3426 = vmatpush1.bf16.msra.mxu0 0
        %3427 = vmatprep.subr.bf16.mxu0 0
        %3428 = vmatpush1.bf16.msra.mxu0 0
        %3429 = vmatprep.subr.bf16.mxu0 0
        %3430 = vmatpush1.bf16.msra.mxu0 0
        %3431 = vmatprep.subr.bf16.mxu0 0
        %3432 = vmatpush1.bf16.msra.mxu0 0
        %3433 = vmatprep.subr.bf16.mxu0 0
        %3434 = vmatpush1.bf16.msra.mxu0 0
        %3435 = vmatprep.subr.bf16.mxu0 0
        %3436 = vmatpush1.bf16.msra.mxu0 0
        %3437 = vmatprep.subr.bf16.mxu0 0
        %3438 = vmatpush1.bf16.msra.mxu0 0
        %3439 = vmatprep.mubr.bf16.mxu0 0
        %3440 = vmatmul.mubr.bf16.gmra.mrb[0].mxu0 %v3334
        %v3441 = vpop.f32.mrb[0].mxu0
        %v3442 = vadd.f32 0.0, %v3441
        %v3443 = vpop.f32.mrb[0].mxu0
        %v3444 = vpop.f32.mrb[0].mxu0
        %v3445 = vadd.f32 0.0, %v3444
        %v3446 = vpop.f32.mrb[0].mxu0
        %3447 = vmatprep.mubr.bf16.mxu0 0
        %3448 = vmatmul.mubr.bf16.gmra.mrb[0].mxu0 %v3335
        %v3449 = vpop.f32.mrb[0].mxu0
        %v3450 = vadd.f32 0.0, %v3449
        %v3451 = vpop.f32.mrb[0].mxu0
        %v3452 = vpop.f32.mrb[0].mxu0
        %v3453 = vadd.f32 0.0, %v3452
        %v3454 = vpop.f32.mrb[0].mxu0
        %3455 = vmatprep.mubr.bf16.mxu0 0
        %3456 = vmatmul.mubr.bf16.gmra.mrb[0].mxu0 %v3336
        %v3457 = vpop.f32.mrb[0].mxu0
        %v3458 = vadd.f32 0.0, %v3457
        %v3459 = vpop.f32.mrb[0].mxu0
        %v3460 = vpop.f32.mrb[0].mxu0
        %v3461 = vadd.f32 0.0, %v3460
        %v3462 = vpop.f32.mrb[0].mxu0
        %3463 = vmatprep.mubr.bf16.mxu0 0
        %3464 = vmatmul.mubr.bf16.gmra.mrb[0].mxu0 %v3337
        %v3465 = vpop.f32.mrb[0].mxu0
        %v3466 = vadd.f32 0.0, %v3465
        %v3467 = vpop.f32.mrb[0].mxu0
        %v3468 = vpop.f32.mrb[0].mxu0
        %v3469 = vadd.f32 0.0, %v3468
        %v3470 = vpop.f32.mrb[0].mxu0
        %3471 = vmatprep.mubr.bf16.mxu0 0
        %3472 = vmatmul.mubr.bf16.gmra.mrb[0].mxu0 %v3338
        %v3473 = vpop.f32.mrb[0].mxu0
        %v3474 = vadd.f32 0.0, %v3473
        %v3475 = vpop.f32.mrb[0].mxu0
        %v3476 = vpop.f32.mrb[0].mxu0
        %v3477 = vadd.f32 0.0, %v3476
        %v3478 = vpop.f32.mrb[0].mxu0
        %3479 = vmatprep.mubr.bf16.mxu0 0
        %3480 = vmatmul.mubr.bf16.gmra.mrb[0].mxu0 %v3339
        %v3481 = vpop.f32.mrb[0].mxu0
        %v3482 = vadd.f32 0.0, %v3481
        %v3483 = vpop.f32.mrb[0].mxu0
        %v3484 = vpop.f32.mrb[0].mxu0
        %v3485 = vadd.f32 0.0, %v3484
        %v3486 = vpop.f32.mrb[0].mxu0
        %3487 = vmatprep.mubr.bf16.mxu0 0
        %3488 = vmatmul.mubr.bf16.gmra.mrb[0].mxu0 %v3340
        %v3489 = vpop.f32.mrb[0].mxu0
        %v3490 = vadd.f32 0.0, %v3489
        %v3491 = vpop.f32.mrb[0].mxu0
        %v3492 = vpop.f32.mrb[0].mxu0
        %v3493 = vadd.f32 0.0, %v3492
        %v3494 = vpop.f32.mrb[0].mxu0
        %3495 = vmatprep.mubr.bf16.mxu0 0
        %3496 = vmatmul.mubr.bf16.gmra.mrb[0].mxu0 %v3341
        %v3497 = vpop.f32.mrb[0].mxu0
        %v3498 = vadd.f32 0.0, %v3497
        %v3499 = vpop.f32.mrb[0].mxu0
        %v3500 = vpop.f32.mrb[0].mxu0
        %v3501 = vadd.f32 0.0, %v3500
        %v3502 = vpop.f32.mrb[0].mxu0
        %3503 = vdwg.mxu0
        %v3504 = vadd.f32 %v2117, %v3442
        %v3505 = vadd.f32 %v2120, %v3445
        %v3506 = vadd.f32 %v2125, %v3450
        %v3507 = vadd.f32 %v2128, %v3453
        %v3508 = vadd.f32 %v2133, %v3458
        %v3509 = vadd.f32 %v2136, %v3461
        %v3510 = vadd.f32 %v2141, %v3466
        %v3511 = vadd.f32 %v2144, %v3469
        %v3512 = vadd.f32 %v2149, %v3474
        %v3513 = vadd.f32 %v2152, %v3477
        %v3514 = vadd.f32 %v2157, %v3482
        %v3515 = vadd.f32 %v2160, %v3485
        %v3516 = vadd.f32 %v2165, %v3490
        %v3517 = vadd.f32 %v2168, %v3493
        %v3518 = vadd.f32 %v2173, %v3498
        %v3519 = vadd.f32 %v2176, %v3501
        %s3520 = scalar_lea.vmem %s1, 32
        %v3521 = vld [vmem:[%s3520] sm:$0xff]
        %v3522 = vld [vmem:[%s3520 + $0x8] sm:$0x1]
        %v3523 = vlaneseq
        %v3524 = vshrl.u32 %v3523, 7
        %v3525 = vsub.s32 0, %v3524
        %v3526 = vrot.slane %v3521, %v3525
        %v3527 = vmul.f32 %v439, %v3526
        %v3528 = vmul.f32 %v440, %v3526
        %v3529 = vmul.f32 %v441, %v3526
        %v3530 = vmul.f32 %v443, %v3526
        %v3531 = vmul.f32 %v444, %v3526
        %v3532 = vmul.f32 %v445, %v3526
        %v3533 = vmul.f32 %v447, %v3526
        %v3534 = vmul.f32 %v448, %v3526
        %v3535 = vmul.f32 %v449, %v3526
        %v3536 = vmul.f32 %v451, %v3526
        %v3537 = vmul.f32 %v452, %v3526
        %v3538 = vmul.f32 %v453, %v3526
        %v3539 = vmul.f32 %v455, %v3526
        %v3540 = vmul.f32 %v456, %v3526
        %v3541 = vmul.f32 %v457, %v3526
        %v3542 = vmul.f32 %v459, %v3526
        %v3543 = vmul.f32 %v460, %v3526
        %v3544 = vmul.f32 %v461, %v3526
        %v3545 = vmul.f32 %v463, %v3526
        %v3546 = vmul.f32 %v464, %v3526
        %v3547 = vmul.f32 %v465, %v3526
        %v3548 = vmul.f32 %v467, %v3526
        %v3549 = vmul.f32 %v468, %v3526
        %v3550 = vmul.f32 %v469, %v3526
        %v3551 = vlaneseq
        %v3552 = vshrl.u32 %v3551, 7
        %v3553 = vsub.s32 1, %v3552
        %v3554 = vrot.slane %v3521, %v3553
        %v3555 = vmul.f32 %v440, %v3554
        %v3556 = vmul.f32 %v441, %v3554
        %v3557 = vmul.f32 %v444, %v3554
        %v3558 = vmul.f32 %v445, %v3554
        %v3559 = vmul.f32 %v448, %v3554
        %v3560 = vmul.f32 %v449, %v3554
        %v3561 = vmul.f32 %v452, %v3554
        %v3562 = vmul.f32 %v453, %v3554
        %v3563 = vmul.f32 %v456, %v3554
        %v3564 = vmul.f32 %v457, %v3554
        %v3565 = vmul.f32 %v460, %v3554
        %v3566 = vmul.f32 %v461, %v3554
        %v3567 = vmul.f32 %v464, %v3554
        %v3568 = vmul.f32 %v465, %v3554
        %v3569 = vmul.f32 %v468, %v3554
        %v3570 = vmul.f32 %v469, %v3554
        %vm3587 = vcmask 1044480
        %v3588 = vrot.slane %v3555, 3
        %v3589 = vrot.slane %v3556, 3
        %v3590 = vsel %vm3587, %v3588, %v3589
        %v3591 = vrot.slane %v3557, 3
        %v3592 = vrot.slane %v3558, 3
        %v3593 = vsel %vm3587, %v3591, %v3592
        %v3594 = vrot.slane %v3559, 3
        %v3595 = vrot.slane %v3560, 3
        %v3596 = vsel %vm3587, %v3594, %v3595
        %v3597 = vrot.slane %v3561, 3
        %v3598 = vrot.slane %v3562, 3
        %v3599 = vsel %vm3587, %v3597, %v3598
        %v3600 = vrot.slane %v3563, 3
        %v3601 = vrot.slane %v3564, 3
        %v3602 = vsel %vm3587, %v3600, %v3601
        %v3603 = vrot.slane %v3565, 3
        %v3604 = vrot.slane %v3566, 3
        %v3605 = vsel %vm3587, %v3603, %v3604
        %v3606 = vrot.slane %v3567, 3
        %v3607 = vrot.slane %v3568, 3
        %v3608 = vsel %vm3587, %v3606, %v3607
        %v3609 = vrot.slane %v3569, 3
        %v3610 = vrot.slane %v3570, 3
        %v3611 = vsel %vm3587, %v3609, %v3610
        %v3636 = vadd.f32 %v3527, %v3588
        %v3637 = vadd.f32 %v3528, %v3590
        %v3638 = vadd.f32 %v3529, %v3589
        %v3639 = vadd.f32 %v3530, %v3591
        %v3640 = vadd.f32 %v3531, %v3593
        %v3641 = vadd.f32 %v3532, %v3592
        %v3642 = vadd.f32 %v3533, %v3594
        %v3643 = vadd.f32 %v3534, %v3596
        %v3644 = vadd.f32 %v3535, %v3595
        %v3645 = vadd.f32 %v3536, %v3597
        %v3646 = vadd.f32 %v3537, %v3599
        %v3647 = vadd.f32 %v3538, %v3598
        %v3648 = vadd.f32 %v3539, %v3600
        %v3649 = vadd.f32 %v3540, %v3602
        %v3650 = vadd.f32 %v3541, %v3601
        %v3651 = vadd.f32 %v3542, %v3603
        %v3652 = vadd.f32 %v3543, %v3605
        %v3653 = vadd.f32 %v3544, %v3604
        %v3654 = vadd.f32 %v3545, %v3606
        %v3655 = vadd.f32 %v3546, %v3608
        %v3656 = vadd.f32 %v3547, %v3607
        %v3657 = vadd.f32 %v3548, %v3609
        %v3658 = vadd.f32 %v3549, %v3611
        %v3659 = vadd.f32 %v3550, %v3610
        %v3660 = vlaneseq
        %v3661 = vshrl.u32 %v3660, 7
        %v3662 = vsub.s32 2, %v3661
        %v3663 = vrot.slane %v3521, %v3662
        %v3664 = vmul.f32 %v440, %v3663
        %v3665 = vmul.f32 %v441, %v3663
        %v3666 = vmul.f32 %v442, %v3663
        %v3667 = vmul.f32 %v444, %v3663
        %v3668 = vmul.f32 %v445, %v3663
        %v3669 = vmul.f32 %v446, %v3663
        %v3670 = vmul.f32 %v448, %v3663
        %v3671 = vmul.f32 %v449, %v3663
        %v3672 = vmul.f32 %v450, %v3663
        %v3673 = vmul.f32 %v452, %v3663
        %v3674 = vmul.f32 %v453, %v3663
        %v3675 = vmul.f32 %v454, %v3663
        %v3676 = vmul.f32 %v456, %v3663
        %v3677 = vmul.f32 %v457, %v3663
        %v3678 = vmul.f32 %v458, %v3663
        %v3679 = vmul.f32 %v460, %v3663
        %v3680 = vmul.f32 %v461, %v3663
        %v3681 = vmul.f32 %v462, %v3663
        %v3682 = vmul.f32 %v464, %v3663
        %v3683 = vmul.f32 %v465, %v3663
        %v3684 = vmul.f32 %v466, %v3663
        %v3685 = vmul.f32 %v468, %v3663
        %v3686 = vmul.f32 %v469, %v3663
        %v3687 = vmul.f32 %v470, %v3663
        %v3712 = vrot.slane %v3664, 6
        %v3713 = vrot.slane %v3665, 6
        %v3714 = vsel %vm3083, %v3712, %v3713
        %v3715 = vrot.slane %v3666, 6
        %v3716 = vsel %vm3083, %v3713, %v3715
        %v3717 = vrot.slane %v3667, 6
        %v3718 = vrot.slane %v3668, 6
        %v3719 = vsel %vm3083, %v3717, %v3718
        %v3720 = vrot.slane %v3669, 6
        %v3721 = vsel %vm3083, %v3718, %v3720
        %v3722 = vrot.slane %v3670, 6
        %v3723 = vrot.slane %v3671, 6
        %v3724 = vsel %vm3083, %v3722, %v3723
        %v3725 = vrot.slane %v3672, 6
        %v3726 = vsel %vm3083, %v3723, %v3725
        %v3727 = vrot.slane %v3673, 6
        %v3728 = vrot.slane %v3674, 6
        %v3729 = vsel %vm3083, %v3727, %v3728
        %v3730 = vrot.slane %v3675, 6
        %v3731 = vsel %vm3083, %v3728, %v3730
        %v3732 = vrot.slane %v3676, 6
        %v3733 = vrot.slane %v3677, 6
        %v3734 = vsel %vm3083, %v3732, %v3733
        %v3735 = vrot.slane %v3678, 6
        %v3736 = vsel %vm3083, %v3733, %v3735
        %v3737 = vrot.slane %v3679, 6
        %v3738 = vrot.slane %v3680, 6
        %v3739 = vsel %vm3083, %v3737, %v3738
        %v3740 = vrot.slane %v3681, 6
        %v3741 = vsel %vm3083, %v3738, %v3740
        %v3742 = vrot.slane %v3682, 6
        %v3743 = vrot.slane %v3683, 6
        %v3744 = vsel %vm3083, %v3742, %v3743
        %v3745 = vrot.slane %v3684, 6
        %v3746 = vsel %vm3083, %v3743, %v3745
        %v3747 = vrot.slane %v3685, 6
        %v3748 = vrot.slane %v3686, 6
        %v3749 = vsel %vm3083, %v3747, %v3748
        %v3750 = vrot.slane %v3687, 6
        %v3751 = vsel %vm3083, %v3748, %v3750
        %v3776 = vadd.f32 %v3636, %v3712
        %v3777 = vadd.f32 %v3637, %v3714
        %v3778 = vadd.f32 %v3638, %v3716
        %v3779 = vadd.f32 %v3639, %v3717
        %v3780 = vadd.f32 %v3640, %v3719
        %v3781 = vadd.f32 %v3641, %v3721
        %v3782 = vadd.f32 %v3642, %v3722
        %v3783 = vadd.f32 %v3643, %v3724
        %v3784 = vadd.f32 %v3644, %v3726
        %v3785 = vadd.f32 %v3645, %v3727
        %v3786 = vadd.f32 %v3646, %v3729
        %v3787 = vadd.f32 %v3647, %v3731
        %v3788 = vadd.f32 %v3648, %v3732
        %v3789 = vadd.f32 %v3649, %v3734
        %v3790 = vadd.f32 %v3650, %v3736
        %v3791 = vadd.f32 %v3651, %v3737
        %v3792 = vadd.f32 %v3652, %v3739
        %v3793 = vadd.f32 %v3653, %v3741
        %v3794 = vadd.f32 %v3654, %v3742
        %v3795 = vadd.f32 %v3655, %v3744
        %v3796 = vadd.f32 %v3656, %v3746
        %v3797 = vadd.f32 %v3657, %v3747
        %v3798 = vadd.f32 %v3658, %v3749
        %v3799 = vadd.f32 %v3659, %v3751
        %v3800 = vlaneseq
        %v3801 = vshrl.u32 %v3800, 7
        %v3802 = vsub.s32 3, %v3801
        %v3803 = vrot.slane %v3521, %v3802
        %v3804 = vmul.f32 %v451, %v3803
        %v3805 = vmul.f32 %v452, %v3803
        %v3806 = vmul.f32 %v453, %v3803
        %v3807 = vmul.f32 %v455, %v3803
        %v3808 = vmul.f32 %v456, %v3803
        %v3809 = vmul.f32 %v457, %v3803
        %v3810 = vmul.f32 %v459, %v3803
        %v3811 = vmul.f32 %v460, %v3803
        %v3812 = vmul.f32 %v461, %v3803
        %v3813 = vmul.f32 %v463, %v3803
        %v3814 = vmul.f32 %v464, %v3803
        %v3815 = vmul.f32 %v465, %v3803
        %v3816 = vmul.f32 %v467, %v3803
        %v3817 = vmul.f32 %v468, %v3803
        %v3818 = vmul.f32 %v469, %v3803
        %v3819 = vmul.f32 %v471, %v3803
        %v3820 = vmul.f32 %v472, %v3803
        %v3821 = vmul.f32 %v473, %v3803
        %v3822 = vmul.f32 %v475, %v3803
        %v3823 = vmul.f32 %v476, %v3803
        %v3824 = vmul.f32 %v477, %v3803
        %v3825 = vmul.f32 %v479, %v3803
        %v3826 = vmul.f32 %v480, %v3803
        %v3827 = vmul.f32 %v481, %v3803
        %v3828 = vadd.f32 %v3776, %v3804
        %v3829 = vadd.f32 %v3777, %v3805
        %v3830 = vadd.f32 %v3778, %v3806
        %v3831 = vadd.f32 %v3779, %v3807
        %v3832 = vadd.f32 %v3780, %v3808
        %v3833 = vadd.f32 %v3781, %v3809
        %v3834 = vadd.f32 %v3782, %v3810
        %v3835 = vadd.f32 %v3783, %v3811
        %v3836 = vadd.f32 %v3784, %v3812
        %v3837 = vadd.f32 %v3785, %v3813
        %v3838 = vadd.f32 %v3786, %v3814
        %v3839 = vadd.f32 %v3787, %v3815
        %v3840 = vadd.f32 %v3788, %v3816
        %v3841 = vadd.f32 %v3789, %v3817
        %v3842 = vadd.f32 %v3790, %v3818
        %v3843 = vadd.f32 %v3791, %v3819
        %v3844 = vadd.f32 %v3792, %v3820
        %v3845 = vadd.f32 %v3793, %v3821
        %v3846 = vadd.f32 %v3794, %v3822
        %v3847 = vadd.f32 %v3795, %v3823
        %v3848 = vadd.f32 %v3796, %v3824
        %v3849 = vadd.f32 %v3797, %v3825
        %v3850 = vadd.f32 %v3798, %v3826
        %v3851 = vadd.f32 %v3799, %v3827
        %v3852 = vlaneseq
        %v3853 = vshrl.u32 %v3852, 7
        %v3854 = vsub.s32 4, %v3853
        %v3855 = vrot.slane %v3521, %v3854
        %v3856 = vmul.f32 %v452, %v3855
        %v3857 = vmul.f32 %v453, %v3855
        %v3858 = vmul.f32 %v456, %v3855
        %v3859 = vmul.f32 %v457, %v3855
        %v3860 = vmul.f32 %v460, %v3855
        %v3861 = vmul.f32 %v461, %v3855
        %v3862 = vmul.f32 %v464, %v3855
        %v3863 = vmul.f32 %v465, %v3855
        %v3864 = vmul.f32 %v468, %v3855
        %v3865 = vmul.f32 %v469, %v3855
        %v3866 = vmul.f32 %v472, %v3855
        %v3867 = vmul.f32 %v473, %v3855
        %v3868 = vmul.f32 %v476, %v3855
        %v3869 = vmul.f32 %v477, %v3855
        %v3870 = vmul.f32 %v480, %v3855
        %v3871 = vmul.f32 %v481, %v3855
        %v3888 = vrot.slane %v3856, 3
        %v3889 = vrot.slane %v3857, 3
        %v3890 = vsel %vm3587, %v3888, %v3889
        %v3891 = vrot.slane %v3858, 3
        %v3892 = vrot.slane %v3859, 3
        %v3893 = vsel %vm3587, %v3891, %v3892
        %v3894 = vrot.slane %v3860, 3
        %v3895 = vrot.slane %v3861, 3
        %v3896 = vsel %vm3587, %v3894, %v3895
        %v3897 = vrot.slane %v3862, 3
        %v3898 = vrot.slane %v3863, 3
        %v3899 = vsel %vm3587, %v3897, %v3898
        %v3900 = vrot.slane %v3864, 3
        %v3901 = vrot.slane %v3865, 3
        %v3902 = vsel %vm3587, %v3900, %v3901
        %v3903 = vrot.slane %v3866, 3
        %v3904 = vrot.slane %v3867, 3
        %v3905 = vsel %vm3587, %v3903, %v3904
        %v3906 = vrot.slane %v3868, 3
        %v3907 = vrot.slane %v3869, 3
        %v3908 = vsel %vm3587, %v3906, %v3907
        %v3909 = vrot.slane %v3870, 3
        %v3910 = vrot.slane %v3871, 3
        %v3911 = vsel %vm3587, %v3909, %v3910
        %v3936 = vadd.f32 %v3828, %v3888
        %v3937 = vadd.f32 %v3829, %v3890
        %v3938 = vadd.f32 %v3830, %v3889
        %v3939 = vadd.f32 %v3831, %v3891
        %v3940 = vadd.f32 %v3832, %v3893
        %v3941 = vadd.f32 %v3833, %v3892
        %v3942 = vadd.f32 %v3834, %v3894
        %v3943 = vadd.f32 %v3835, %v3896
        %v3944 = vadd.f32 %v3836, %v3895
        %v3945 = vadd.f32 %v3837, %v3897
        %v3946 = vadd.f32 %v3838, %v3899
        %v3947 = vadd.f32 %v3839, %v3898
        %v3948 = vadd.f32 %v3840, %v3900
        %v3949 = vadd.f32 %v3841, %v3902
        %v3950 = vadd.f32 %v3842, %v3901
        %v3951 = vadd.f32 %v3843, %v3903
        %v3952 = vadd.f32 %v3844, %v3905
        %v3953 = vadd.f32 %v3845, %v3904
        %v3954 = vadd.f32 %v3846, %v3906
        %v3955 = vadd.f32 %v3847, %v3908
        %v3956 = vadd.f32 %v3848, %v3907
        %v3957 = vadd.f32 %v3849, %v3909
        %v3958 = vadd.f32 %v3850, %v3911
        %v3959 = vadd.f32 %v3851, %v3910
        %v3960 = vlaneseq
        %v3961 = vshrl.u32 %v3960, 7
        %v3962 = vsub.s32 5, %v3961
        %v3963 = vrot.slane %v3521, %v3962
        %v3964 = vmul.f32 %v452, %v3963
        %v3965 = vmul.f32 %v453, %v3963
        %v3966 = vmul.f32 %v454, %v3963
        %v3967 = vmul.f32 %v456, %v3963
        %v3968 = vmul.f32 %v457, %v3963
        %v3969 = vmul.f32 %v458, %v3963
        %v3970 = vmul.f32 %v460, %v3963
        %v3971 = vmul.f32 %v461, %v3963
        %v3972 = vmul.f32 %v462, %v3963
        %v3973 = vmul.f32 %v464, %v3963
        %v3974 = vmul.f32 %v465, %v3963
        %v3975 = vmul.f32 %v466, %v3963
        %v3976 = vmul.f32 %v468, %v3963
        %v3977 = vmul.f32 %v469, %v3963
        %v3978 = vmul.f32 %v470, %v3963
        %v3979 = vmul.f32 %v472, %v3963
        %v3980 = vmul.f32 %v473, %v3963
        %v3981 = vmul.f32 %v474, %v3963
        %v3982 = vmul.f32 %v476, %v3963
        %v3983 = vmul.f32 %v477, %v3963
        %v3984 = vmul.f32 %v478, %v3963
        %v3985 = vmul.f32 %v480, %v3963
        %v3986 = vmul.f32 %v481, %v3963
        %v3987 = vmul.f32 %v482, %v3963
        %v4012 = vrot.slane %v3964, 6
        %v4013 = vrot.slane %v3965, 6
        %v4014 = vsel %vm3083, %v4012, %v4013
        %v4015 = vrot.slane %v3966, 6
        %v4016 = vsel %vm3083, %v4013, %v4015
        %v4017 = vrot.slane %v3967, 6
        %v4018 = vrot.slane %v3968, 6
        %v4019 = vsel %vm3083, %v4017, %v4018
        %v4020 = vrot.slane %v3969, 6
        %v4021 = vsel %vm3083, %v4018, %v4020
        %v4022 = vrot.slane %v3970, 6
        %v4023 = vrot.slane %v3971, 6
        %v4024 = vsel %vm3083, %v4022, %v4023
        %v4025 = vrot.slane %v3972, 6
        %v4026 = vsel %vm3083, %v4023, %v4025
        %v4027 = vrot.slane %v3973, 6
        %v4028 = vrot.slane %v3974, 6
        %v4029 = vsel %vm3083, %v4027, %v4028
        %v4030 = vrot.slane %v3975, 6
        %v4031 = vsel %vm3083, %v4028, %v4030
        %v4032 = vrot.slane %v3976, 6
        %v4033 = vrot.slane %v3977, 6
        %v4034 = vsel %vm3083, %v4032, %v4033
        %v4035 = vrot.slane %v3978, 6
        %v4036 = vsel %vm3083, %v4033, %v4035
        %v4037 = vrot.slane %v3979, 6
        %v4038 = vrot.slane %v3980, 6
        %v4039 = vsel %vm3083, %v4037, %v4038
        %v4040 = vrot.slane %v3981, 6
        %v4041 = vsel %vm3083, %v4038, %v4040
        %v4042 = vrot.slane %v3982, 6
        %v4043 = vrot.slane %v3983, 6
        %v4044 = vsel %vm3083, %v4042, %v4043
        %v4045 = vrot.slane %v3984, 6
        %v4046 = vsel %vm3083, %v4043, %v4045
        %v4047 = vrot.slane %v3985, 6
        %v4048 = vrot.slane %v3986, 6
        %v4049 = vsel %vm3083, %v4047, %v4048
        %v4050 = vrot.slane %v3987, 6
        %v4051 = vsel %vm3083, %v4048, %v4050
        %v4076 = vadd.f32 %v3936, %v4012
        %v4077 = vadd.f32 %v3937, %v4014
        %v4078 = vadd.f32 %v3938, %v4016
        %v4079 = vadd.f32 %v3939, %v4017
        %v4080 = vadd.f32 %v3940, %v4019
        %v4081 = vadd.f32 %v3941, %v4021
        %v4082 = vadd.f32 %v3942, %v4022
        %v4083 = vadd.f32 %v3943, %v4024
        %v4084 = vadd.f32 %v3944, %v4026
        %v4085 = vadd.f32 %v3945, %v4027
        %v4086 = vadd.f32 %v3946, %v4029
        %v4087 = vadd.f32 %v3947, %v4031
        %v4088 = vadd.f32 %v3948, %v4032
        %v4089 = vadd.f32 %v3949, %v4034
        %v4090 = vadd.f32 %v3950, %v4036
        %v4091 = vadd.f32 %v3951, %v4037
        %v4092 = vadd.f32 %v3952, %v4039
        %v4093 = vadd.f32 %v3953, %v4041
        %v4094 = vadd.f32 %v3954, %v4042
        %v4095 = vadd.f32 %v3955, %v4044
        %v4096 = vadd.f32 %v3956, %v4046
        %v4097 = vadd.f32 %v3957, %v4047
        %v4098 = vadd.f32 %v3958, %v4049
        %v4099 = vadd.f32 %v3959, %v4051
        %v4100 = vlaneseq
        %v4101 = vshrl.u32 %v4100, 7
        %v4102 = vsub.s32 6, %v4101
        %v4103 = vrot.slane %v3521, %v4102
        %v4104 = vmul.f32 %v463, %v4103
        %v4105 = vmul.f32 %v464, %v4103
        %v4106 = vmul.f32 %v465, %v4103
        %v4107 = vmul.f32 %v467, %v4103
        %v4108 = vmul.f32 %v468, %v4103
        %v4109 = vmul.f32 %v469, %v4103
        %v4110 = vmul.f32 %v471, %v4103
        %v4111 = vmul.f32 %v472, %v4103
        %v4112 = vmul.f32 %v473, %v4103
        %v4113 = vmul.f32 %v475, %v4103
        %v4114 = vmul.f32 %v476, %v4103
        %v4115 = vmul.f32 %v477, %v4103
        %v4116 = vmul.f32 %v479, %v4103
        %v4117 = vmul.f32 %v480, %v4103
        %v4118 = vmul.f32 %v481, %v4103
        %v4119 = vmul.f32 %v483, %v4103
        %v4120 = vmul.f32 %v484, %v4103
        %v4121 = vmul.f32 %v485, %v4103
        %v4122 = vmul.f32 %v487, %v4103
        %v4123 = vmul.f32 %v488, %v4103
        %v4124 = vmul.f32 %v489, %v4103
        %v4125 = vmul.f32 %v491, %v4103
        %v4126 = vmul.f32 %v492, %v4103
        %v4127 = vmul.f32 %v493, %v4103
        %v4128 = vadd.f32 %v4076, %v4104
        %v4129 = vadd.f32 %v4077, %v4105
        %v4130 = vadd.f32 %v4078, %v4106
        %v4131 = vadd.f32 %v4079, %v4107
        %v4132 = vadd.f32 %v4080, %v4108
        %v4133 = vadd.f32 %v4081, %v4109
        %v4134 = vadd.f32 %v4082, %v4110
        %v4135 = vadd.f32 %v4083, %v4111
        %v4136 = vadd.f32 %v4084, %v4112
        %v4137 = vadd.f32 %v4085, %v4113
        %v4138 = vadd.f32 %v4086, %v4114
        %v4139 = vadd.f32 %v4087, %v4115
        %v4140 = vadd.f32 %v4088, %v4116
        %v4141 = vadd.f32 %v4089, %v4117
        %v4142 = vadd.f32 %v4090, %v4118
        %v4143 = vadd.f32 %v4091, %v4119
        %v4144 = vadd.f32 %v4092, %v4120
        %v4145 = vadd.f32 %v4093, %v4121
        %v4146 = vadd.f32 %v4094, %v4122
        %v4147 = vadd.f32 %v4095, %v4123
        %v4148 = vadd.f32 %v4096, %v4124
        %v4149 = vadd.f32 %v4097, %v4125
        %v4150 = vadd.f32 %v4098, %v4126
        %v4151 = vadd.f32 %v4099, %v4127
        %v4152 = vlaneseq
        %v4153 = vshrl.u32 %v4152, 7
        %v4154 = vsub.s32 7, %v4153
        %v4155 = vrot.slane %v3521, %v4154
        %v4156 = vmul.f32 %v464, %v4155
        %v4157 = vmul.f32 %v465, %v4155
        %v4158 = vmul.f32 %v468, %v4155
        %v4159 = vmul.f32 %v469, %v4155
        %v4160 = vmul.f32 %v472, %v4155
        %v4161 = vmul.f32 %v473, %v4155
        %v4162 = vmul.f32 %v476, %v4155
        %v4163 = vmul.f32 %v477, %v4155
        %v4164 = vmul.f32 %v480, %v4155
        %v4165 = vmul.f32 %v481, %v4155
        %v4166 = vmul.f32 %v484, %v4155
        %v4167 = vmul.f32 %v485, %v4155
        %v4168 = vmul.f32 %v488, %v4155
        %v4169 = vmul.f32 %v489, %v4155
        %v4170 = vmul.f32 %v492, %v4155
        %v4171 = vmul.f32 %v493, %v4155
        %v4188 = vrot.slane %v4156, 3
        %v4189 = vrot.slane %v4157, 3
        %v4190 = vsel %vm3587, %v4188, %v4189
        %v4191 = vrot.slane %v4158, 3
        %v4192 = vrot.slane %v4159, 3
        %v4193 = vsel %vm3587, %v4191, %v4192
        %v4194 = vrot.slane %v4160, 3
        %v4195 = vrot.slane %v4161, 3
        %v4196 = vsel %vm3587, %v4194, %v4195
        %v4197 = vrot.slane %v4162, 3
        %v4198 = vrot.slane %v4163, 3
        %v4199 = vsel %vm3587, %v4197, %v4198
        %v4200 = vrot.slane %v4164, 3
        %v4201 = vrot.slane %v4165, 3
        %v4202 = vsel %vm3587, %v4200, %v4201
        %v4203 = vrot.slane %v4166, 3
        %v4204 = vrot.slane %v4167, 3
        %v4205 = vsel %vm3587, %v4203, %v4204
        %v4206 = vrot.slane %v4168, 3
        %v4207 = vrot.slane %v4169, 3
        %v4208 = vsel %vm3587, %v4206, %v4207
        %v4209 = vrot.slane %v4170, 3
        %v4210 = vrot.slane %v4171, 3
        %v4211 = vsel %vm3587, %v4209, %v4210
        %v4236 = vadd.f32 %v4128, %v4188
        %v4237 = vadd.f32 %v4129, %v4190
        %v4238 = vadd.f32 %v4130, %v4189
        %v4239 = vadd.f32 %v4131, %v4191
        %v4240 = vadd.f32 %v4132, %v4193
        %v4241 = vadd.f32 %v4133, %v4192
        %v4242 = vadd.f32 %v4134, %v4194
        %v4243 = vadd.f32 %v4135, %v4196
        %v4244 = vadd.f32 %v4136, %v4195
        %v4245 = vadd.f32 %v4137, %v4197
        %v4246 = vadd.f32 %v4138, %v4199
        %v4247 = vadd.f32 %v4139, %v4198
        %v4248 = vadd.f32 %v4140, %v4200
        %v4249 = vadd.f32 %v4141, %v4202
        %v4250 = vadd.f32 %v4142, %v4201
        %v4251 = vadd.f32 %v4143, %v4203
        %v4252 = vadd.f32 %v4144, %v4205
        %v4253 = vadd.f32 %v4145, %v4204
        %v4254 = vadd.f32 %v4146, %v4206
        %v4255 = vadd.f32 %v4147, %v4208
        %v4256 = vadd.f32 %v4148, %v4207
        %v4257 = vadd.f32 %v4149, %v4209
        %v4258 = vadd.f32 %v4150, %v4211
        %v4259 = vadd.f32 %v4151, %v4210
        %v4260 = vlaneseq
        %v4261 = vshrl.u32 %v4260, 7
        %v4262 = vsub.s32 0, %v4261
        %v4263 = vrot.slane %v3522, %v4262
        %v4264 = vmul.f32 %v464, %v4263
        %v4265 = vmul.f32 %v465, %v4263
        %v4266 = vmul.f32 %v466, %v4263
        %v4267 = vmul.f32 %v468, %v4263
        %v4268 = vmul.f32 %v469, %v4263
        %v4269 = vmul.f32 %v470, %v4263
        %v4270 = vmul.f32 %v472, %v4263
        %v4271 = vmul.f32 %v473, %v4263
        %v4272 = vmul.f32 %v474, %v4263
        %v4273 = vmul.f32 %v476, %v4263
        %v4274 = vmul.f32 %v477, %v4263
        %v4275 = vmul.f32 %v478, %v4263
        %v4276 = vmul.f32 %v480, %v4263
        %v4277 = vmul.f32 %v481, %v4263
        %v4278 = vmul.f32 %v482, %v4263
        %v4279 = vmul.f32 %v484, %v4263
        %v4280 = vmul.f32 %v485, %v4263
        %v4281 = vmul.f32 %v486, %v4263
        %v4282 = vmul.f32 %v488, %v4263
        %v4283 = vmul.f32 %v489, %v4263
        %v4284 = vmul.f32 %v490, %v4263
        %v4285 = vmul.f32 %v492, %v4263
        %v4286 = vmul.f32 %v493, %v4263
        %v4287 = vmul.f32 %v494, %v4263
        %v4312 = vrot.slane %v4264, 6
        %v4313 = vrot.slane %v4265, 6
        %v4314 = vsel %vm3083, %v4312, %v4313
        %v4315 = vrot.slane %v4266, 6
        %v4316 = vsel %vm3083, %v4313, %v4315
        %v4317 = vrot.slane %v4267, 6
        %v4318 = vrot.slane %v4268, 6
        %v4319 = vsel %vm3083, %v4317, %v4318
        %v4320 = vrot.slane %v4269, 6
        %v4321 = vsel %vm3083, %v4318, %v4320
        %v4322 = vrot.slane %v4270, 6
        %v4323 = vrot.slane %v4271, 6
        %v4324 = vsel %vm3083, %v4322, %v4323
        %v4325 = vrot.slane %v4272, 6
        %v4326 = vsel %vm3083, %v4323, %v4325
        %v4327 = vrot.slane %v4273, 6
        %v4328 = vrot.slane %v4274, 6
        %v4329 = vsel %vm3083, %v4327, %v4328
        %v4330 = vrot.slane %v4275, 6
        %v4331 = vsel %vm3083, %v4328, %v4330
        %v4332 = vrot.slane %v4276, 6
        %v4333 = vrot.slane %v4277, 6
        %v4334 = vsel %vm3083, %v4332, %v4333
        %v4335 = vrot.slane %v4278, 6
        %v4336 = vsel %vm3083, %v4333, %v4335
        %v4337 = vrot.slane %v4279, 6
        %v4338 = vrot.slane %v4280, 6
        %v4339 = vsel %vm3083, %v4337, %v4338
        %v4340 = vrot.slane %v4281, 6
        %v4341 = vsel %vm3083, %v4338, %v4340
        %v4342 = vrot.slane %v4282, 6
        %v4343 = vrot.slane %v4283, 6
        %v4344 = vsel %vm3083, %v4342, %v4343
        %v4345 = vrot.slane %v4284, 6
        %v4346 = vsel %vm3083, %v4343, %v4345
        %v4347 = vrot.slane %v4285, 6
        %v4348 = vrot.slane %v4286, 6
        %v4349 = vsel %vm3083, %v4347, %v4348
        %v4350 = vrot.slane %v4287, 6
        %v4351 = vsel %vm3083, %v4348, %v4350
        %v4376 = vadd.f32 %v4236, %v4312
        %v4377 = vadd.f32 %v4237, %v4314
        %v4378 = vadd.f32 %v4238, %v4316
        %v4379 = vadd.f32 %v4239, %v4317
        %v4380 = vadd.f32 %v4240, %v4319
        %v4381 = vadd.f32 %v4241, %v4321
        %v4382 = vadd.f32 %v4242, %v4322
        %v4383 = vadd.f32 %v4243, %v4324
        %v4384 = vadd.f32 %v4244, %v4326
        %v4385 = vadd.f32 %v4245, %v4327
        %v4386 = vadd.f32 %v4246, %v4329
        %v4387 = vadd.f32 %v4247, %v4331
        %v4388 = vadd.f32 %v4248, %v4332
        %v4389 = vadd.f32 %v4249, %v4334
        %v4390 = vadd.f32 %v4250, %v4336
        %v4391 = vadd.f32 %v4251, %v4337
        %v4392 = vadd.f32 %v4252, %v4339
        %v4393 = vadd.f32 %v4253, %v4341
        %v4394 = vadd.f32 %v4254, %v4342
        %v4395 = vadd.f32 %v4255, %v4344
        %v4396 = vadd.f32 %v4256, %v4346
        %v4397 = vadd.f32 %v4257, %v4347
        %v4398 = vadd.f32 %v4258, %v4349
        %v4399 = vadd.f32 %v4259, %v4351
        %vm4424 = vcmask 1042432
        %v4425 = vrot.slane %v4376, 5
        %v4426 = vrot.slane %v4377, 5
        %v4427 = vsel %vm4424, %v4425, %v4426
        %v4428 = vrot.slane %v4378, 5
        %v4429 = vsel %vm4424, %v4426, %v4428
        %v4430 = vrot.slane %v4379, 5
        %v4431 = vrot.slane %v4380, 5
        %v4432 = vsel %vm4424, %v4430, %v4431
        %v4433 = vrot.slane %v4381, 5
        %v4434 = vsel %vm4424, %v4431, %v4433
        %v4435 = vrot.slane %v4382, 5
        %v4436 = vrot.slane %v4383, 5
        %v4437 = vsel %vm4424, %v4435, %v4436
        %v4438 = vrot.slane %v4384, 5
        %v4439 = vsel %vm4424, %v4436, %v4438
        %v4440 = vrot.slane %v4385, 5
        %v4441 = vrot.slane %v4386, 5
        %v4442 = vsel %vm4424, %v4440, %v4441
        %v4443 = vrot.slane %v4387, 5
        %v4444 = vsel %vm4424, %v4441, %v4443
        %v4445 = vrot.slane %v4388, 5
        %v4446 = vrot.slane %v4389, 5
        %v4447 = vsel %vm4424, %v4445, %v4446
        %v4448 = vrot.slane %v4390, 5
        %v4449 = vsel %vm4424, %v4446, %v4448
        %v4450 = vrot.slane %v4391, 5
        %v4451 = vrot.slane %v4392, 5
        %v4452 = vsel %vm4424, %v4450, %v4451
        %v4453 = vrot.slane %v4393, 5
        %v4454 = vsel %vm4424, %v4451, %v4453
        %v4455 = vrot.slane %v4394, 5
        %v4456 = vrot.slane %v4395, 5
        %v4457 = vsel %vm4424, %v4455, %v4456
        %v4458 = vrot.slane %v4396, 5
        %v4459 = vsel %vm4424, %v4456, %v4458
        %v4460 = vrot.slane %v4397, 5
        %v4461 = vrot.slane %v4398, 5
        %v4462 = vsel %vm4424, %v4460, %v4461
        %v4463 = vrot.slane %v4399, 5
        %v4464 = vsel %vm4424, %v4461, %v4463
        %v4481 = vpack.c.bf16 %v4429, %v4427
        %v4482 = vpack.c.bf16 %v4434, %v4432
        %v4483 = vpack.c.bf16 %v4439, %v4437
        %v4484 = vpack.c.bf16 %v4444, %v4442
        %v4485 = vpack.c.bf16 %v4449, %v4447
        %v4486 = vpack.c.bf16 %v4454, %v4452
        %v4487 = vpack.c.bf16 %v4459, %v4457
        %v4488 = vpack.c.bf16 %v4464, %v4462
        %s4489 = scalar_lea.vmem [#allocation4], 128
        %v4490 = vld [vmem:[%s4489] sm:$0xf]
        %v4491 = vld [vmem:[%s4489 + $0x4] sm:$0xf]
        %v4492 = vld [vmem:[%s4489 + $0x8] sm:$0xf]
        %v4493 = vld [vmem:[%s4489 + $0xc] sm:$0xf]
        %v4494 = vld [vmem:[%s4489 + $0x10] sm:$0xf]
        %v4495 = vld [vmem:[%s4489 + $0x14] sm:$0xf]
        %v4496 = vld [vmem:[%s4489 + $0x18] sm:$0xf]
        %v4497 = vld [vmem:[%s4489 + $0x1c] sm:$0xf]
        %v4498 = vld [vmem:[%s4489 + $0x20] sm:$0xf]
        %v4499 = vld [vmem:[%s4489 + $0x24] sm:$0xf]
        %v4500 = vld [vmem:[%s4489 + $0x28] sm:$0xf]
        %v4501 = vld [vmem:[%s4489 + $0x2c] sm:$0xf]
        %v4502 = vld [vmem:[%s4489 + $0x30] sm:$0xf]
        %v4503 = vld [vmem:[%s4489 + $0x34] sm:$0xf]
        %v4504 = vld [vmem:[%s4489 + $0x38] sm:$0xf]
        %v4505 = vld [vmem:[%s4489 + $0x3c] sm:$0xf]
        %s4506 = scalar_lea.vmem %s3, 2
        %v4507 = vld [vmem:[%s4506] sm:$0x1]
        %v4509 = vlaneseq
        %v4510 = vshrl.u32 %v4509, 7
        %v4511 = vsub.s32 0, %v4510
        %v4512 = vrot.slane %v4507, %v4511
        %v4530 = vunpack.c.l.b16 %v4490
        %v4531 = vunpack.c.l.b16 %v4491
        %v4532 = vunpack.c.l.b16 %v4492
        %v4533 = vunpack.c.l.b16 %v4493
        %v4534 = vunpack.c.l.b16 %v4494
        %v4535 = vunpack.c.l.b16 %v4495
        %v4536 = vunpack.c.l.b16 %v4496
        %v4537 = vunpack.c.l.b16 %v4497
        %v4538 = vunpack.c.l.b16 %v4498
        %v4539 = vunpack.c.l.b16 %v4499
        %v4540 = vunpack.c.l.b16 %v4500
        %v4541 = vunpack.c.l.b16 %v4501
        %v4542 = vunpack.c.l.b16 %v4502
        %v4543 = vunpack.c.l.b16 %v4503
        %v4544 = vunpack.c.l.b16 %v4504
        %v4545 = vunpack.c.l.b16 %v4505
        %v4546 = vpack.c.b16 %v4531, %v4530
        %v4547 = vpack.c.b16 %v4533, %v4532
        %v4548 = vpack.c.b16 %v4535, %v4534
        %v4549 = vpack.c.b16 %v4537, %v4536
        %v4550 = vpack.c.b16 %v4539, %v4538
        %v4551 = vpack.c.b16 %v4541, %v4540
        %v4552 = vpack.c.b16 %v4543, %v4542
        %v4553 = vpack.c.b16 %v4545, %v4544
        %4562 = vmatprep.subr.bf16.mxu0 0
        %4563 = vmatpush1.bf16.msra.mxu0 %v4546
        %4564 = vmatprep.subr.bf16.mxu0 0
        %4565 = vmatpush1.bf16.msra.mxu0 %v4547
        %4566 = vmatprep.subr.bf16.mxu0 0
        %4567 = vmatpush1.bf16.msra.mxu0 %v4548
        %4568 = vmatprep.subr.bf16.mxu0 0
        %4569 = vmatpush1.bf16.msra.mxu0 %v4549
        %4570 = vmatprep.subr.bf16.mxu0 0
        %4571 = vmatpush1.bf16.msra.mxu0 %v4550
        %4572 = vmatprep.subr.bf16.mxu0 0
        %4573 = vmatpush1.bf16.msra.mxu0 %v4551
        %4574 = vmatprep.subr.bf16.mxu0 0
        %4575 = vmatpush1.bf16.msra.mxu0 %v4552
        %4576 = vmatprep.subr.bf16.mxu0 0
        %4577 = vmatpush1.bf16.msra.mxu0 %v4553
        %4578 = vmatprep.subr.bf16.mxu0 0
        %4579 = vmatpush1.bf16.msra.mxu0 0
        %4580 = vmatprep.subr.bf16.mxu0 0
        %4581 = vmatpush1.bf16.msra.mxu0 0
        %4582 = vmatprep.subr.bf16.mxu0 0
        %4583 = vmatpush1.bf16.msra.mxu0 0
        %4584 = vmatprep.subr.bf16.mxu0 0
        %4585 = vmatpush1.bf16.msra.mxu0 0
        %4586 = vmatprep.subr.bf16.mxu0 0
        %4587 = vmatpush1.bf16.msra.mxu0 0
        %4588 = vmatprep.subr.bf16.mxu0 0
        %4589 = vmatpush1.bf16.msra.mxu0 0
        %4590 = vmatprep.subr.bf16.mxu0 0
        %4591 = vmatpush1.bf16.msra.mxu0 0
        %4592 = vmatprep.subr.bf16.mxu0 0
        %4593 = vmatpush1.bf16.msra.mxu0 0
        %4594 = vmatprep.mubr.bf16.mxu0 0
        %4595 = vmatmul.mubr.bf16.gmra.mrb[0].mxu0 %v4481
        %v4596 = vpop.f32.mrb[0].mxu0
        %v4597 = vadd.f32 %v4512, %v4596
        %v4598 = vpop.f32.mrb[0].mxu0
        %v4599 = vpop.f32.mrb[0].mxu0
        %v4600 = vadd.f32 %v4512, %v4599
        %v4601 = vpop.f32.mrb[0].mxu0
        %4602 = vmatprep.mubr.bf16.mxu0 0
        %4603 = vmatmul.mubr.bf16.gmra.mrb[0].mxu0 %v4482
        %v4604 = vpop.f32.mrb[0].mxu0
        %v4605 = vadd.f32 %v4512, %v4604
        %v4606 = vpop.f32.mrb[0].mxu0
        %v4607 = vpop.f32.mrb[0].mxu0
        %v4608 = vadd.f32 %v4512, %v4607
        %v4609 = vpop.f32.mrb[0].mxu0
        %4610 = vmatprep.mubr.bf16.mxu0 0
        %4611 = vmatmul.mubr.bf16.gmra.mrb[0].mxu0 %v4483
        %v4612 = vpop.f32.mrb[0].mxu0
        %v4613 = vadd.f32 %v4512, %v4612
        %v4614 = vpop.f32.mrb[0].mxu0
        %v4615 = vpop.f32.mrb[0].mxu0
        %v4616 = vadd.f32 %v4512, %v4615
        %v4617 = vpop.f32.mrb[0].mxu0
        %4618 = vmatprep.mubr.bf16.mxu0 0
        %4619 = vmatmul.mubr.bf16.gmra.mrb[0].mxu0 %v4484
        %v4620 = vpop.f32.mrb[0].mxu0
        %v4621 = vadd.f32 %v4512, %v4620
        %v4622 = vpop.f32.mrb[0].mxu0
        %v4623 = vpop.f32.mrb[0].mxu0
        %v4624 = vadd.f32 %v4512, %v4623
        %v4625 = vpop.f32.mrb[0].mxu0
        %4626 = vmatprep.mubr.bf16.mxu0 0
        %4627 = vmatmul.mubr.bf16.gmra.mrb[0].mxu0 %v4485
        %v4628 = vpop.f32.mrb[0].mxu0
        %v4629 = vadd.f32 %v4512, %v4628
        %v4630 = vpop.f32.mrb[0].mxu0
        %v4631 = vpop.f32.mrb[0].mxu0
        %v4632 = vadd.f32 %v4512, %v4631
        %v4633 = vpop.f32.mrb[0].mxu0
        %4634 = vmatprep.mubr.bf16.mxu0 0
        %4635 = vmatmul.mubr.bf16.gmra.mrb[0].mxu0 %v4486
        %v4636 = vpop.f32.mrb[0].mxu0
        %v4637 = vadd.f32 %v4512, %v4636
        %v4638 = vpop.f32.mrb[0].mxu0
        %v4639 = vpop.f32.mrb[0].mxu0
        %v4640 = vadd.f32 %v4512, %v4639
        %v4641 = vpop.f32.mrb[0].mxu0
        %4642 = vmatprep.mubr.bf16.mxu0 0
        %4643 = vmatmul.mubr.bf16.gmra.mrb[0].mxu0 %v4487
        %v4644 = vpop.f32.mrb[0].mxu0
        %v4645 = vadd.f32 %v4512, %v4644
        %v4646 = vpop.f32.mrb[0].mxu0
        %v4647 = vpop.f32.mrb[0].mxu0
        %v4648 = vadd.f32 %v4512, %v4647
        %v4649 = vpop.f32.mrb[0].mxu0
        %4650 = vmatprep.mubr.bf16.mxu0 0
        %4651 = vmatmul.mubr.bf16.gmra.mrb[0].mxu0 %v4488
        %v4652 = vpop.f32.mrb[0].mxu0
        %v4653 = vadd.f32 %v4512, %v4652
        %v4654 = vpop.f32.mrb[0].mxu0
        %v4655 = vpop.f32.mrb[0].mxu0
        %v4656 = vadd.f32 %v4512, %v4655
        %v4657 = vpop.f32.mrb[0].mxu0
        %4658 = vdwg.mxu0
        %v4659 = vmax.f32 %v4597, 0.0
        %v4660 = vmax.f32 %v4600, 0.0
        %v4661 = vmax.f32 %v4605, 0.0
        %v4662 = vmax.f32 %v4608, 0.0
        %v4663 = vmax.f32 %v4613, 0.0
        %v4664 = vmax.f32 %v4616, 0.0
        %v4665 = vmax.f32 %v4621, 0.0
        %v4666 = vmax.f32 %v4624, 0.0
        %v4667 = vmax.f32 %v4629, 0.0
        %v4668 = vmax.f32 %v4632, 0.0
        %v4669 = vmax.f32 %v4637, 0.0
        %v4670 = vmax.f32 %v4640, 0.0
        %v4671 = vmax.f32 %v4645, 0.0
        %v4672 = vmax.f32 %v4648, 0.0
        %v4673 = vmax.f32 %v4653, 0.0
        %v4674 = vmax.f32 %v4656, 0.0
        %v4675 = vpack.c.bf16 %v4660, %v4659
        %v4676 = vpack.c.bf16 %v4662, %v4661
        %v4677 = vpack.c.bf16 %v4664, %v4663
        %v4678 = vpack.c.bf16 %v4666, %v4665
        %v4679 = vpack.c.bf16 %v4668, %v4667
        %v4680 = vpack.c.bf16 %v4670, %v4669
        %v4681 = vpack.c.bf16 %v4672, %v4671
        %v4682 = vpack.c.bf16 %v4674, %v4673
        %s4683 = scalar_lea.vmem [#allocation7], 128
        %v4684 = vld [vmem:[%s4683] sm:$0xf]
        %v4685 = vld [vmem:[%s4683 + $0x4] sm:$0xf]
        %v4686 = vld [vmem:[%s4683 + $0x8] sm:$0xf]
        %v4687 = vld [vmem:[%s4683 + $0xc] sm:$0xf]
        %v4688 = vld [vmem:[%s4683 + $0x10] sm:$0xf]
        %v4689 = vld [vmem:[%s4683 + $0x14] sm:$0xf]
        %v4690 = vld [vmem:[%s4683 + $0x18] sm:$0xf]
        %v4691 = vld [vmem:[%s4683 + $0x1c] sm:$0xf]
        %v4692 = vld [vmem:[%s4683 + $0x20] sm:$0xf]
        %v4693 = vld [vmem:[%s4683 + $0x24] sm:$0xf]
        %v4694 = vld [vmem:[%s4683 + $0x28] sm:$0xf]
        %v4695 = vld [vmem:[%s4683 + $0x2c] sm:$0xf]
        %v4696 = vld [vmem:[%s4683 + $0x30] sm:$0xf]
        %v4697 = vld [vmem:[%s4683 + $0x34] sm:$0xf]
        %v4698 = vld [vmem:[%s4683 + $0x38] sm:$0xf]
        %v4699 = vld [vmem:[%s4683 + $0x3c] sm:$0xf]
        %v4716 = vunpack.c.l.b16 %v4684
        %v4717 = vunpack.c.l.b16 %v4685
        %v4718 = vunpack.c.l.b16 %v4686
        %v4719 = vunpack.c.l.b16 %v4687
        %v4720 = vunpack.c.l.b16 %v4688
        %v4721 = vunpack.c.l.b16 %v4689
        %v4722 = vunpack.c.l.b16 %v4690
        %v4723 = vunpack.c.l.b16 %v4691
        %v4724 = vunpack.c.l.b16 %v4692
        %v4725 = vunpack.c.l.b16 %v4693
        %v4726 = vunpack.c.l.b16 %v4694
        %v4727 = vunpack.c.l.b16 %v4695
        %v4728 = vunpack.c.l.b16 %v4696
        %v4729 = vunpack.c.l.b16 %v4697
        %v4730 = vunpack.c.l.b16 %v4698
        %v4731 = vunpack.c.l.b16 %v4699
        %v4732 = vpack.c.b16 %v4717, %v4716
        %v4733 = vpack.c.b16 %v4719, %v4718
        %v4734 = vpack.c.b16 %v4721, %v4720
        %v4735 = vpack.c.b16 %v4723, %v4722
        %v4736 = vpack.c.b16 %v4725, %v4724
        %v4737 = vpack.c.b16 %v4727, %v4726
        %v4738 = vpack.c.b16 %v4729, %v4728
        %v4739 = vpack.c.b16 %v4731, %v4730
        %4748 = vmatprep.subr.bf16.mxu0 0
        %4749 = vmatpush1.bf16.msra.mxu0 %v4732
        %4750 = vmatprep.subr.bf16.mxu0 0
        %4751 = vmatpush1.bf16.msra.mxu0 %v4733
        %4752 = vmatprep.subr.bf16.mxu0 0
        %4753 = vmatpush1.bf16.msra.mxu0 %v4734
        %4754 = vmatprep.subr.bf16.mxu0 0
        %4755 = vmatpush1.bf16.msra.mxu0 %v4735
        %4756 = vmatprep.subr.bf16.mxu0 0
        %4757 = vmatpush1.bf16.msra.mxu0 %v4736
        %4758 = vmatprep.subr.bf16.mxu0 0
        %4759 = vmatpush1.bf16.msra.mxu0 %v4737
        %4760 = vmatprep.subr.bf16.mxu0 0
        %4761 = vmatpush1.bf16.msra.mxu0 %v4738
        %4762 = vmatprep.subr.bf16.mxu0 0
        %4763 = vmatpush1.bf16.msra.mxu0 %v4739
        %4764 = vmatprep.subr.bf16.mxu0 0
        %4765 = vmatpush1.bf16.msra.mxu0 0
        %4766 = vmatprep.subr.bf16.mxu0 0
        %4767 = vmatpush1.bf16.msra.mxu0 0
        %4768 = vmatprep.subr.bf16.mxu0 0
        %4769 = vmatpush1.bf16.msra.mxu0 0
        %4770 = vmatprep.subr.bf16.mxu0 0
        %4771 = vmatpush1.bf16.msra.mxu0 0
        %4772 = vmatprep.subr.bf16.mxu0 0
        %4773 = vmatpush1.bf16.msra.mxu0 0
        %4774 = vmatprep.subr.bf16.mxu0 0
        %4775 = vmatpush1.bf16.msra.mxu0 0
        %4776 = vmatprep.subr.bf16.mxu0 0
        %4777 = vmatpush1.bf16.msra.mxu0 0
        %4778 = vmatprep.subr.bf16.mxu0 0
        %4779 = vmatpush1.bf16.msra.mxu0 0
        %4780 = vmatprep.mubr.bf16.mxu0 0
        %4781 = vmatmul.mubr.bf16.gmra.mrb[0].mxu0 %v4675
        %v4782 = vpop.f32.mrb[0].mxu0
        %v4783 = vadd.f32 0.0, %v4782
        %v4784 = vpop.f32.mrb[0].mxu0
        %v4785 = vpop.f32.mrb[0].mxu0
        %v4786 = vadd.f32 0.0, %v4785
        %v4787 = vpop.f32.mrb[0].mxu0
        %4788 = vmatprep.mubr.bf16.mxu0 0
        %4789 = vmatmul.mubr.bf16.gmra.mrb[0].mxu0 %v4676
        %v4790 = vpop.f32.mrb[0].mxu0
        %v4791 = vadd.f32 0.0, %v4790
        %v4792 = vpop.f32.mrb[0].mxu0
        %v4793 = vpop.f32.mrb[0].mxu0
        %v4794 = vadd.f32 0.0, %v4793
        %v4795 = vpop.f32.mrb[0].mxu0
        %4796 = vmatprep.mubr.bf16.mxu0 0
        %4797 = vmatmul.mubr.bf16.gmra.mrb[0].mxu0 %v4677
        %v4798 = vpop.f32.mrb[0].mxu0
        %v4799 = vadd.f32 0.0, %v4798
        %v4800 = vpop.f32.mrb[0].mxu0
        %v4801 = vpop.f32.mrb[0].mxu0
        %v4802 = vadd.f32 0.0, %v4801
        %v4803 = vpop.f32.mrb[0].mxu0
        %4804 = vmatprep.mubr.bf16.mxu0 0
        %4805 = vmatmul.mubr.bf16.gmra.mrb[0].mxu0 %v4678
        %v4806 = vpop.f32.mrb[0].mxu0
        %v4807 = vadd.f32 0.0, %v4806
        %v4808 = vpop.f32.mrb[0].mxu0
        %v4809 = vpop.f32.mrb[0].mxu0
        %v4810 = vadd.f32 0.0, %v4809
        %v4811 = vpop.f32.mrb[0].mxu0
        %4812 = vmatprep.mubr.bf16.mxu0 0
        %4813 = vmatmul.mubr.bf16.gmra.mrb[0].mxu0 %v4679
        %v4814 = vpop.f32.mrb[0].mxu0
        %v4815 = vadd.f32 0.0, %v4814
        %v4816 = vpop.f32.mrb[0].mxu0
        %v4817 = vpop.f32.mrb[0].mxu0
        %v4818 = vadd.f32 0.0, %v4817
        %v4819 = vpop.f32.mrb[0].mxu0
        %4820 = vmatprep.mubr.bf16.mxu0 0
        %4821 = vmatmul.mubr.bf16.gmra.mrb[0].mxu0 %v4680
        %v4822 = vpop.f32.mrb[0].mxu0
        %v4823 = vadd.f32 0.0, %v4822
        %v4824 = vpop.f32.mrb[0].mxu0
        %v4825 = vpop.f32.mrb[0].mxu0
        %v4826 = vadd.f32 0.0, %v4825
        %v4827 = vpop.f32.mrb[0].mxu0
        %4828 = vmatprep.mubr.bf16.mxu0 0
        %4829 = vmatmul.mubr.bf16.gmra.mrb[0].mxu0 %v4681
        %v4830 = vpop.f32.mrb[0].mxu0
        %v4831 = vadd.f32 0.0, %v4830
        %v4832 = vpop.f32.mrb[0].mxu0
        %v4833 = vpop.f32.mrb[0].mxu0
        %v4834 = vadd.f32 0.0, %v4833
        %v4835 = vpop.f32.mrb[0].mxu0
        %4836 = vmatprep.mubr.bf16.mxu0 0
        %4837 = vmatmul.mubr.bf16.gmra.mrb[0].mxu0 %v4682
        %v4838 = vpop.f32.mrb[0].mxu0
        %v4839 = vadd.f32 0.0, %v4838
        %v4840 = vpop.f32.mrb[0].mxu0
        %v4841 = vpop.f32.mrb[0].mxu0
        %v4842 = vadd.f32 0.0, %v4841
        %v4843 = vpop.f32.mrb[0].mxu0
        %4844 = vdwg.mxu0
        %v4845 = vadd.f32 %v3504, %v4783
        %v4846 = vadd.f32 %v3505, %v4786
        %v4847 = vadd.f32 %v3506, %v4791
        %v4848 = vadd.f32 %v3507, %v4794
        %v4849 = vadd.f32 %v3508, %v4799
        %v4850 = vadd.f32 %v3509, %v4802
        %v4851 = vadd.f32 %v3510, %v4807
        %v4852 = vadd.f32 %v3511, %v4810
        %v4853 = vadd.f32 %v3512, %v4815
        %v4854 = vadd.f32 %v3513, %v4818
        %v4855 = vadd.f32 %v3514, %v4823
        %v4856 = vadd.f32 %v3515, %v4826
        %v4857 = vadd.f32 %v3516, %v4831
        %v4858 = vadd.f32 %v3517, %v4834
        %v4859 = vadd.f32 %v3518, %v4839
        %v4860 = vadd.f32 %v3519, %v4842
        %v4861 = vld [vmem:[%s342] sm:$0x1]
        %v4863 = vlaneseq
        %v4864 = vshrl.u32 %v4863, 7
        %v4865 = vsub.s32 0, %v4864
        %v4866 = vrot.slane %v4861, %v4865
        %v4868 = vadd.f32 %v4845, %v4866
        %v4869 = vadd.f32 %v4846, %v4866
        %v4870 = vadd.f32 %v4847, %v4866
        %v4871 = vadd.f32 %v4848, %v4866
        %v4872 = vadd.f32 %v4849, %v4866
        %v4873 = vadd.f32 %v4850, %v4866
        %v4874 = vadd.f32 %v4851, %v4866
        %v4875 = vadd.f32 %v4852, %v4866
        %v4876 = vadd.f32 %v4853, %v4866
        %v4877 = vadd.f32 %v4854, %v4866
        %v4878 = vadd.f32 %v4855, %v4866
        %v4879 = vadd.f32 %v4856, %v4866
        %v4880 = vadd.f32 %v4857, %v4866
        %v4881 = vadd.f32 %v4858, %v4866
        %v4882 = vadd.f32 %v4859, %v4866
        %v4883 = vadd.f32 %v4860, %v4866
        %v4884 = vld [vmem:[%s8] sm:$0x1]
        %v4886 = vlaneseq
        %v4887 = vshrl.u32 %v4886, 7
        %v4888 = vsub.s32 0, %v4887
        %v4889 = vrot.slane %v4884, %v4888
        %v4891 = vadd.f32 %v4868, %v4889
        %v4892 = vadd.f32 %v4869, %v4889
        %v4893 = vadd.f32 %v4870, %v4889
        %v4894 = vadd.f32 %v4871, %v4889
        %v4895 = vadd.f32 %v4872, %v4889
        %v4896 = vadd.f32 %v4873, %v4889
        %v4897 = vadd.f32 %v4874, %v4889
        %v4898 = vadd.f32 %v4875, %v4889
        %v4899 = vadd.f32 %v4876, %v4889
        %v4900 = vadd.f32 %v4877, %v4889
        %v4901 = vadd.f32 %v4878, %v4889
        %v4902 = vadd.f32 %v4879, %v4889
        %v4903 = vadd.f32 %v4880, %v4889
        %v4904 = vadd.f32 %v4881, %v4889
        %v4905 = vadd.f32 %v4882, %v4889
        %v4906 = vadd.f32 %v4883, %v4889
        %v4907 = vmax.f32 %v4891, 0.0
        %v4908 = vmax.f32 %v4892, 0.0
        %v4909 = vmax.f32 %v4893, 0.0
        %v4910 = vmax.f32 %v4894, 0.0
        %v4911 = vmax.f32 %v4895, 0.0
        %v4912 = vmax.f32 %v4896, 0.0
        %v4913 = vmax.f32 %v4897, 0.0
        %v4914 = vmax.f32 %v4898, 0.0
        %v4915 = vmax.f32 %v4899, 0.0
        %v4916 = vmax.f32 %v4900, 0.0
        %v4917 = vmax.f32 %v4901, 0.0
        %v4918 = vmax.f32 %v4902, 0.0
        %v4919 = vmax.f32 %v4903, 0.0
        %v4920 = vmax.f32 %v4904, 0.0
        %v4921 = vmax.f32 %v4905, 0.0
        %v4922 = vmax.f32 %v4906, 0.0
        %4923 = vst [vmem:[%s339] sm:$0xff] %v4907
        %4924 = vst [vmem:[%s339 + $0x8] sm:$0xff] %v4908
        %4925 = vst [vmem:[%s339 + $0x10] sm:$0xff] %v4909
        %4926 = vst [vmem:[%s339 + $0x18] sm:$0xff] %v4910
        %4927 = vst [vmem:[%s339 + $0x20] sm:$0xff] %v4911
        %4928 = vst [vmem:[%s339 + $0x28] sm:$0xff] %v4912
        %4929 = vst [vmem:[%s339 + $0x30] sm:$0xff] %v4913
        %4930 = vst [vmem:[%s339 + $0x38] sm:$0xff] %v4914
        %4931 = vst [vmem:[%s339 + $0x40] sm:$0xff] %v4915
        %4932 = vst [vmem:[%s339 + $0x48] sm:$0xff] %v4916
        %4933 = vst [vmem:[%s339 + $0x50] sm:$0xff] %v4917
        %4934 = vst [vmem:[%s339 + $0x58] sm:$0xff] %v4918
        %4935 = vst [vmem:[%s339 + $0x60] sm:$0xff] %v4919
        %4936 = vst [vmem:[%s339 + $0x68] sm:$0xff] %v4920
        %4937 = vst [vmem:[%s339 + $0x70] sm:$0xff] %v4921
        %4938 = vst [vmem:[%s339 + $0x78] sm:$0xff] %v4922
        %s4939 = sand.u32 %s220, 1
        %s4940 = scalar_lea.sflag [#allocation6], %s4939
        %s4941 = sand.u32 %s220, 1
        %s4942 = smul.addr %s4941, 128
        %s4943 = scalar_lea.vmem [#allocation9], %s4942
        // Predicated region
        $region77: #{tpu_custom_call.1} parent=51 // pred_check
          %p4944 = pneg %p230
        $region78: #{tpu_custom_call.1} parent=51 // pred_check_branch
          %4946 = sbr.rel (%p4944) target = $region80
        $region79: #{tpu_custom_call.1} parent=51 // pred_region
          %s4947 = smul.u32 8, %s30
          %s4949 = ssub.s32 2048, 2048
          %4950 = vsyncadd %s4940, %s4949
          %s4951 = smul.addr %s4947, 2
          %s4952 = smul.addr %s29, 32
          %s4953 = sadd.s32 %s4951, %s4952
          %s4954 = smul.addr %s4953, 128
          %s4955 = scalar_lea.hbm %s9, %s4954
          %s4956 = sshll.u32 %s4943, 4
          %s4957 = int_to_ptr.vmem [resolvable:$true] %s4956
          %4962 = dma.vmem_to_hbm [thread:$0]  %s4957, 2048, %s4955, %s4940, 128, 128, 8
        $region80: #{tpu_custom_call.1} parent=51 // pred_fallthru
          _
      $region52: #{tpu_custom_call.1} parent=5 // pred_fallthru
        _
      %p4963 = scmp.le.s32.totalorder 2, %s20
      // Predicated region
      $region81: #{tpu_custom_call.1} parent=5 // pred_check
        %p4964 = pneg %p4963
      $region82: #{tpu_custom_call.1} parent=5 // pred_check_branch
        %4966 = sbr.rel (%p4964) target = $region84
      $region83: #{tpu_custom_call.1} parent=5 // pred_region
        %s4967 = ssub.s32 %s20, 2
        // Predicated region
        $region85: #{tpu_custom_call.1} parent=83 // pred_check
          %p4968 = pneg %p236
        $region86: #{tpu_custom_call.1} parent=83 // pred_check_branch
          %4970 = sbr.rel (%p4968) target = $region88
        $region87: #{tpu_custom_call.1} parent=83 // pred_region
          %s4971 = sand.u32 %s221, 1
          %s4972 = scalar_lea.sflag [#allocation6], %s4971
          %s4973 = sand.u32 %s221, 1
          %s4974 = smul.addr %s4973, 128
          %s4975 = scalar_lea.vmem [#allocation9], %s4974
          %4976 = dma.done %s4972, 2048
        $region88: #{tpu_custom_call.1} parent=83 // pred_fallthru
          _
      $region84: #{tpu_custom_call.1} parent=5 // pred_fallthru
        _
    $region6: #{tpu_custom_call.1} parent=1 // loop_footer
      %s24 = sadd.s32 1, %s20
    $region7: #{tpu_custom_call.1} parent=1 // loop_footer_branch
      %19 = sbr.rel target = $region3
    $region8: #{tpu_custom_call.1} parent=1 // loop_exit
      _
    %4977 = vsyncpa [#allocation5], 1
    %s4978 = scalar_lea.sflag [#allocation5], 1
    %4979 = vsyncpa %s4978, 1
    %4980 = vsyncpa [#allocation8], 1
    %4981 = vsyncpa [#allocation6], 1
    %s4982 = scalar_lea.sflag [#allocation6], 1
    %4983 = vsyncpa %s4982, 1
  %4984 = vsyncmov [#allocation3]
  %s4985 = vpop.sfrf %4984
  %p4986 = scmp.eq.s32.totalorder %s4985, 0
  %p4987 = pneg %p4986
  %4989 = shalt.err (%p4987)
  %s4990 = scalar_lea.sflag [#allocation3], 1
  %4991 = vsyncmov %s4990
  %s4992 = vpop.sfrf %4991
  %p4993 = scmp.eq.s32.totalorder %s4992, 0
  %p4994 = pneg %p4993
  %4996 = shalt.err (%p4994)

</llo_original>
